<compile_context>
chip_gen: v7x
topology: tpu7x:2x2x1
jax: 0.10.0
libtpu: 0.0.40
codegen_flags: <defaults>
</compile_context>

<pallas_src>
import functools
import math

import jax
import jax.numpy as jnp
from jax.experimental import pallas as pl
from jax.experimental.pallas import tpu as pltpu

MM_DTYPE = jnp.bfloat16          # MXU operand dtype; accumulation is always f32
LN_EPS = 1e-5


# ---------------------------------------------------------------------------
# Per-generation tuning (v7x: 64 MiB physical VMEM; v5e/v6e: 128 MiB)
# ---------------------------------------------------------------------------
def _vmem_capacity_bytes():
    try:
        info = pltpu.get_tpu_info()
        cap = getattr(info, "vmem_capacity_bytes", None)
        if cap:
            return int(cap)
    except Exception:
        pass
    return 64 * 1024 * 1024      # conservative (v7x-sized) fallback


_VMEM_CAP = _vmem_capacity_bytes()
_SMALL_VMEM = _VMEM_CAP <= 96 * 1024 * 1024            # v7x
VMEM_LIMIT = (48 if _SMALL_VMEM else 100) * 1024 * 1024
ROW_TILE_TARGET = 512 if _SMALL_VMEM else 1024         # activation rows / step
FFN_TILE_TARGET = 256 if _SMALL_VMEM else 1024         # bounds live f32 GELU temp
ATTN_Q_TILE_TARGET = 256                               # query rows / attn step


def _cparams(n_axes):
    return pltpu.CompilerParams(
        dimension_semantics=("parallel",) * n_axes,
        vmem_limit_bytes=VMEM_LIMIT)


def _row_tile(m, target):
    """Row tile: full extent when small, else `target` (a multiple of 8).
    Grids use pl.cdiv so the last tile may be partial; every row-tiled kernel
    here is purely row-wise, so masked partial tiles are safe."""
    if m <= target:
        return m
    return max(8, (target // 8) * 8)


def _attn_q_tile(n, target=ATTN_Q_TILE_TARGET):
    """Query-tile size for attention: a divisor of n, multiple of 8, <= target."""
    if n <= target:
        return n
    t = (target // 8) * 8
    while t >= 8:
        if n % t == 0:
            return t
        t -= 8
    return n


def _resident(shape):
    """BlockSpec for a grid-invariant operand (weights / biases): constant
    index_map (fetched once, stays resident in VMEM) and single-buffered so it
    does not pay the default double-buffer 2x VMEM cost."""
    zero = (0,) * len(shape)
    return pl.BlockSpec(shape, lambda *_: zero, pipeline_mode=pl.Buffered(1))


# ---------------------------------------------------------------------------
# Kernels
# ---------------------------------------------------------------------------
def _crossprod_channelnorm_kernel(x_ref, wa_ref, ba_ref, wbm_ref, bbm_ref,
                                  g_ref, cng_ref, cnb_ref, o_ref, *, eps):
    # o = ChannelNorm( g * (x@Wa+ba) * mean_j(x@Wb+bb) )
    x = x_ref[...].astype(jnp.float32)
    a = jnp.dot(x.astype(MM_DTYPE), wa_ref[...],
                preferred_element_type=jnp.float32) + ba_ref[...]
    # mean over the hidden axis of b reduced to a row dot with col-mean(Wb)
    mb = jnp.sum(x * wbm_ref[...], axis=-1, keepdims=True) + bbm_ref[...]
    o = g_ref[...] * a * mb
    mu = jnp.mean(o, axis=-1, keepdims=True)
    var = jnp.mean((o - mu) ** 2, axis=-1, keepdims=True)
    on = (o - mu) * jax.lax.rsqrt(var + eps)
    o_ref[...] = (on * cng_ref[...] + cnb_ref[...]).astype(o_ref.dtype)


def _patch_embed_kernel(img_ref, w_ref, b_ref, o_ref, *, patch):
    # img_ref: (1, 1, patch, wb, patch, hid) == one row of patches (channels
    # last). Per (p1, p2) we read a strided (wb, hid) slab straight from VMEM
    # and accumulate wb patch embeddings -- no transpose / pad materialization.
    wb = img_ref.shape[3]
    cout = w_ref.shape[3]
    acc = jnp.zeros((wb, cout), jnp.float32)
    for i in range(patch):                 # p1 (static unroll; patch is small)
        for j in range(patch):             # p2
            xs = img_ref[0, 0, i, :, j, :].astype(MM_DTYPE)      # (wb, hid)
            acc = acc + jnp.dot(xs, w_ref[i, j],
                                preferred_element_type=jnp.float32)
    o_ref[0, 0] = (acc + b_ref[...]).astype(o_ref.dtype)


def _ln_mha_residual_kernel(x_ref, g_ref, b_ref, wq_ref, bq_ref,
                            wkv_ref, bkv_ref, wo_ref, bo_ref, o_ref,
                            *, heads, dim_head, scale, eps, q_tile):
    # Fused pre-LN + qkv projection + multi-head attention + output projection
    # + residual. One (batch, query-tile) pair per grid step; keys/values are
    # (re)computed for the full sequence (resident in VMEM), queries only for
    # this tile. The qkv intermediate never touches HBM.
    inner = heads * dim_head
    n_tokens = x_ref.shape[1]

    def ln(v):
        mu = jnp.mean(v, axis=-1, keepdims=True)
        var = jnp.mean((v - mu) ** 2, axis=-1, keepdims=True)
        return ((v - mu) * jax.lax.rsqrt(var + eps) * g_ref[...]
                + b_ref[...]).astype(MM_DTYPE)

    x_full = x_ref[0].astype(jnp.float32)                      # (N, C)
    xn_full = ln(x_full)

    if q_tile == n_tokens:                                     # static branch
        x_q, xn_q = x_full, xn_full
    else:
        start = pl.multiple_of(pl.program_id(1) * q_tile, q_tile)
        x_q = x_ref[0, pl.ds(start, q_tile), :].astype(jnp.float32)
        xn_q = ln(x_q)

    kv = jnp.dot(xn_full, wkv_ref[...],
                 preferred_element_type=jnp.float32) + bkv_ref[...]   # (N, 2*inner)
    q_all = jnp.dot(xn_q, wq_ref[...],
                    preferred_element_type=jnp.float32) + bq_ref[...]  # (tq, inner)

    outs = []
    for h in range(heads):                 # static unroll; heads is small
        lo = h * dim_head
        q = q_all[:, lo:lo + dim_head].astype(MM_DTYPE)
        k = kv[:, lo:lo + dim_head].astype(MM_DTYPE)
        v = kv[:, inner + lo:inner + lo + dim_head].astype(MM_DTYPE)
        # q @ k^T without materializing the transpose
        s = jax.lax.dot_general(q, k, (((1,), (1,)), ((), ())),
                                preferred_element_type=jnp.float32) * scale
        m = jnp.max(s, axis=-1, keepdims=True)
        p = jnp.exp(s - m)
        l = jnp.sum(p, axis=-1, keepdims=True)
        p = p * pl.reciprocal(l, approx=True)                  # EUP divide
        outs.append(jnp.dot(p.astype(MM_DTYPE), v,
                            preferred_element_type=jnp.float32))

    # concat over heads, then ONE K=inner output projection (MXU-depth friendly)
    o_all = jnp.concatenate(outs, axis=-1).astype(MM_DTYPE)    # (tq, inner)
    proj = jnp.dot(o_all, wo_ref[...],
                   preferred_element_type=jnp.float32) + bo_ref[...]
    o_ref[0] = (x_q + proj).astype(o_ref.dtype)


def _ln_ffn_residual_kernel(x_ref, g_ref, b_ref, w1_ref, b1_ref,
                            w2_ref, b2_ref, o_ref, *, eps):
    x = x_ref[...].astype(jnp.float32)
    mu = jnp.mean(x, axis=-1, keepdims=True)
    var = jnp.mean((x - mu) ** 2, axis=-1, keepdims=True)
    xn = ((x - mu) * jax.lax.rsqrt(var + eps) * g_ref[...]
          + b_ref[...]).astype(MM_DTYPE)
    h = jnp.dot(xn, w1_ref[...], preferred_element_type=jnp.float32) + b1_ref[...]
    # TODO(synk): PyTorch nn.GELU defaults to exact erf; tanh approximation used.
    h = jax.nn.gelu(h).astype(MM_DTYPE)     # drop the f32 intermediate early
    f = jnp.dot(h, w2_ref[...], preferred_element_type=jnp.float32) + b2_ref[...]
    o_ref[...] = (x + f).astype(o_ref.dtype)


def _posadd_matmul_kernel(x_ref, pos_ref, w_ref, b_ref, o_ref):
    z = (x_ref[0].astype(jnp.float32)
         + pos_ref[0].astype(jnp.float32)).astype(MM_DTYPE)
    o_ref[0] = (jnp.dot(z, w_ref[...], preferred_element_type=jnp.float32)
                + b_ref[...]).astype(o_ref.dtype)


# ---------------------------------------------------------------------------
# pallas_call wrappers
# ---------------------------------------------------------------------------
def crossprod_channelnorm(x, p):
    B, N, D = x.shape
    H = p["wa"].shape[1]
    M = B * N
    tm = _row_tile(M, ROW_TILE_TARGET)
    row = lambda i: (i, 0)
    out = pl.pallas_call(
        functools.partial(_crossprod_channelnorm_kernel, eps=LN_EPS),
        out_shape=jax.ShapeDtypeStruct((M, H), x.dtype),
        grid=(pl.cdiv(M, tm),),
        in_specs=[pl.BlockSpec((tm, D), row),
                  _resident((D, H)),
                  _resident((1, H)),
                  _resident((1, D)),
                  _resident((1, 1)),
                  _resident((1, H)),
                  _resident((1, H)),
                  _resident((1, H))],
        out_specs=pl.BlockSpec((tm, H), row),
        compiler_params=_cparams(1),
    )(x.reshape(M, D), p["wa"], p["ba"], p["wbm"], p["bbm"],
      p["g"], p["cn_g"], p["cn_b"])
    return out.reshape(B, N, H)


def patch_embed(img6, pe_w4, pe_b, patch):
    # img6: (B, hb, patch, wb, patch, hid) -- a *free* row-major reshape of the
    # channels-last image; the patch gather + flatten happen inside the kernel.
    B, hb, _, wb, _, hid = img6.shape
    cout = pe_w4.shape[3]
    return pl.pallas_call(
        functools.partial(_patch_embed_kernel, patch=patch),
        out_shape=jax.ShapeDtypeStruct((B, hb, wb, cout), img6.dtype),
        grid=(B, hb),
        in_specs=[pl.BlockSpec((1, 1, patch, wb, patch, hid),
                               lambda b, h: (b, h, 0, 0, 0, 0)),
                  _resident((patch, patch, hid, cout)),
                  _resident((1, cout))],
        out_specs=pl.BlockSpec((1, 1, wb, cout), lambda b, h: (b, h, 0, 0)),
        compiler_params=_cparams(2),
    )(img6, pe_w4, pe_b)


def ln_mha_residual(x, lp, *, heads, dim_head):
    B, N, C = x.shape
    inner = heads * dim_head
    q_tile = _attn_q_tile(N)
    qt = N // q_tile
    return pl.pallas_call(
        functools.partial(_ln_mha_residual_kernel, heads=heads,
                          dim_head=dim_head, scale=dim_head ** -0.5,
                          eps=LN_EPS, q_tile=q_tile),
        out_shape=jax.ShapeDtypeStruct((B, N, C), x.dtype),
        grid=(B, qt),
        in_specs=[pl.BlockSpec((1, N, C), lambda b, q: (b, 0, 0)),
                  _resident((1, C)), _resident((1, C)),
                  _resident((C, inner)), _resident((1, inner)),
                  _resident((C, 2 * inner)), _resident((1, 2 * inner)),
                  _resident((inner, C)), _resident((1, C))],
        out_specs=pl.BlockSpec((1, q_tile, C), lambda b, q: (b, q, 0)),
        compiler_params=_cparams(2),
    )(x, lp["ln1_g"], lp["ln1_b"], lp["wq"], lp["bq"],
      lp["wkv"], lp["bkv"], lp["out_w"], lp["out_b"])


def ln_ffn_residual(x2d, lp):
    M, C = x2d.shape
    Dm = lp["ff1_w"].shape[1]
    tm = _row_tile(M, FFN_TILE_TARGET)
    row = lambda i: (i, 0)
    return pl.pallas_call(
        functools.partial(_ln_ffn_residual_kernel, eps=LN_EPS),
        out_shape=jax.ShapeDtypeStruct((M, C), x2d.dtype),
        grid=(pl.cdiv(M, tm),),
        in_specs=[pl.BlockSpec((tm, C), row),
                  _resident((1, C)), _resident((1, C)),
                  _resident((C, Dm)), _resident((1, Dm)),
                  _resident((Dm, C)), _resident((1, C))],
        out_specs=pl.BlockSpec((tm, C), row),
        compiler_params=_cparams(1),
    )(x2d, lp["ln2_g"], lp["ln2_b"], lp["ff1_w"], lp["ff1_b"],
      lp["ff2_w"], lp["ff2_b"])


def posadd_reshape_head(crops, pos, w, b):
    # pos-embed add fused with the reshape-head Linear; w columns were
    # pre-permuted (c,p)->(p,c) so the trailing rearrange is a free reshape.
    B, Np, H = crops.shape
    Dout = w.shape[1]
    tn = _row_tile(Np, ROW_TILE_TARGET)
    return pl.pallas_call(
        _posadd_matmul_kernel,
        out_shape=jax.ShapeDtypeStruct((B, Np, Dout), crops.dtype),
        grid=(B, pl.cdiv(Np, tn)),
        in_specs=[pl.BlockSpec((1, tn, H), lambda b, t: (b, t, 0)),
                  pl.BlockSpec((1, tn, H), lambda b, t: (0, t, 0)),
                  _resident((H, Dout)),
                  _resident((1, Dout))],
        out_specs=pl.BlockSpec((1, tn, Dout), lambda b, t: (b, t, 0)),
        compiler_params=_cparams(2),
    )(crops, pos, w, b)


# ---------------------------------------------------------------------------
# Model glue
# ---------------------------------------------------------------------------
def partitioner_forward(x, params, *, patch_size, heads, dim_head):
    B, N, D = x.shape
    hid = params["wa"].shape[1]
    pp = patch_size * patch_size

    # CrossProdMean + ChannelNorm fused (channels-last).
    xc = crossprod_channelnorm(x, params)

    side = math.isqrt(N)
    img = xc.reshape(B, side, side, hid)           # (B, H, W, C)

    # Padder: zero-pad H, W to patch multiples (no-op when already aligned).
    ph = (-side) % patch_size
    pw = (-side) % patch_size
    if ph or pw:
        img = jnp.pad(img, ((0, 0), (0, ph), (0, pw), (0, 0)))
    Hp, Wp = side + ph, side + pw
    hb, wb = Hp // patch_size, Wp // patch_size
    n_patches = hb * wb

    # Free (row-major preserving) reshape; patchify + embed in one kernel.
    img6 = img.reshape(B, hb, patch_size, wb, patch_size, hid)
    crops = patch_embed(img6, params["pe_w"], params["pe_b"], patch_size)
    crops = crops.reshape(B, n_patches, hid)

    # Transformer (pre-LN MHA + GELU MLP, dropout = identity at inference).
    for lp in params["layers"]:
        crops = ln_mha_residual(crops, lp, heads=heads, dim_head=dim_head)
        Bc, Nc, Cc = crops.shape
        crops = ln_ffn_residual(crops.reshape(Bc * Nc, Cc), lp).reshape(Bc, Nc, Cc)

    # pos_embed add (after the patcher, as in the reference) fused with the
    # reshape head; the final rearrange is now a free contiguous reshape.
    pos = params["pos_embed"][:, :n_patches]
    out = posadd_reshape_head(crops, pos, params["rs_w"], params["rs_b"])
    return out.reshape(B, n_patches * pp, D)


# ---------------------------------------------------------------------------
# Parameter initialization (PyTorch-Linear-style) + one-time preprocessing
# ---------------------------------------------------------------------------
def _linear(key, fan_in, fan_out):
    k1, k2 = jax.random.split(key)
    bound = 1.0 / math.sqrt(fan_in)
    w = jax.random.uniform(k1, (fan_in, fan_out), jnp.float32, -bound, bound)
    b = jax.random.uniform(k2, (fan_out,), jnp.float32, -bound, bound)
    return w, b


def init_params(key, *, dim, hid_dim, mlp_dim, depth, heads, dim_head,
                patch_size, blk_size):
    keys = iter(jax.random.split(key, 8 + 4 * depth))
    p = {}
    p["wa"], p["ba"] = _linear(next(keys), dim, hid_dim)
    p["wb"], p["bb"] = _linear(next(keys), dim, hid_dim)
    p["g"] = jax.random.normal(next(keys), (hid_dim,), jnp.float32)
    p["cn_g"] = jnp.ones((hid_dim,), jnp.float32)
    p["cn_b"] = jnp.zeros((hid_dim,), jnp.float32)
    p["pe_w"], p["pe_b"] = _linear(next(keys), hid_dim * patch_size ** 2, hid_dim)
    p["pos_embed"] = jax.random.normal(next(keys), (1, blk_size, hid_dim), jnp.float32)
    p["rs_w"], p["rs_b"] = _linear(next(keys), hid_dim, dim * patch_size ** 2)

    inner = heads * dim_head
    layers = []
    for _ in range(depth):
        lp = {}
        lp["ln1_g"] = jnp.ones((hid_dim,), jnp.float32)
        lp["ln1_b"] = jnp.zeros((hid_dim,), jnp.float32)
        lp["qkv_w"], lp["qkv_b"] = _linear(next(keys), hid_dim, 3 * inner)
        lp["out_w"], lp["out_b"] = _linear(next(keys), inner, hid_dim)
        lp["ln2_g"] = jnp.ones((hid_dim,), jnp.float32)
        lp["ln2_b"] = jnp.zeros((hid_dim,), jnp.float32)
        lp["ff1_w"], lp["ff1_b"] = _linear(next(keys), hid_dim, mlp_dim)
        lp["ff2_w"], lp["ff2_b"] = _linear(next(keys), mlp_dim, hid_dim)
        layers.append(lp)
    p["layers"] = layers
    return p


def prepare_params(p, *, dim, patch_size, heads, dim_head):
    """One-time weight preprocessing OUTSIDE the kernels / jit: bf16 MXU-operand
    weights, kernel-friendly layouts, algebraic folds. Biases/LN stay f32."""
    hid = p["wa"].shape[1]
    inner = heads * dim_head
    pp = patch_size * patch_size
    q = {}
    q["wa"] = p["wa"].astype(MM_DTYPE)
    q["ba"] = p["ba"].reshape(1, hid)
    # mean_j(x @ Wb + bb) == x @ col_mean(Wb) + mean(bb)
    q["wbm"] = jnp.mean(p["wb"], axis=1).reshape(1, -1)
    q["bbm"] = jnp.mean(p["bb"]).reshape(1, 1)
    q["g"] = p["g"].reshape(1, hid)
    q["cn_g"] = p["cn_g"].reshape(1, hid)
    q["cn_b"] = p["cn_b"].reshape(1, hid)
    # patch-embed weight as (p1, p2, c, out) for the in-kernel patch gather
    q["pe_w"] = p["pe_w"].reshape(patch_size, patch_size, hid, -1).astype(MM_DTYPE)
    q["pe_b"] = p["pe_b"].reshape(1, -1)
    q["pos_embed"] = p["pos_embed"]
    # reshape-head weight: permute output columns (c, p) -> (p, c) so the final
    # 'b n (c p) -> b (n p) c' rearrange is a free contiguous reshape.
    q["rs_w"] = (p["rs_w"].reshape(hid, dim, pp).transpose(0, 2, 1)
                 .reshape(hid, pp * dim).astype(MM_DTYPE))
    q["rs_b"] = p["rs_b"].reshape(dim, pp).T.reshape(1, pp * dim)

    layers = []
    for lp in p["layers"]:
        lq = {}
        lq["ln1_g"] = lp["ln1_g"].reshape(1, hid)
        lq["ln1_b"] = lp["ln1_b"].reshape(1, hid)
        lq["wq"] = lp["qkv_w"][:, :inner].astype(MM_DTYPE)
        lq["bq"] = lp["qkv_b"][:inner].reshape(1, inner)
        lq["wkv"] = lp["qkv_w"][:, inner:].astype(MM_DTYPE)
        lq["bkv"] = lp["qkv_b"][inner:].reshape(1, 2 * inner)
        lq["out_w"] = lp["out_w"].astype(MM_DTYPE)
        lq["out_b"] = lp["out_b"].reshape(1, hid)
        lq["ln2_g"] = lp["ln2_g"].reshape(1, hid)
        lq["ln2_b"] = lp["ln2_b"].reshape(1, hid)
        lq["ff1_w"] = lp["ff1_w"].astype(MM_DTYPE)
        lq["ff1_b"] = lp["ff1_b"].reshape(1, -1)
        lq["ff2_w"] = lp["ff2_w"].astype(MM_DTYPE)
        lq["ff2_b"] = lp["ff2_b"].reshape(1, hid)
        layers.append(lq)
    q["layers"] = layers
    return q


if __name__ == "__main__":
    # Small, consistent configuration
    B, N, DIM = 2, 64, 4            # x: (batch, tokens, dim); sqrt(N)=8 image side
    HID, MLP = 32, 64
    DEPTH, HEADS, DIM_HEAD = 1, 2, 8
    PATCH = 4
    BLK_SIZE = 16                   # perfect square; >= num patches (4)
    assert math.isqrt(BLK_SIZE)

    key = jax.random.PRNGKey(0)
    kx, kp = jax.random.split(key)
    x = jax.random.normal(kx, (B, N, DIM), jnp.float32)
    raw = init_params(kp, dim=DIM, hid_dim=HID, mlp_dim=MLP, depth=DEPTH,
                      heads=HEADS, dim_head=DIM_HEAD, patch_size=PATCH,
                      blk_size=BLK_SIZE)
    params = prepare_params(raw, dim=DIM, patch_size=PATCH,
                            heads=HEADS, dim_head=DIM_HEAD)

    fwd = jax.jit(functools.partial(partitioner_forward, patch_size=PATCH,
                                    heads=HEADS, dim_head=DIM_HEAD))
    out = jax.block_until_ready(fwd(x, params))

    n_patches = (math.isqrt(N) // PATCH) ** 2
    # (B, n_patches * patch^2, dim) = (2, 64, 4)
    assert out.shape == (B, n_patches * PATCH ** 2, DIM), out.shape
    assert bool(jnp.all(jnp.isfinite(out)))
    print("KERNEL_OK")
</pallas_src>

<mosaic_0001>
module attributes {stable_mosaic.version = 11 : i64} {
  func.func @_patch_embed_kernel(%arg0: i32, %arg1: i32, %arg2: memref<1x1x4x2x4x32xf32, #tpu.memory_space<vmem>>, %arg3: memref<4x4x32x32xbf16, #tpu.memory_space<vmem>>, %arg4: memref<1x32xf32, #tpu.memory_space<vmem>>, %arg5: memref<1x1x2x32xf32, #tpu.memory_space<vmem>>) attributes {dimension_semantics = [#tpu.dimension_semantics<parallel>, #tpu.dimension_semantics<parallel>], iteration_bounds = array<i64: 2, 2>, scalar_prefetch = 0 : i64, scratch_operands = 0 : i64, tpu.core_type = #tpu.core_type<tc>, window_params = [{transform_indices = @transform_0, window_bounds = array<i64: 1, 1, 4, 2, 4, 32>}, {pipeline_mode = #tpu.pipeline_mode<synchronous>, transform_indices = @transform_1, window_bounds = array<i64: 4, 4, 32, 32>}, {pipeline_mode = #tpu.pipeline_mode<synchronous>, transform_indices = @transform_2, window_bounds = array<i64: 1, 32>}, {transform_indices = @transform_3, window_bounds = array<i64: 1, 1, 2, 32>}]} {
    %cst = arith.constant 0.000000e+00 : f32
    %0 = vector.broadcast %cst : f32 to vector<2x32xf32>
    %c0 = arith.constant 0 : index
    %c0_0 = arith.constant 0 : index
    %c0_1 = arith.constant 0 : index
    %c0_2 = arith.constant 0 : index
    %c0_3 = arith.constant 0 : index
    %c0_4 = arith.constant 0 : index
    %1 = vector.load %arg2[%c0, %c0_0, %c0_1, %c0_2, %c0_3, %c0_4] : memref<1x1x4x2x4x32xf32, #tpu.memory_space<vmem>>, vector<1x1x1x2x1x32xf32>
    %2 = vector.shape_cast %1 : vector<1x1x1x2x1x32xf32> to vector<2x32xf32>
    %3 = arith.truncf %2 : vector<2x32xf32> to vector<2x32xbf16>
    %c0_5 = arith.constant 0 : index
    %c0_6 = arith.constant 0 : index
    %c0_7 = arith.constant 0 : index
    %c0_8 = arith.constant 0 : index
    %4 = vector.load %arg3[%c0_5, %c0_6, %c0_7, %c0_8] : memref<4x4x32x32xbf16, #tpu.memory_space<vmem>>, vector<1x1x32x32xbf16>
    %5 = vector.shape_cast %4 : vector<1x1x32x32xbf16> to vector<32x32xbf16>
    %cst_9 = arith.constant dense<0.000000e+00> : vector<2x32xf32>
    %6 = tpu.matmul %3, %5, %cst_9 {dimension_numbers = #tpu.dot_dimension_numbers<[1], [0], [0], [1], [0, 0, 1, 1], [], []>} : vector<2x32xbf16>, vector<32x32xbf16>, vector<2x32xf32> -> vector<2x32xf32>
    %7 = arith.addf %0, %6 : vector<2x32xf32>
    %c0_10 = arith.constant 0 : index
    %c0_11 = arith.constant 0 : index
    %c0_12 = arith.constant 0 : index
    %c0_13 = arith.constant 0 : index
    %c1 = arith.constant 1 : index
    %c0_14 = arith.constant 0 : index
    %8 = vector.load %arg2[%c0_10, %c0_11, %c0_12, %c0_13, %c1, %c0_14] : memref<1x1x4x2x4x32xf32, #tpu.memory_space<vmem>>, vector<1x1x1x2x1x32xf32>
    %9 = vector.shape_cast %8 : vector<1x1x1x2x1x32xf32> to vector<2x32xf32>
    %10 = arith.truncf %9 : vector<2x32xf32> to vector<2x32xbf16>
    %c0_15 = arith.constant 0 : index
    %c1_16 = arith.constant 1 : index
    %c0_17 = arith.constant 0 : index
    %c0_18 = arith.constant 0 : index
    %11 = vector.load %arg3[%c0_15, %c1_16, %c0_17, %c0_18] : memref<4x4x32x32xbf16, #tpu.memory_space<vmem>>, vector<1x1x32x32xbf16>
    %12 = vector.shape_cast %11 : vector<1x1x32x32xbf16> to vector<32x32xbf16>
    %cst_19 = arith.constant dense<0.000000e+00> : vector<2x32xf32>
    %13 = tpu.matmul %10, %12, %cst_19 {dimension_numbers = #tpu.dot_dimension_numbers<[1], [0], [0], [1], [0, 0, 1, 1], [], []>} : vector<2x32xbf16>, vector<32x32xbf16>, vector<2x32xf32> -> vector<2x32xf32>
    %14 = arith.addf %7, %13 : vector<2x32xf32>
    %c0_20 = arith.constant 0 : index
    %c0_21 = arith.constant 0 : index
    %c0_22 = arith.constant 0 : index
    %c0_23 = arith.constant 0 : index
    %c2 = arith.constant 2 : index
    %c0_24 = arith.constant 0 : index
    %15 = vector.load %arg2[%c0_20, %c0_21, %c0_22, %c0_23, %c2, %c0_24] : memref<1x1x4x2x4x32xf32, #tpu.memory_space<vmem>>, vector<1x1x1x2x1x32xf32>
    %16 = vector.shape_cast %15 : vector<1x1x1x2x1x32xf32> to vector<2x32xf32>
    %17 = arith.truncf %16 : vector<2x32xf32> to vector<2x32xbf16>
    %c0_25 = arith.constant 0 : index
    %c2_26 = arith.constant 2 : index
    %c0_27 = arith.constant 0 : index
    %c0_28 = arith.constant 0 : index
    %18 = vector.load %arg3[%c0_25, %c2_26, %c0_27, %c0_28] : memref<4x4x32x32xbf16, #tpu.memory_space<vmem>>, vector<1x1x32x32xbf16>
    %19 = vector.shape_cast %18 : vector<1x1x32x32xbf16> to vector<32x32xbf16>
    %cst_29 = arith.constant dense<0.000000e+00> : vector<2x32xf32>
    %20 = tpu.matmul %17, %19, %cst_29 {dimension_numbers = #tpu.dot_dimension_numbers<[1], [0], [0], [1], [0, 0, 1, 1], [], []>} : vector<2x32xbf16>, vector<32x32xbf16>, vector<2x32xf32> -> vector<2x32xf32>
    %21 = arith.addf %14, %20 : vector<2x32xf32>
    %c0_30 = arith.constant 0 : index
    %c0_31 = arith.constant 0 : index
    %c0_32 = arith.constant 0 : index
    %c0_33 = arith.constant 0 : index
    %c3 = arith.constant 3 : index
    %c0_34 = arith.constant 0 : index
    %22 = vector.load %arg2[%c0_30, %c0_31, %c0_32, %c0_33, %c3, %c0_34] : memref<1x1x4x2x4x32xf32, #tpu.memory_space<vmem>>, vector<1x1x1x2x1x32xf32>
    %23 = vector.shape_cast %22 : vector<1x1x1x2x1x32xf32> to vector<2x32xf32>
    %24 = arith.truncf %23 : vector<2x32xf32> to vector<2x32xbf16>
    %c0_35 = arith.constant 0 : index
    %c3_36 = arith.constant 3 : index
    %c0_37 = arith.constant 0 : index
    %c0_38 = arith.constant 0 : index
    %25 = vector.load %arg3[%c0_35, %c3_36, %c0_37, %c0_38] : memref<4x4x32x32xbf16, #tpu.memory_space<vmem>>, vector<1x1x32x32xbf16>
    %26 = vector.shape_cast %25 : vector<1x1x32x32xbf16> to vector<32x32xbf16>
    %cst_39 = arith.constant dense<0.000000e+00> : vector<2x32xf32>
    %27 = tpu.matmul %24, %26, %cst_39 {dimension_numbers = #tpu.dot_dimension_numbers<[1], [0], [0], [1], [0, 0, 1, 1], [], []>} : vector<2x32xbf16>, vector<32x32xbf16>, vector<2x32xf32> -> vector<2x32xf32>
    %28 = arith.addf %21, %27 : vector<2x32xf32>
    %c0_40 = arith.constant 0 : index
    %c0_41 = arith.constant 0 : index
    %c1_42 = arith.constant 1 : index
    %c0_43 = arith.constant 0 : index
    %c0_44 = arith.constant 0 : index
    %c0_45 = arith.constant 0 : index
    %29 = vector.load %arg2[%c0_40, %c0_41, %c1_42, %c0_43, %c0_44, %c0_45] : memref<1x1x4x2x4x32xf32, #tpu.memory_space<vmem>>, vector<1x1x1x2x1x32xf32>
    %30 = vector.shape_cast %29 : vector<1x1x1x2x1x32xf32> to vector<2x32xf32>
    %31 = arith.truncf %30 : vector<2x32xf32> to vector<2x32xbf16>
    %c1_46 = arith.constant 1 : index
    %c0_47 = arith.constant 0 : index
    %c0_48 = arith.constant 0 : index
    %c0_49 = arith.constant 0 : index
    %32 = vector.load %arg3[%c1_46, %c0_47, %c0_48, %c0_49] : memref<4x4x32x32xbf16, #tpu.memory_space<vmem>>, vector<1x1x32x32xbf16>
    %33 = vector.shape_cast %32 : vector<1x1x32x32xbf16> to vector<32x32xbf16>
    %cst_50 = arith.constant dense<0.000000e+00> : vector<2x32xf32>
    %34 = tpu.matmul %31, %33, %cst_50 {dimension_numbers = #tpu.dot_dimension_numbers<[1], [0], [0], [1], [0, 0, 1, 1], [], []>} : vector<2x32xbf16>, vector<32x32xbf16>, vector<2x32xf32> -> vector<2x32xf32>
    %35 = arith.addf %28, %34 : vector<2x32xf32>
    %c0_51 = arith.constant 0 : index
    %c0_52 = arith.constant 0 : index
    %c1_53 = arith.constant 1 : index
    %c0_54 = arith.constant 0 : index
    %c1_55 = arith.constant 1 : index
    %c0_56 = arith.constant 0 : index
    %36 = vector.load %arg2[%c0_51, %c0_52, %c1_53, %c0_54, %c1_55, %c0_56] : memref<1x1x4x2x4x32xf32, #tpu.memory_space<vmem>>, vector<1x1x1x2x1x32xf32>
    %37 = vector.shape_cast %36 : vector<1x1x1x2x1x32xf32> to vector<2x32xf32>
    %38 = arith.truncf %37 : vector<2x32xf32> to vector<2x32xbf16>
    %c1_57 = arith.constant 1 : index
    %c1_58 = arith.constant 1 : index
    %c0_59 = arith.constant 0 : index
    %c0_60 = arith.constant 0 : index
    %39 = vector.load %arg3[%c1_57, %c1_58, %c0_59, %c0_60] : memref<4x4x32x32xbf16, #tpu.memory_space<vmem>>, vector<1x1x32x32xbf16>
    %40 = vector.shape_cast %39 : vector<1x1x32x32xbf16> to vector<32x32xbf16>
    %cst_61 = arith.constant dense<0.000000e+00> : vector<2x32xf32>
    %41 = tpu.matmul %38, %40, %cst_61 {dimension_numbers = #tpu.dot_dimension_numbers<[1], [0], [0], [1], [0, 0, 1, 1], [], []>} : vector<2x32xbf16>, vector<32x32xbf16>, vector<2x32xf32> -> vector<2x32xf32>
    %42 = arith.addf %35, %41 : vector<2x32xf32>
    %c0_62 = arith.constant 0 : index
    %c0_63 = arith.constant 0 : index
    %c1_64 = arith.constant 1 : index
    %c0_65 = arith.constant 0 : index
    %c2_66 = arith.constant 2 : index
    %c0_67 = arith.constant 0 : index
    %43 = vector.load %arg2[%c0_62, %c0_63, %c1_64, %c0_65, %c2_66, %c0_67] : memref<1x1x4x2x4x32xf32, #tpu.memory_space<vmem>>, vector<1x1x1x2x1x32xf32>
    %44 = vector.shape_cast %43 : vector<1x1x1x2x1x32xf32> to vector<2x32xf32>
    %45 = arith.truncf %44 : vector<2x32xf32> to vector<2x32xbf16>
    %c1_68 = arith.constant 1 : index
    %c2_69 = arith.constant 2 : index
    %c0_70 = arith.constant 0 : index
    %c0_71 = arith.constant 0 : index
    %46 = vector.load %arg3[%c1_68, %c2_69, %c0_70, %c0_71] : memref<4x4x32x32xbf16, #tpu.memory_space<vmem>>, vector<1x1x32x32xbf16>
    %47 = vector.shape_cast %46 : vector<1x1x32x32xbf16> to vector<32x32xbf16>
    %cst_72 = arith.constant dense<0.000000e+00> : vector<2x32xf32>
    %48 = tpu.matmul %45, %47, %cst_72 {dimension_numbers = #tpu.dot_dimension_numbers<[1], [0], [0], [1], [0, 0, 1, 1], [], []>} : vector<2x32xbf16>, vector<32x32xbf16>, vector<2x32xf32> -> vector<2x32xf32>
    %49 = arith.addf %42, %48 : vector<2x32xf32>
    %c0_73 = arith.constant 0 : index
    %c0_74 = arith.constant 0 : index
    %c1_75 = arith.constant 1 : index
    %c0_76 = arith.constant 0 : index
    %c3_77 = arith.constant 3 : index
    %c0_78 = arith.constant 0 : index
    %50 = vector.load %arg2[%c0_73, %c0_74, %c1_75, %c0_76, %c3_77, %c0_78] : memref<1x1x4x2x4x32xf32, #tpu.memory_space<vmem>>, vector<1x1x1x2x1x32xf32>
    %51 = vector.shape_cast %50 : vector<1x1x1x2x1x32xf32> to vector<2x32xf32>
    %52 = arith.truncf %51 : vector<2x32xf32> to vector<2x32xbf16>
    %c1_79 = arith.constant 1 : index
    %c3_80 = arith.constant 3 : index
    %c0_81 = arith.constant 0 : index
    %c0_82 = arith.constant 0 : index
    %53 = vector.load %arg3[%c1_79, %c3_80, %c0_81, %c0_82] : memref<4x4x32x32xbf16, #tpu.memory_space<vmem>>, vector<1x1x32x32xbf16>
    %54 = vector.shape_cast %53 : vector<1x1x32x32xbf16> to vector<32x32xbf16>
    %cst_83 = arith.constant dense<0.000000e+00> : vector<2x32xf32>
    %55 = tpu.matmul %52, %54, %cst_83 {dimension_numbers = #tpu.dot_dimension_numbers<[1], [0], [0], [1], [0, 0, 1, 1], [], []>} : vector<2x32xbf16>, vector<32x32xbf16>, vector<2x32xf32> -> vector<2x32xf32>
    %56 = arith.addf %49, %55 : vector<2x32xf32>
    %c0_84 = arith.constant 0 : index
    %c0_85 = arith.constant 0 : index
    %c2_86 = arith.constant 2 : index
    %c0_87 = arith.constant 0 : index
    %c0_88 = arith.constant 0 : index
    %c0_89 = arith.constant 0 : index
    %57 = vector.load %arg2[%c0_84, %c0_85, %c2_86, %c0_87, %c0_88, %c0_89] : memref<1x1x4x2x4x32xf32, #tpu.memory_space<vmem>>, vector<1x1x1x2x1x32xf32>
    %58 = vector.shape_cast %57 : vector<1x1x1x2x1x32xf32> to vector<2x32xf32>
    %59 = arith.truncf %58 : vector<2x32xf32> to vector<2x32xbf16>
    %c2_90 = arith.constant 2 : index
    %c0_91 = arith.constant 0 : index
    %c0_92 = arith.constant 0 : index
    %c0_93 = arith.constant 0 : index
    %60 = vector.load %arg3[%c2_90, %c0_91, %c0_92, %c0_93] : memref<4x4x32x32xbf16, #tpu.memory_space<vmem>>, vector<1x1x32x32xbf16>
    %61 = vector.shape_cast %60 : vector<1x1x32x32xbf16> to vector<32x32xbf16>
    %cst_94 = arith.constant dense<0.000000e+00> : vector<2x32xf32>
    %62 = tpu.matmul %59, %61, %cst_94 {dimension_numbers = #tpu.dot_dimension_numbers<[1], [0], [0], [1], [0, 0, 1, 1], [], []>} : vector<2x32xbf16>, vector<32x32xbf16>, vector<2x32xf32> -> vector<2x32xf32>
    %63 = arith.addf %56, %62 : vector<2x32xf32>
    %c0_95 = arith.constant 0 : index
    %c0_96 = arith.constant 0 : index
    %c2_97 = arith.constant 2 : index
    %c0_98 = arith.constant 0 : index
    %c1_99 = arith.constant 1 : index
    %c0_100 = arith.constant 0 : index
    %64 = vector.load %arg2[%c0_95, %c0_96, %c2_97, %c0_98, %c1_99, %c0_100] : memref<1x1x4x2x4x32xf32, #tpu.memory_space<vmem>>, vector<1x1x1x2x1x32xf32>
    %65 = vector.shape_cast %64 : vector<1x1x1x2x1x32xf32> to vector<2x32xf32>
    %66 = arith.truncf %65 : vector<2x32xf32> to vector<2x32xbf16>
    %c2_101 = arith.constant 2 : index
    %c1_102 = arith.constant 1 : index
    %c0_103 = arith.constant 0 : index
    %c0_104 = arith.constant 0 : index
    %67 = vector.load %arg3[%c2_101, %c1_102, %c0_103, %c0_104] : memref<4x4x32x32xbf16, #tpu.memory_space<vmem>>, vector<1x1x32x32xbf16>
    %68 = vector.shape_cast %67 : vector<1x1x32x32xbf16> to vector<32x32xbf16>
    %cst_105 = arith.constant dense<0.000000e+00> : vector<2x32xf32>
    %69 = tpu.matmul %66, %68, %cst_105 {dimension_numbers = #tpu.dot_dimension_numbers<[1], [0], [0], [1], [0, 0, 1, 1], [], []>} : vector<2x32xbf16>, vector<32x32xbf16>, vector<2x32xf32> -> vector<2x32xf32>
    %70 = arith.addf %63, %69 : vector<2x32xf32>
    %c0_106 = arith.constant 0 : index
    %c0_107 = arith.constant 0 : index
    %c2_108 = arith.constant 2 : index
    %c0_109 = arith.constant 0 : index
    %c2_110 = arith.constant 2 : index
    %c0_111 = arith.constant 0 : index
    %71 = vector.load %arg2[%c0_106, %c0_107, %c2_108, %c0_109, %c2_110, %c0_111] : memref<1x1x4x2x4x32xf32, #tpu.memory_space<vmem>>, vector<1x1x1x2x1x32xf32>
    %72 = vector.shape_cast %71 : vector<1x1x1x2x1x32xf32> to vector<2x32xf32>
    %73 = arith.truncf %72 : vector<2x32xf32> to vector<2x32xbf16>
    %c2_112 = arith.constant 2 : index
    %c2_113 = arith.constant 2 : index
    %c0_114 = arith.constant 0 : index
    %c0_115 = arith.constant 0 : index
    %74 = vector.load %arg3[%c2_112, %c2_113, %c0_114, %c0_115] : memref<4x4x32x32xbf16, #tpu.memory_space<vmem>>, vector<1x1x32x32xbf16>
    %75 = vector.shape_cast %74 : vector<1x1x32x32xbf16> to vector<32x32xbf16>
    %cst_116 = arith.constant dense<0.000000e+00> : vector<2x32xf32>
    %76 = tpu.matmul %73, %75, %cst_116 {dimension_numbers = #tpu.dot_dimension_numbers<[1], [0], [0], [1], [0, 0, 1, 1], [], []>} : vector<2x32xbf16>, vector<32x32xbf16>, vector<2x32xf32> -> vector<2x32xf32>
    %77 = arith.addf %70, %76 : vector<2x32xf32>
    %c0_117 = arith.constant 0 : index
    %c0_118 = arith.constant 0 : index
    %c2_119 = arith.constant 2 : index
    %c0_120 = arith.constant 0 : index
    %c3_121 = arith.constant 3 : index
    %c0_122 = arith.constant 0 : index
    %78 = vector.load %arg2[%c0_117, %c0_118, %c2_119, %c0_120, %c3_121, %c0_122] : memref<1x1x4x2x4x32xf32, #tpu.memory_space<vmem>>, vector<1x1x1x2x1x32xf32>
    %79 = vector.shape_cast %78 : vector<1x1x1x2x1x32xf32> to vector<2x32xf32>
    %80 = arith.truncf %79 : vector<2x32xf32> to vector<2x32xbf16>
    %c2_123 = arith.constant 2 : index
    %c3_124 = arith.constant 3 : index
    %c0_125 = arith.constant 0 : index
    %c0_126 = arith.constant 0 : index
    %81 = vector.load %arg3[%c2_123, %c3_124, %c0_125, %c0_126] : memref<4x4x32x32xbf16, #tpu.memory_space<vmem>>, vector<1x1x32x32xbf16>
    %82 = vector.shape_cast %81 : vector<1x1x32x32xbf16> to vector<32x32xbf16>
    %cst_127 = arith.constant dense<0.000000e+00> : vector<2x32xf32>
    %83 = tpu.matmul %80, %82, %cst_127 {dimension_numbers = #tpu.dot_dimension_numbers<[1], [0], [0], [1], [0, 0, 1, 1], [], []>} : vector<2x32xbf16>, vector<32x32xbf16>, vector<2x32xf32> -> vector<2x32xf32>
    %84 = arith.addf %77, %83 : vector<2x32xf32>
    %c0_128 = arith.constant 0 : index
    %c0_129 = arith.constant 0 : index
    %c3_130 = arith.constant 3 : index
    %c0_131 = arith.constant 0 : index
    %c0_132 = arith.constant 0 : index
    %c0_133 = arith.constant 0 : index
    %85 = vector.load %arg2[%c0_128, %c0_129, %c3_130, %c0_131, %c0_132, %c0_133] : memref<1x1x4x2x4x32xf32, #tpu.memory_space<vmem>>, vector<1x1x1x2x1x32xf32>
    %86 = vector.shape_cast %85 : vector<1x1x1x2x1x32xf32> to vector<2x32xf32>
    %87 = arith.truncf %86 : vector<2x32xf32> to vector<2x32xbf16>
    %c3_134 = arith.constant 3 : index
    %c0_135 = arith.constant 0 : index
    %c0_136 = arith.constant 0 : index
    %c0_137 = arith.constant 0 : index
    %88 = vector.load %arg3[%c3_134, %c0_135, %c0_136, %c0_137] : memref<4x4x32x32xbf16, #tpu.memory_space<vmem>>, vector<1x1x32x32xbf16>
    %89 = vector.shape_cast %88 : vector<1x1x32x32xbf16> to vector<32x32xbf16>
    %cst_138 = arith.constant dense<0.000000e+00> : vector<2x32xf32>
    %90 = tpu.matmul %87, %89, %cst_138 {dimension_numbers = #tpu.dot_dimension_numbers<[1], [0], [0], [1], [0, 0, 1, 1], [], []>} : vector<2x32xbf16>, vector<32x32xbf16>, vector<2x32xf32> -> vector<2x32xf32>
    %91 = arith.addf %84, %90 : vector<2x32xf32>
    %c0_139 = arith.constant 0 : index
    %c0_140 = arith.constant 0 : index
    %c3_141 = arith.constant 3 : index
    %c0_142 = arith.constant 0 : index
    %c1_143 = arith.constant 1 : index
    %c0_144 = arith.constant 0 : index
    %92 = vector.load %arg2[%c0_139, %c0_140, %c3_141, %c0_142, %c1_143, %c0_144] : memref<1x1x4x2x4x32xf32, #tpu.memory_space<vmem>>, vector<1x1x1x2x1x32xf32>
    %93 = vector.shape_cast %92 : vector<1x1x1x2x1x32xf32> to vector<2x32xf32>
    %94 = arith.truncf %93 : vector<2x32xf32> to vector<2x32xbf16>
    %c3_145 = arith.constant 3 : index
    %c1_146 = arith.constant 1 : index
    %c0_147 = arith.constant 0 : index
    %c0_148 = arith.constant 0 : index
    %95 = vector.load %arg3[%c3_145, %c1_146, %c0_147, %c0_148] : memref<4x4x32x32xbf16, #tpu.memory_space<vmem>>, vector<1x1x32x32xbf16>
    %96 = vector.shape_cast %95 : vector<1x1x32x32xbf16> to vector<32x32xbf16>
    %cst_149 = arith.constant dense<0.000000e+00> : vector<2x32xf32>
    %97 = tpu.matmul %94, %96, %cst_149 {dimension_numbers = #tpu.dot_dimension_numbers<[1], [0], [0], [1], [0, 0, 1, 1], [], []>} : vector<2x32xbf16>, vector<32x32xbf16>, vector<2x32xf32> -> vector<2x32xf32>
    %98 = arith.addf %91, %97 : vector<2x32xf32>
    %c0_150 = arith.constant 0 : index
    %c0_151 = arith.constant 0 : index
    %c3_152 = arith.constant 3 : index
    %c0_153 = arith.constant 0 : index
    %c2_154 = arith.constant 2 : index
    %c0_155 = arith.constant 0 : index
    %99 = vector.load %arg2[%c0_150, %c0_151, %c3_152, %c0_153, %c2_154, %c0_155] : memref<1x1x4x2x4x32xf32, #tpu.memory_space<vmem>>, vector<1x1x1x2x1x32xf32>
    %100 = vector.shape_cast %99 : vector<1x1x1x2x1x32xf32> to vector<2x32xf32>
    %101 = arith.truncf %100 : vector<2x32xf32> to vector<2x32xbf16>
    %c3_156 = arith.constant 3 : index
    %c2_157 = arith.constant 2 : index
    %c0_158 = arith.constant 0 : index
    %c0_159 = arith.constant 0 : index
    %102 = vector.load %arg3[%c3_156, %c2_157, %c0_158, %c0_159] : memref<4x4x32x32xbf16, #tpu.memory_space<vmem>>, vector<1x1x32x32xbf16>
    %103 = vector.shape_cast %102 : vector<1x1x32x32xbf16> to vector<32x32xbf16>
    %cst_160 = arith.constant dense<0.000000e+00> : vector<2x32xf32>
    %104 = tpu.matmul %101, %103, %cst_160 {dimension_numbers = #tpu.dot_dimension_numbers<[1], [0], [0], [1], [0, 0, 1, 1], [], []>} : vector<2x32xbf16>, vector<32x32xbf16>, vector<2x32xf32> -> vector<2x32xf32>
    %105 = arith.addf %98, %104 : vector<2x32xf32>
    %c0_161 = arith.constant 0 : index
    %c0_162 = arith.constant 0 : index
    %c3_163 = arith.constant 3 : index
    %c0_164 = arith.constant 0 : index
    %c3_165 = arith.constant 3 : index
    %c0_166 = arith.constant 0 : index
    %106 = vector.load %arg2[%c0_161, %c0_162, %c3_163, %c0_164, %c3_165, %c0_166] : memref<1x1x4x2x4x32xf32, #tpu.memory_space<vmem>>, vector<1x1x1x2x1x32xf32>
    %107 = vector.shape_cast %106 : vector<1x1x1x2x1x32xf32> to vector<2x32xf32>
    %108 = arith.truncf %107 : vector<2x32xf32> to vector<2x32xbf16>
    %c3_167 = arith.constant 3 : index
    %c3_168 = arith.constant 3 : index
    %c0_169 = arith.constant 0 : index
    %c0_170 = arith.constant 0 : index
    %109 = vector.load %arg3[%c3_167, %c3_168, %c0_169, %c0_170] : memref<4x4x32x32xbf16, #tpu.memory_space<vmem>>, vector<1x1x32x32xbf16>
    %110 = vector.shape_cast %109 : vector<1x1x32x32xbf16> to vector<32x32xbf16>
    %cst_171 = arith.constant dense<0.000000e+00> : vector<2x32xf32>
    %111 = tpu.matmul %108, %110, %cst_171 {dimension_numbers = #tpu.dot_dimension_numbers<[1], [0], [0], [1], [0, 0, 1, 1], [], []>} : vector<2x32xbf16>, vector<32x32xbf16>, vector<2x32xf32> -> vector<2x32xf32>
    %112 = arith.addf %105, %111 : vector<2x32xf32>
    %c0_172 = arith.constant 0 : index
    %c0_173 = arith.constant 0 : index
    %113 = vector.load %arg4[%c0_172, %c0_173] : memref<1x32xf32, #tpu.memory_space<vmem>>, vector<1x32xf32>
    %114 = vector.broadcast %113 : vector<1x32xf32> to vector<2x32xf32>
    %115 = arith.addf %112, %114 : vector<2x32xf32>
    %c0_174 = arith.constant 0 : index
    %c0_175 = arith.constant 0 : index
    %c0_176 = arith.constant 0 : index
    %c0_177 = arith.constant 0 : index
    %116 = vector.load %arg5[%c0_174, %c0_175, %c0_176, %c0_177] : memref<1x1x2x32xf32, #tpu.memory_space<vmem>>, vector<1x1x2x32xf32>
    %117 = vector.shape_cast %116 : vector<1x1x2x32xf32> to vector<2x32xf32>
    %118 = vector.shape_cast %115 : vector<2x32xf32> to vector<1x1x2x32xf32>
    tpu.vector_store %arg5[%c0_174, %c0_175, %c0_176, %c0_177], %118 {strides = array<i32>} : memref<1x1x2x32xf32, #tpu.memory_space<vmem>>, vector<1x1x2x32xf32>,
    return
  }
  func.func @transform_0(%arg0: i32, %arg1: i32) -> (i32, i32, i32, i32, i32, i32) {
    %c0_i32 = arith.constant 0 : i32
    %c0_i32_0 = arith.constant 0 : i32
    %c0_i32_1 = arith.constant 0 : i32
    %c0_i32_2 = arith.constant 0 : i32
    %c0_i32_3 = arith.constant 0 : i32
    return %arg0, %arg1, %c0_i32, %c0_i32_0, %c0_i32_1, %c0_i32_2 : i32, i32, i32, i32, i32, i32
  }
  func.func @transform_1(%arg0: i32, %arg1: i32) -> (i32, i32, i32, i32) {
    %c0_i32 = arith.constant 0 : i32
    %c0_i32_0 = arith.constant 0 : i32
    %c0_i32_1 = arith.constant 0 : i32
    %c0_i32_2 = arith.constant 0 : i32
    %c0_i32_3 = arith.constant 0 : i32
    return %c0_i32, %c0_i32_0, %c0_i32_1, %c0_i32_2 : i32, i32, i32, i32
  }
  func.func @transform_2(%arg0: i32, %arg1: i32) -> (i32, i32) {
    %c0_i32 = arith.constant 0 : i32
    %c0_i32_0 = arith.constant 0 : i32
    %c0_i32_1 = arith.constant 0 : i32
    return %c0_i32, %c0_i32_0 : i32, i32
  }
  func.func @transform_3(%arg0: i32, %arg1: i32) -> (i32, i32, i32, i32) {
    %c0_i32 = arith.constant 0 : i32
    %c0_i32_0 = arith.constant 0 : i32
    %c0_i32_1 = arith.constant 0 : i32
    return %arg0, %arg1, %c0_i32, %c0_i32_0 : i32, i32, i32, i32
  }
}

module attributes {stable_mosaic.version = 11 : i64} {
  func.func @_crossprod_channelnorm_kernel(%arg0: i32, %arg1: memref<128x4xf32, #tpu.memory_space<vmem>>, %arg2: memref<4x32xbf16, #tpu.memory_space<vmem>>, %arg3: memref<1x32xf32, #tpu.memory_space<vmem>>, %arg4: memref<1x4xf32, #tpu.memory_space<vmem>>, %arg5: memref<1x1xf32, #tpu.memory_space<vmem>>, %arg6: memref<1x32xf32, #tpu.memory_space<vmem>>, %arg7: memref<1x32xf32, #tpu.memory_space<vmem>>, %arg8: memref<1x32xf32, #tpu.memory_space<vmem>>, %arg9: memref<128x32xf32, #tpu.memory_space<vmem>>) attributes {dimension_semantics = [#tpu.dimension_semantics<parallel>], iteration_bounds = array<i64: 1>, scalar_prefetch = 0 : i64, scratch_operands = 0 : i64, tpu.core_type = #tpu.core_type<tc>, window_params = [{transform_indices = @transform_0, window_bounds = array<i64: 128, 4>}, {pipeline_mode = #tpu.pipeline_mode<synchronous>, transform_indices = @transform_1, window_bounds = array<i64: 4, 32>}, {pipeline_mode = #tpu.pipeline_mode<synchronous>, transform_indices = @transform_2, window_bounds = array<i64: 1, 32>}, {pipeline_mode = #tpu.pipeline_mode<synchronous>, transform_indices = @transform_3, window_bounds = array<i64: 1, 4>}, {pipeline_mode = #tpu.pipeline_mode<synchronous>, transform_indices = @transform_4, window_bounds = array<i64: 1, 1>}, {pipeline_mode = #tpu.pipeline_mode<synchronous>, transform_indices = @transform_5, window_bounds = array<i64: 1, 32>}, {pipeline_mode = #tpu.pipeline_mode<synchronous>, transform_indices = @transform_6, window_bounds = array<i64: 1, 32>}, {pipeline_mode = #tpu.pipeline_mode<synchronous>, transform_indices = @transform_7, window_bounds = array<i64: 1, 32>}, {transform_indices = @transform_8, window_bounds = array<i64: 128, 32>}]} {
    %c0 = arith.constant 0 : index
    %c0_0 = arith.constant 0 : index
    %0 = vector.load %arg1[%c0, %c0_0] : memref<128x4xf32, #tpu.memory_space<vmem>>, vector<128x4xf32>
    %1 = arith.truncf %0 : vector<128x4xf32> to vector<128x4xbf16>
    %c0_1 = arith.constant 0 : index
    %c0_2 = arith.constant 0 : index
    %2 = vector.load %arg2[%c0_1, %c0_2] : memref<4x32xbf16, #tpu.memory_space<vmem>>, vector<4x32xbf16>
    %cst = arith.constant dense<0.000000e+00> : vector<128x32xf32>
    %3 = tpu.matmul %1, %2, %cst {dimension_numbers = #tpu.dot_dimension_numbers<[1], [0], [0], [1], [0, 0, 1, 1], [], []>} : vector<128x4xbf16>, vector<4x32xbf16>, vector<128x32xf32> -> vector<128x32xf32>
    %c0_3 = arith.constant 0 : index
    %c0_4 = arith.constant 0 : index
    %4 = vector.load %arg3[%c0_3, %c0_4] : memref<1x32xf32, #tpu.memory_space<vmem>>, vector<1x32xf32>
    %5 = vector.broadcast %4 : vector<1x32xf32> to vector<128x32xf32>
    %6 = arith.addf %3, %5 : vector<128x32xf32>
    %c0_5 = arith.constant 0 : index
    %c0_6 = arith.constant 0 : index
    %7 = vector.load %arg4[%c0_5, %c0_6] : memref<1x4xf32, #tpu.memory_space<vmem>>, vector<1x4xf32>
    %8 = vector.broadcast %7 : vector<1x4xf32> to vector<128x4xf32>
    %9 = arith.mulf %0, %8 : vector<128x4xf32>
    %cst_7 = arith.constant dense<0.000000e+00> : vector<128xf32>
    %10 = vector.multi_reduction <add>, %9, %cst_7 [1] : vector<128x4xf32> to vector<128xf32>
    %11 = vector.shape_cast %10 : vector<128xf32> to vector<128x1xf32>
    %c0_8 = arith.constant 0 : index
    %c0_9 = arith.constant 0 : index
    %12 = vector.load %arg5[%c0_8, %c0_9] : memref<1x1xf32, #tpu.memory_space<vmem>>, vector<1x1xf32>
    %13 = vector.broadcast %12 : vector<1x1xf32> to vector<128x1xf32>
    %14 = arith.addf %11, %13 : vector<128x1xf32>
    %c0_10 = arith.constant 0 : index
    %c0_11 = arith.constant 0 : index
    %15 = vector.load %arg6[%c0_10, %c0_11] : memref<1x32xf32, #tpu.memory_space<vmem>>, vector<1x32xf32>
    %16 = vector.broadcast %15 : vector<1x32xf32> to vector<128x32xf32>
    %17 = arith.mulf %16, %6 : vector<128x32xf32>
    %18 = vector.broadcast %14 : vector<128x1xf32> to vector<128x32xf32>
    %19 = arith.mulf %17, %18 : vector<128x32xf32>
    %cst_12 = arith.constant dense<0.000000e+00> : vector<128xf32>
    %20 = vector.multi_reduction <add>, %19, %cst_12 [1] : vector<128x32xf32> to vector<128xf32>
    %21 = vector.shape_cast %20 : vector<128xf32> to vector<128x1xf32>
    %cst_13 = arith.constant 3.200000e+01 : f32
    %22 = vector.broadcast %cst_13 : f32 to vector<128x1xf32>
    %23 = arith.divf %21, %22 : vector<128x1xf32>
    %24 = vector.broadcast %23 : vector<128x1xf32> to vector<128x32xf32>
    %25 = arith.subf %19, %24 : vector<128x32xf32>
    %26 = arith.mulf %25, %25 : vector<128x32xf32>
    %cst_14 = arith.constant dense<0.000000e+00> : vector<128xf32>
    %27 = vector.multi_reduction <add>, %26, %cst_14 [1] : vector<128x32xf32> to vector<128xf32>
    %28 = vector.shape_cast %27 : vector<128xf32> to vector<128x1xf32>
    %cst_15 = arith.constant 3.200000e+01 : f32
    %29 = vector.broadcast %cst_15 : f32 to vector<128x1xf32>
    %30 = arith.divf %28, %29 : vector<128x1xf32>
    %31 = vector.broadcast %23 : vector<128x1xf32> to vector<128x32xf32>
    %32 = arith.subf %19, %31 : vector<128x32xf32>
    %cst_16 = arith.constant 9.99999974E-6 : f32
    %33 = vector.broadcast %cst_16 : f32 to vector<128x1xf32>
    %34 = arith.addf %30, %33 : vector<128x1xf32>
    %35 = math.rsqrt %34 : vector<128x1xf32>
    %36 = vector.broadcast %35 : vector<128x1xf32> to vector<128x32xf32>
    %37 = arith.mulf %32, %36 : vector<128x32xf32>
    %c0_17 = arith.constant 0 : index
    %c0_18 = arith.constant 0 : index
    %38 = vector.load %arg7[%c0_17, %c0_18] : memref<1x32xf32, #tpu.memory_space<vmem>>, vector<1x32xf32>
    %39 = vector.broadcast %38 : vector<1x32xf32> to vector<128x32xf32>
    %40 = arith.mulf %37, %39 : vector<128x32xf32>
    %c0_19 = arith.constant 0 : index
    %c0_20 = arith.constant 0 : index
    %41 = vector.load %arg8[%c0_19, %c0_20] : memref<1x32xf32, #tpu.memory_space<vmem>>, vector<1x32xf32>
    %42 = vector.broadcast %41 : vector<1x32xf32> to vector<128x32xf32>
    %43 = arith.addf %40, %42 : vector<128x32xf32>
    %c0_21 = arith.constant 0 : index
    %c0_22 = arith.constant 0 : index
    %44 = vector.load %arg9[%c0_21, %c0_22] : memref<128x32xf32, #tpu.memory_space<vmem>>, vector<128x32xf32>
    tpu.vector_store %arg9[%c0_21, %c0_22], %43 {strides = array<i32>} : memref<128x32xf32, #tpu.memory_space<vmem>>, vector<128x32xf32>,
    return
  }
  func.func @transform_0(%arg0: i32) -> (i32, i32) {
    %c0_i32 = arith.constant 0 : i32
    %c0_i32_0 = arith.constant 0 : i32
    return %arg0, %c0_i32 : i32, i32
  }
  func.func @transform_1(%arg0: i32) -> (i32, i32) {
    %c0_i32 = arith.constant 0 : i32
    %c0_i32_0 = arith.constant 0 : i32
    %c0_i32_1 = arith.constant 0 : i32
    return %c0_i32, %c0_i32_0 : i32, i32
  }
  func.func @transform_2(%arg0: i32) -> (i32, i32) {
    %c0_i32 = arith.constant 0 : i32
    %c0_i32_0 = arith.constant 0 : i32
    %c0_i32_1 = arith.constant 0 : i32
    return %c0_i32, %c0_i32_0 : i32, i32
  }
  func.func @transform_3(%arg0: i32) -> (i32, i32) {
    %c0_i32 = arith.constant 0 : i32
    %c0_i32_0 = arith.constant 0 : i32
    %c0_i32_1 = arith.constant 0 : i32
    return %c0_i32, %c0_i32_0 : i32, i32
  }
  func.func @transform_4(%arg0: i32) -> (i32, i32) {
    %c0_i32 = arith.constant 0 : i32
    %c0_i32_0 = arith.constant 0 : i32
    %c0_i32_1 = arith.constant 0 : i32
    return %c0_i32, %c0_i32_0 : i32, i32
  }
  func.func @transform_5(%arg0: i32) -> (i32, i32) {
    %c0_i32 = arith.constant 0 : i32
    %c0_i32_0 = arith.constant 0 : i32
    %c0_i32_1 = arith.constant 0 : i32
    return %c0_i32, %c0_i32_0 : i32, i32
  }
  func.func @transform_6(%arg0: i32) -> (i32, i32) {
    %c0_i32 = arith.constant 0 : i32
    %c0_i32_0 = arith.constant 0 : i32
    %c0_i32_1 = arith.constant 0 : i32
    return %c0_i32, %c0_i32_0 : i32, i32
  }
  func.func @transform_7(%arg0: i32) -> (i32, i32) {
    %c0_i32 = arith.constant 0 : i32
    %c0_i32_0 = arith.constant 0 : i32
    %c0_i32_1 = arith.constant 0 : i32
    return %c0_i32, %c0_i32_0 : i32, i32
  }
  func.func @transform_8(%arg0: i32) -> (i32, i32) {
    %c0_i32 = arith.constant 0 : i32
    %c0_i32_0 = arith.constant 0 : i32
    return %arg0, %c0_i32 : i32, i32
  }
}

module attributes {stable_mosaic.version = 11 : i64} {
  func.func @_ln_mha_residual_kernel(%arg0: i32, %arg1: i32, %arg2: memref<1x4x32xf32, #tpu.memory_space<vmem>>, %arg3: memref<1x32xf32, #tpu.memory_space<vmem>>, %arg4: memref<1x32xf32, #tpu.memory_space<vmem>>, %arg5: memref<32x16xbf16, #tpu.memory_space<vmem>>, %arg6: memref<1x16xf32, #tpu.memory_space<vmem>>, %arg7: memref<32x32xbf16, #tpu.memory_space<vmem>>, %arg8: memref<1x32xf32, #tpu.memory_space<vmem>>, %arg9: memref<16x32xbf16, #tpu.memory_space<vmem>>, %arg10: memref<1x32xf32, #tpu.memory_space<vmem>>, %arg11: memref<1x4x32xf32, #tpu.memory_space<vmem>>) attributes {dimension_semantics = [#tpu.dimension_semantics<parallel>, #tpu.dimension_semantics<parallel>], iteration_bounds = array<i64: 2, 1>, scalar_prefetch = 0 : i64, scratch_operands = 0 : i64, tpu.core_type = #tpu.core_type<tc>, window_params = [{transform_indices = @transform_0, window_bounds = array<i64: 1, 4, 32>}, {pipeline_mode = #tpu.pipeline_mode<synchronous>, transform_indices = @transform_1, window_bounds = array<i64: 1, 32>}, {pipeline_mode = #tpu.pipeline_mode<synchronous>, transform_indices = @transform_2, window_bounds = array<i64: 1, 32>}, {pipeline_mode = #tpu.pipeline_mode<synchronous>, transform_indices = @transform_3, window_bounds = array<i64: 32, 16>}, {pipeline_mode = #tpu.pipeline_mode<synchronous>, transform_indices = @transform_4, window_bounds = array<i64: 1, 16>}, {pipeline_mode = #tpu.pipeline_mode<synchronous>, transform_indices = @transform_5, window_bounds = array<i64: 32, 32>}, {pipeline_mode = #tpu.pipeline_mode<synchronous>, transform_indices = @transform_6, window_bounds = array<i64: 1, 32>}, {pipeline_mode = #tpu.pipeline_mode<synchronous>, transform_indices = @transform_7, window_bounds = array<i64: 16, 32>}, {pipeline_mode = #tpu.pipeline_mode<synchronous>, transform_indices = @transform_8, window_bounds = array<i64: 1, 32>}, {transform_indices = @transform_9, window_bounds = array<i64: 1, 4, 32>}]} {
    %c0 = arith.constant 0 : index
    %c0_0 = arith.constant 0 : index
    %c0_1 = arith.constant 0 : index
    %0 = vector.load %arg2[%c0, %c0_0, %c0_1] : memref<1x4x32xf32, #tpu.memory_space<vmem>>, vector<1x4x32xf32>
    %1 = vector.shape_cast %0 : vector<1x4x32xf32> to vector<4x32xf32>
    %cst = arith.constant dense<0.000000e+00> : vector<4xf32>
    %2 = vector.multi_reduction <add>, %1, %cst [1] : vector<4x32xf32> to vector<4xf32>
    %3 = vector.shape_cast %2 : vector<4xf32> to vector<4x1xf32>
    %cst_2 = arith.constant 3.200000e+01 : f32
    %4 = vector.broadcast %cst_2 : f32 to vector<4x1xf32>
    %5 = arith.divf %3, %4 : vector<4x1xf32>
    %6 = vector.broadcast %5 : vector<4x1xf32> to vector<4x32xf32>
    %7 = arith.subf %1, %6 : vector<4x32xf32>
    %8 = arith.mulf %7, %7 : vector<4x32xf32>
    %cst_3 = arith.constant dense<0.000000e+00> : vector<4xf32>
    %9 = vector.multi_reduction <add>, %8, %cst_3 [1] : vector<4x32xf32> to vector<4xf32>
    %10 = vector.shape_cast %9 : vector<4xf32> to vector<4x1xf32>
    %cst_4 = arith.constant 3.200000e+01 : f32
    %11 = vector.broadcast %cst_4 : f32 to vector<4x1xf32>
    %12 = arith.divf %10, %11 : vector<4x1xf32>
    %13 = vector.broadcast %5 : vector<4x1xf32> to vector<4x32xf32>
    %14 = arith.subf %1, %13 : vector<4x32xf32>
    %cst_5 = arith.constant 9.99999974E-6 : f32
    %15 = vector.broadcast %cst_5 : f32 to vector<4x1xf32>
    %16 = arith.addf %12, %15 : vector<4x1xf32>
    %17 = math.rsqrt %16 : vector<4x1xf32>
    %18 = vector.broadcast %17 : vector<4x1xf32> to vector<4x32xf32>
    %19 = arith.mulf %14, %18 : vector<4x32xf32>
    %c0_6 = arith.constant 0 : index
    %c0_7 = arith.constant 0 : index
    %20 = vector.load %arg3[%c0_6, %c0_7] : memref<1x32xf32, #tpu.memory_space<vmem>>, vector<1x32xf32>
    %21 = vector.broadcast %20 : vector<1x32xf32> to vector<4x32xf32>
    %22 = arith.mulf %19, %21 : vector<4x32xf32>
    %c0_8 = arith.constant 0 : index
    %c0_9 = arith.constant 0 : index
    %23 = vector.load %arg4[%c0_8, %c0_9] : memref<1x32xf32, #tpu.memory_space<vmem>>, vector<1x32xf32>
    %24 = vector.broadcast %23 : vector<1x32xf32> to vector<4x32xf32>
    %25 = arith.addf %22, %24 : vector<4x32xf32>
    %26 = arith.truncf %25 : vector<4x32xf32> to vector<4x32xbf16>
    %c0_10 = arith.constant 0 : index
    %c0_11 = arith.constant 0 : index
    %27 = vector.load %arg7[%c0_10, %c0_11] : memref<32x32xbf16, #tpu.memory_space<vmem>>, vector<32x32xbf16>
    %cst_12 = arith.constant dense<0.000000e+00> : vector<4x32xf32>
    %28 = tpu.matmul %26, %27, %cst_12 {dimension_numbers = #tpu.dot_dimension_numbers<[1], [0], [0], [1], [0, 0, 1, 1], [], []>} : vector<4x32xbf16>, vector<32x32xbf16>, vector<4x32xf32> -> vector<4x32xf32>
    %c0_13 = arith.constant 0 : index
    %c0_14 = arith.constant 0 : index
    %29 = vector.load %arg8[%c0_13, %c0_14] : memref<1x32xf32, #tpu.memory_space<vmem>>, vector<1x32xf32>
    %30 = vector.broadcast %29 : vector<1x32xf32> to vector<4x32xf32>
    %31 = arith.addf %28, %30 : vector<4x32xf32>
    %c0_15 = arith.constant 0 : index
    %c0_16 = arith.constant 0 : index
    %32 = vector.load %arg5[%c0_15, %c0_16] : memref<32x16xbf16, #tpu.memory_space<vmem>>, vector<32x16xbf16>
    %cst_17 = arith.constant dense<0.000000e+00> : vector<4x16xf32>
    %33 = tpu.matmul %26, %32, %cst_17 {dimension_numbers = #tpu.dot_dimension_numbers<[1], [0], [0], [1], [0, 0, 1, 1], [], []>} : vector<4x32xbf16>, vector<32x16xbf16>, vector<4x16xf32> -> vector<4x16xf32>
    %c0_18 = arith.constant 0 : index
    %c0_19 = arith.constant 0 : index
    %34 = vector.load %arg6[%c0_18, %c0_19] : memref<1x16xf32, #tpu.memory_space<vmem>>, vector<1x16xf32>
    %35 = vector.broadcast %34 : vector<1x16xf32> to vector<4x16xf32>
    %36 = arith.addf %33, %35 : vector<4x16xf32>
    %37 = vector.extract_strided_slice %36 {offsets = [0, 0], sizes = [4, 8], strides = [1, 1]} : vector<4x16xf32> to vector<4x8xf32>
    %38 = arith.truncf %37 : vector<4x8xf32> to vector<4x8xbf16>
    %39 = vector.extract_strided_slice %31 {offsets = [0, 0], sizes = [4, 8], strides = [1, 1]} : vector<4x32xf32> to vector<4x8xf32>
    %40 = arith.truncf %39 : vector<4x8xf32> to vector<4x8xbf16>
    %41 = vector.extract_strided_slice %31 {offsets = [0, 16], sizes = [4, 8], strides = [1, 1]} : vector<4x32xf32> to vector<4x8xf32>
    %42 = arith.truncf %41 : vector<4x8xf32> to vector<4x8xbf16>
    %cst_20 = arith.constant dense<0.000000e+00> : vector<4x4xf32>
    %43 = tpu.matmul %38, %40, %cst_20 {dimension_numbers = #tpu.dot_dimension_numbers<[1], [1], [0], [0], [0, 0, 1, 0], [], []>} : vector<4x8xbf16>, vector<4x8xbf16>, vector<4x4xf32> -> vector<4x4xf32>
    %cst_21 = arith.constant 0.353553385 : f32
    %44 = vector.broadcast %cst_21 : f32 to vector<4x4xf32>
    %45 = arith.mulf %43, %44 : vector<4x4xf32>
    %cst_22 = arith.constant dense<0xFF800000> : vector<4xf32>
    %46 = vector.multi_reduction <maximumf>, %45, %cst_22 [1] : vector<4x4xf32> to vector<4xf32>
    %47 = vector.shape_cast %46 : vector<4xf32> to vector<4x1xf32>
    %48 = vector.broadcast %47 : vector<4x1xf32> to vector<4x4xf32>
    %49 = arith.subf %45, %48 : vector<4x4xf32>
    %50 = math.exp %49 : vector<4x4xf32>
    %cst_23 = arith.constant dense<0.000000e+00> : vector<4xf32>
    %51 = vector.multi_reduction <add>, %50, %cst_23 [1] : vector<4x4xf32> to vector<4xf32>
    %52 = vector.shape_cast %51 : vector<4xf32> to vector<4x1xf32>
    %53 = tpu.reciprocal %52 {approx = true} : vector<4x1xf32> -> vector<4x1xf32>
    %54 = vector.broadcast %53 : vector<4x1xf32> to vector<4x4xf32>
    %55 = arith.mulf %50, %54 : vector<4x4xf32>
    %56 = arith.truncf %55 : vector<4x4xf32> to vector<4x4xbf16>
    %cst_24 = arith.constant dense<0.000000e+00> : vector<4x8xf32>
    %57 = tpu.matmul %56, %42, %cst_24 {dimension_numbers = #tpu.dot_dimension_numbers<[1], [0], [0], [1], [0, 0, 1, 1], [], []>} : vector<4x4xbf16>, vector<4x8xbf16>, vector<4x8xf32> -> vector<4x8xf32>
    %58 = vector.extract_strided_slice %36 {offsets = [0, 8], sizes = [4, 8], strides = [1, 1]} : vector<4x16xf32> to vector<4x8xf32>
    %59 = arith.truncf %58 : vector<4x8xf32> to vector<4x8xbf16>
    %60 = vector.extract_strided_slice %31 {offsets = [0, 8], sizes = [4, 8], strides = [1, 1]} : vector<4x32xf32> to vector<4x8xf32>
    %61 = arith.truncf %60 : vector<4x8xf32> to vector<4x8xbf16>
    %62 = vector.extract_strided_slice %31 {offsets = [0, 24], sizes = [4, 8], strides = [1, 1]} : vector<4x32xf32> to vector<4x8xf32>
    %63 = arith.truncf %62 : vector<4x8xf32> to vector<4x8xbf16>
    %cst_25 = arith.constant dense<0.000000e+00> : vector<4x4xf32>
    %64 = tpu.matmul %59, %61, %cst_25 {dimension_numbers = #tpu.dot_dimension_numbers<[1], [1], [0], [0], [0, 0, 1, 0], [], []>} : vector<4x8xbf16>, vector<4x8xbf16>, vector<4x4xf32> -> vector<4x4xf32>
    %cst_26 = arith.constant 0.353553385 : f32
    %65 = vector.broadcast %cst_26 : f32 to vector<4x4xf32>
    %66 = arith.mulf %64, %65 : vector<4x4xf32>
    %cst_27 = arith.constant dense<0xFF800000> : vector<4xf32>
    %67 = vector.multi_reduction <maximumf>, %66, %cst_27 [1] : vector<4x4xf32> to vector<4xf32>
    %68 = vector.shape_cast %67 : vector<4xf32> to vector<4x1xf32>
    %69 = vector.broadcast %68 : vector<4x1xf32> to vector<4x4xf32>
    %70 = arith.subf %66, %69 : vector<4x4xf32>
    %71 = math.exp %70 : vector<4x4xf32>
    %cst_28 = arith.constant dense<0.000000e+00> : vector<4xf32>
    %72 = vector.multi_reduction <add>, %71, %cst_28 [1] : vector<4x4xf32> to vector<4xf32>
    %73 = vector.shape_cast %72 : vector<4xf32> to vector<4x1xf32>
    %74 = tpu.reciprocal %73 {approx = true} : vector<4x1xf32> -> vector<4x1xf32>
    %75 = vector.broadcast %74 : vector<4x1xf32> to vector<4x4xf32>
    %76 = arith.mulf %71, %75 : vector<4x4xf32>
    %77 = arith.truncf %76 : vector<4x4xf32> to vector<4x4xbf16>
    %cst_29 = arith.constant dense<0.000000e+00> : vector<4x8xf32>
    %78 = tpu.matmul %77, %63, %cst_29 {dimension_numbers = #tpu.dot_dimension_numbers<[1], [0], [0], [1], [0, 0, 1, 1], [], []>} : vector<4x4xbf16>, vector<4x8xbf16>, vector<4x8xf32> -> vector<4x8xf32>
    %79 = tpu.concatenate %57, %78 in 1 : vector<4x8xf32>, vector<4x8xf32> -> vector<4x16xf32>
    %80 = arith.truncf %79 : vector<4x16xf32> to vector<4x16xbf16>
    %c0_30 = arith.constant 0 : index
    %c0_31 = arith.constant 0 : index
    %81 = vector.load %arg9[%c0_30, %c0_31] : memref<16x32xbf16, #tpu.memory_space<vmem>>, vector<16x32xbf16>
    %cst_32 = arith.constant dense<0.000000e+00> : vector<4x32xf32>
    %82 = tpu.matmul %80, %81, %cst_32 {dimension_numbers = #tpu.dot_dimension_numbers<[1], [0], [0], [1], [0, 0, 1, 1], [], []>} : vector<4x16xbf16>, vector<16x32xbf16>, vector<4x32xf32> -> vector<4x32xf32>
    %c0_33 = arith.constant 0 : index
    %c0_34 = arith.constant 0 : index
    %83 = vector.load %arg10[%c0_33, %c0_34] : memref<1x32xf32, #tpu.memory_space<vmem>>, vector<1x32xf32>
    %84 = vector.broadcast %83 : vector<1x32xf32> to vector<4x32xf32>
    %85 = arith.addf %82, %84 : vector<4x32xf32>
    %86 = arith.addf %1, %85 : vector<4x32xf32>
    %c0_35 = arith.constant 0 : index
    %c0_36 = arith.constant 0 : index
    %c0_37 = arith.constant 0 : index
    %87 = vector.load %arg11[%c0_35, %c0_36, %c0_37] : memref<1x4x32xf32, #tpu.memory_space<vmem>>, vector<1x4x32xf32>
    %88 = vector.shape_cast %87 : vector<1x4x32xf32> to vector<4x32xf32>
    %89 = vector.shape_cast %86 : vector<4x32xf32> to vector<1x4x32xf32>
    tpu.vector_store %arg11[%c0_35, %c0_36, %c0_37], %89 {strides = array<i32>} : memref<1x4x32xf32, #tpu.memory_space<vmem>>, vector<1x4x32xf32>,
    return
  }
  func.func @transform_0(%arg0: i32, %arg1: i32) -> (i32, i32, i32) {
    %c0_i32 = arith.constant 0 : i32
    %c0_i32_0 = arith.constant 0 : i32
    %c0_i32_1 = arith.constant 0 : i32
    return %arg0, %c0_i32, %c0_i32_0 : i32, i32, i32
  }
  func.func @transform_1(%arg0: i32, %arg1: i32) -> (i32, i32) {
    %c0_i32 = arith.constant 0 : i32
    %c0_i32_0 = arith.constant 0 : i32
    %c0_i32_1 = arith.constant 0 : i32
    return %c0_i32, %c0_i32_0 : i32, i32
  }
  func.func @transform_2(%arg0: i32, %arg1: i32) -> (i32, i32) {
    %c0_i32 = arith.constant 0 : i32
    %c0_i32_0 = arith.constant 0 : i32
    %c0_i32_1 = arith.constant 0 : i32
    return %c0_i32, %c0_i32_0 : i32, i32
  }
  func.func @transform_3(%arg0: i32, %arg1: i32) -> (i32, i32) {
    %c0_i32 = arith.constant 0 : i32
    %c0_i32_0 = arith.constant 0 : i32
    %c0_i32_1 = arith.constant 0 : i32
    return %c0_i32, %c0_i32_0 : i32, i32
  }
  func.func @transform_4(%arg0: i32, %arg1: i32) -> (i32, i32) {
    %c0_i32 = arith.constant 0 : i32
    %c0_i32_0 = arith.constant 0 : i32
    %c0_i32_1 = arith.constant 0 : i32
    return %c0_i32, %c0_i32_0 : i32, i32
  }
  func.func @transform_5(%arg0: i32, %arg1: i32) -> (i32, i32) {
    %c0_i32 = arith.constant 0 : i32
    %c0_i32_0 = arith.constant 0 : i32
    %c0_i32_1 = arith.constant 0 : i32
    return %c0_i32, %c0_i32_0 : i32, i32
  }
  func.func @transform_6(%arg0: i32, %arg1: i32) -> (i32, i32) {
    %c0_i32 = arith.constant 0 : i32
    %c0_i32_0 = arith.constant 0 : i32
    %c0_i32_1 = arith.constant 0 : i32
    return %c0_i32, %c0_i32_0 : i32, i32
  }
  func.func @transform_7(%arg0: i32, %arg1: i32) -> (i32, i32) {
    %c0_i32 = arith.constant 0 : i32
    %c0_i32_0 = arith.constant 0 : i32
    %c0_i32_1 = arith.constant 0 : i32
    return %c0_i32, %c0_i32_0 : i32, i32
  }
  func.func @transform_8(%arg0: i32, %arg1: i32) -> (i32, i32) {
    %c0_i32 = arith.constant 0 : i32
    %c0_i32_0 = arith.constant 0 : i32
    %c0_i32_1 = arith.constant 0 : i32
    return %c0_i32, %c0_i32_0 : i32, i32
  }
  func.func @transform_9(%arg0: i32, %arg1: i32) -> (i32, i32, i32) {
    %c0_i32 = arith.constant 0 : i32
    %c0_i32_0 = arith.constant 0 : i32
    return %arg0, %arg1, %c0_i32 : i32, i32, i32
  }
}

module attributes {stable_mosaic.version = 11 : i64} {
  func.func @_ln_ffn_residual_kernel(%arg0: i32, %arg1: memref<8x32xf32, #tpu.memory_space<vmem>>, %arg2: memref<1x32xf32, #tpu.memory_space<vmem>>, %arg3: memref<1x32xf32, #tpu.memory_space<vmem>>, %arg4: memref<32x64xbf16, #tpu.memory_space<vmem>>, %arg5: memref<1x64xf32, #tpu.memory_space<vmem>>, %arg6: memref<64x32xbf16, #tpu.memory_space<vmem>>, %arg7: memref<1x32xf32, #tpu.memory_space<vmem>>, %arg8: memref<8x32xf32, #tpu.memory_space<vmem>>) attributes {dimension_semantics = [#tpu.dimension_semantics<parallel>], iteration_bounds = array<i64: 1>, scalar_prefetch = 0 : i64, scratch_operands = 0 : i64, tpu.core_type = #tpu.core_type<tc>, window_params = [{transform_indices = @transform_0, window_bounds = array<i64: 8, 32>}, {pipeline_mode = #tpu.pipeline_mode<synchronous>, transform_indices = @transform_1, window_bounds = array<i64: 1, 32>}, {pipeline_mode = #tpu.pipeline_mode<synchronous>, transform_indices = @transform_2, window_bounds = array<i64: 1, 32>}, {pipeline_mode = #tpu.pipeline_mode<synchronous>, transform_indices = @transform_3, window_bounds = array<i64: 32, 64>}, {pipeline_mode = #tpu.pipeline_mode<synchronous>, transform_indices = @transform_4, window_bounds = array<i64: 1, 64>}, {pipeline_mode = #tpu.pipeline_mode<synchronous>, transform_indices = @transform_5, window_bounds = array<i64: 64, 32>}, {pipeline_mode = #tpu.pipeline_mode<synchronous>, transform_indices = @transform_6, window_bounds = array<i64: 1, 32>}, {transform_indices = @transform_7, window_bounds = array<i64: 8, 32>}]} {
    %c0 = arith.constant 0 : index
    %c0_0 = arith.constant 0 : index
    %0 = vector.load %arg1[%c0, %c0_0] : memref<8x32xf32, #tpu.memory_space<vmem>>, vector<8x32xf32>
    %cst = arith.constant dense<0.000000e+00> : vector<8xf32>
    %1 = vector.multi_reduction <add>, %0, %cst [1] : vector<8x32xf32> to vector<8xf32>
    %2 = vector.shape_cast %1 : vector<8xf32> to vector<8x1xf32>
    %cst_1 = arith.constant 3.200000e+01 : f32
    %3 = vector.broadcast %cst_1 : f32 to vector<8x1xf32>
    %4 = arith.divf %2, %3 : vector<8x1xf32>
    %5 = vector.broadcast %4 : vector<8x1xf32> to vector<8x32xf32>
    %6 = arith.subf %0, %5 : vector<8x32xf32>
    %7 = arith.mulf %6, %6 : vector<8x32xf32>
    %cst_2 = arith.constant dense<0.000000e+00> : vector<8xf32>
    %8 = vector.multi_reduction <add>, %7, %cst_2 [1] : vector<8x32xf32> to vector<8xf32>
    %9 = vector.shape_cast %8 : vector<8xf32> to vector<8x1xf32>
    %cst_3 = arith.constant 3.200000e+01 : f32
    %10 = vector.broadcast %cst_3 : f32 to vector<8x1xf32>
    %11 = arith.divf %9, %10 : vector<8x1xf32>
    %12 = vector.broadcast %4 : vector<8x1xf32> to vector<8x32xf32>
    %13 = arith.subf %0, %12 : vector<8x32xf32>
    %cst_4 = arith.constant 9.99999974E-6 : f32
    %14 = vector.broadcast %cst_4 : f32 to vector<8x1xf32>
    %15 = arith.addf %11, %14 : vector<8x1xf32>
    %16 = math.rsqrt %15 : vector<8x1xf32>
    %17 = vector.broadcast %16 : vector<8x1xf32> to vector<8x32xf32>
    %18 = arith.mulf %13, %17 : vector<8x32xf32>
    %c0_5 = arith.constant 0 : index
    %c0_6 = arith.constant 0 : index
    %19 = vector.load %arg2[%c0_5, %c0_6] : memref<1x32xf32, #tpu.memory_space<vmem>>, vector<1x32xf32>
    %20 = vector.broadcast %19 : vector<1x32xf32> to vector<8x32xf32>
    %21 = arith.mulf %18, %20 : vector<8x32xf32>
    %c0_7 = arith.constant 0 : index
    %c0_8 = arith.constant 0 : index
    %22 = vector.load %arg3[%c0_7, %c0_8] : memref<1x32xf32, #tpu.memory_space<vmem>>, vector<1x32xf32>
    %23 = vector.broadcast %22 : vector<1x32xf32> to vector<8x32xf32>
    %24 = arith.addf %21, %23 : vector<8x32xf32>
    %25 = arith.truncf %24 : vector<8x32xf32> to vector<8x32xbf16>
    %c0_9 = arith.constant 0 : index
    %c0_10 = arith.constant 0 : index
    %26 = vector.load %arg4[%c0_9, %c0_10] : memref<32x64xbf16, #tpu.memory_space<vmem>>, vector<32x64xbf16>
    %cst_11 = arith.constant dense<0.000000e+00> : vector<8x64xf32>
    %27 = tpu.matmul %25, %26, %cst_11 {dimension_numbers = #tpu.dot_dimension_numbers<[1], [0], [0], [1], [0, 0, 1, 1], [], []>} : vector<8x32xbf16>, vector<32x64xbf16>, vector<8x64xf32> -> vector<8x64xf32>
    %c0_12 = arith.constant 0 : index
    %c0_13 = arith.constant 0 : index
    %28 = vector.load %arg5[%c0_12, %c0_13] : memref<1x64xf32, #tpu.memory_space<vmem>>, vector<1x64xf32>
    %29 = vector.broadcast %28 : vector<1x64xf32> to vector<8x64xf32>
    %30 = arith.addf %27, %29 : vector<8x64xf32>
    %31 = arith.mulf %30, %30 : vector<8x64xf32>
    %32 = arith.mulf %30, %31 : vector<8x64xf32>
    %cst_14 = arith.constant 4.471500e-02 : f32
    %33 = vector.broadcast %cst_14 : f32 to vector<8x64xf32>
    %34 = arith.mulf %33, %32 : vector<8x64xf32>
    %35 = arith.addf %30, %34 : vector<8x64xf32>
    %cst_15 = arith.constant 0.797884583 : f32
    %36 = vector.broadcast %cst_15 : f32 to vector<8x64xf32>
    %37 = arith.mulf %36, %35 : vector<8x64xf32>
    %38 = math.tanh %37 : vector<8x64xf32>
    %cst_16 = arith.constant 1.000000e+00 : f32
    %39 = vector.broadcast %cst_16 : f32 to vector<8x64xf32>
    %40 = arith.addf %39, %38 : vector<8x64xf32>
    %cst_17 = arith.constant 5.000000e-01 : f32
    %41 = vector.broadcast %cst_17 : f32 to vector<8x64xf32>
    %42 = arith.mulf %41, %40 : vector<8x64xf32>
    %43 = arith.mulf %30, %42 : vector<8x64xf32>
    %44 = arith.truncf %43 : vector<8x64xf32> to vector<8x64xbf16>
    %c0_18 = arith.constant 0 : index
    %c0_19 = arith.constant 0 : index
    %45 = vector.load %arg6[%c0_18, %c0_19] : memref<64x32xbf16, #tpu.memory_space<vmem>>, vector<64x32xbf16>
    %cst_20 = arith.constant dense<0.000000e+00> : vector<8x32xf32>
    %46 = tpu.matmul %44, %45, %cst_20 {dimension_numbers = #tpu.dot_dimension_numbers<[1], [0], [0], [1], [0, 0, 1, 1], [], []>} : vector<8x64xbf16>, vector<64x32xbf16>, vector<8x32xf32> -> vector<8x32xf32>
    %c0_21 = arith.constant 0 : index
    %c0_22 = arith.constant 0 : index
    %47 = vector.load %arg7[%c0_21, %c0_22] : memref<1x32xf32, #tpu.memory_space<vmem>>, vector<1x32xf32>
    %48 = vector.broadcast %47 : vector<1x32xf32> to vector<8x32xf32>
    %49 = arith.addf %46, %48 : vector<8x32xf32>
    %50 = arith.addf %0, %49 : vector<8x32xf32>
    %c0_23 = arith.constant 0 : index
    %c0_24 = arith.constant 0 : index
    %51 = vector.load %arg8[%c0_23, %c0_24] : memref<8x32xf32, #tpu.memory_space<vmem>>, vector<8x32xf32>
    tpu.vector_store %arg8[%c0_23, %c0_24], %50 {strides = array<i32>} : memref<8x32xf32, #tpu.memory_space<vmem>>, vector<8x32xf32>,
    return
  }
  func.func @transform_0(%arg0: i32) -> (i32, i32) {
    %c0_i32 = arith.constant 0 : i32
    %c0_i32_0 = arith.constant 0 : i32
    return %arg0, %c0_i32 : i32, i32
  }
  func.func @transform_1(%arg0: i32) -> (i32, i32) {
    %c0_i32 = arith.constant 0 : i32
    %c0_i32_0 = arith.constant 0 : i32
    %c0_i32_1 = arith.constant 0 : i32
    return %c0_i32, %c0_i32_0 : i32, i32
  }
  func.func @transform_2(%arg0: i32) -> (i32, i32) {
    %c0_i32 = arith.constant 0 : i32
    %c0_i32_0 = arith.constant 0 : i32
    %c0_i32_1 = arith.constant 0 : i32
    return %c0_i32, %c0_i32_0 : i32, i32
  }
  func.func @transform_3(%arg0: i32) -> (i32, i32) {
    %c0_i32 = arith.constant 0 : i32
    %c0_i32_0 = arith.constant 0 : i32
    %c0_i32_1 = arith.constant 0 : i32
    return %c0_i32, %c0_i32_0 : i32, i32
  }
  func.func @transform_4(%arg0: i32) -> (i32, i32) {
    %c0_i32 = arith.constant 0 : i32
    %c0_i32_0 = arith.constant 0 : i32
    %c0_i32_1 = arith.constant 0 : i32
    return %c0_i32, %c0_i32_0 : i32, i32
  }
  func.func @transform_5(%arg0: i32) -> (i32, i32) {
    %c0_i32 = arith.constant 0 : i32
    %c0_i32_0 = arith.constant 0 : i32
    %c0_i32_1 = arith.constant 0 : i32
    return %c0_i32, %c0_i32_0 : i32, i32
  }
  func.func @transform_6(%arg0: i32) -> (i32, i32) {
    %c0_i32 = arith.constant 0 : i32
    %c0_i32_0 = arith.constant 0 : i32
    %c0_i32_1 = arith.constant 0 : i32
    return %c0_i32, %c0_i32_0 : i32, i32
  }
  func.func @transform_7(%arg0: i32) -> (i32, i32) {
    %c0_i32 = arith.constant 0 : i32
    %c0_i32_0 = arith.constant 0 : i32
    return %arg0, %c0_i32 : i32, i32
  }
}

module attributes {stable_mosaic.version = 11 : i64} {
  func.func @_posadd_matmul_kernel(%arg0: i32, %arg1: i32, %arg2: memref<1x4x32xf32, #tpu.memory_space<vmem>>, %arg3: memref<1x4x32xf32, #tpu.memory_space<vmem>>, %arg4: memref<32x64xbf16, #tpu.memory_space<vmem>>, %arg5: memref<1x64xf32, #tpu.memory_space<vmem>>, %arg6: memref<1x4x64xf32, #tpu.memory_space<vmem>>) attributes {dimension_semantics = [#tpu.dimension_semantics<parallel>, #tpu.dimension_semantics<parallel>], iteration_bounds = array<i64: 2, 1>, scalar_prefetch = 0 : i64, scratch_operands = 0 : i64, tpu.core_type = #tpu.core_type<tc>, window_params = [{transform_indices = @transform_0, window_bounds = array<i64: 1, 4, 32>}, {transform_indices = @transform_1, window_bounds = array<i64: 1, 4, 32>}, {pipeline_mode = #tpu.pipeline_mode<synchronous>, transform_indices = @transform_2, window_bounds = array<i64: 32, 64>}, {pipeline_mode = #tpu.pipeline_mode<synchronous>, transform_indices = @transform_3, window_bounds = array<i64: 1, 64>}, {transform_indices = @transform_4, window_bounds = array<i64: 1, 4, 64>}]} {
    %c0 = arith.constant 0 : index
    %c0_0 = arith.constant 0 : index
    %c0_1 = arith.constant 0 : index
    %0 = vector.load %arg2[%c0, %c0_0, %c0_1] : memref<1x4x32xf32, #tpu.memory_space<vmem>>, vector<1x4x32xf32>
    %1 = vector.shape_cast %0 : vector<1x4x32xf32> to vector<4x32xf32>
    %c0_2 = arith.constant 0 : index
    %c0_3 = arith.constant 0 : index
    %c0_4 = arith.constant 0 : index
    %2 = vector.load %arg3[%c0_2, %c0_3, %c0_4] : memref<1x4x32xf32, #tpu.memory_space<vmem>>, vector<1x4x32xf32>
    %3 = vector.shape_cast %2 : vector<1x4x32xf32> to vector<4x32xf32>
    %4 = arith.addf %1, %3 : vector<4x32xf32>
    %5 = arith.truncf %4 : vector<4x32xf32> to vector<4x32xbf16>
    %c0_5 = arith.constant 0 : index
    %c0_6 = arith.constant 0 : index
    %6 = vector.load %arg4[%c0_5, %c0_6] : memref<32x64xbf16, #tpu.memory_space<vmem>>, vector<32x64xbf16>
    %cst = arith.constant dense<0.000000e+00> : vector<4x64xf32>
    %7 = tpu.matmul %5, %6, %cst {dimension_numbers = #tpu.dot_dimension_numbers<[1], [0], [0], [1], [0, 0, 1, 1], [], []>} : vector<4x32xbf16>, vector<32x64xbf16>, vector<4x64xf32> -> vector<4x64xf32>
    %c0_7 = arith.constant 0 : index
    %c0_8 = arith.constant 0 : index
    %8 = vector.load %arg5[%c0_7, %c0_8] : memref<1x64xf32, #tpu.memory_space<vmem>>, vector<1x64xf32>
    %9 = vector.broadcast %8 : vector<1x64xf32> to vector<4x64xf32>
    %10 = arith.addf %7, %9 : vector<4x64xf32>
    %c0_9 = arith.constant 0 : index
    %c0_10 = arith.constant 0 : index
    %c0_11 = arith.constant 0 : index
    %11 = vector.load %arg6[%c0_9, %c0_10, %c0_11] : memref<1x4x64xf32, #tpu.memory_space<vmem>>, vector<1x4x64xf32>
    %12 = vector.shape_cast %11 : vector<1x4x64xf32> to vector<4x64xf32>
    %13 = vector.shape_cast %10 : vector<4x64xf32> to vector<1x4x64xf32>
    tpu.vector_store %arg6[%c0_9, %c0_10, %c0_11], %13 {strides = array<i32>} : memref<1x4x64xf32, #tpu.memory_space<vmem>>, vector<1x4x64xf32>,
    return
  }
  func.func @transform_0(%arg0: i32, %arg1: i32) -> (i32, i32, i32) {
    %c0_i32 = arith.constant 0 : i32
    %c0_i32_0 = arith.constant 0 : i32
    return %arg0, %arg1, %c0_i32 : i32, i32, i32
  }
  func.func @transform_1(%arg0: i32, %arg1: i32) -> (i32, i32, i32) {
    %c0_i32 = arith.constant 0 : i32
    %c0_i32_0 = arith.constant 0 : i32
    %c0_i32_1 = arith.constant 0 : i32
    return %c0_i32, %arg1, %c0_i32_0 : i32, i32, i32
  }
  func.func @transform_2(%arg0: i32, %arg1: i32) -> (i32, i32) {
    %c0_i32 = arith.constant 0 : i32
    %c0_i32_0 = arith.constant 0 : i32
    %c0_i32_1 = arith.constant 0 : i32
    return %c0_i32, %c0_i32_0 : i32, i32
  }
  func.func @transform_3(%arg0: i32, %arg1: i32) -> (i32, i32) {
    %c0_i32 = arith.constant 0 : i32
    %c0_i32_0 = arith.constant 0 : i32
    %c0_i32_1 = arith.constant 0 : i32
    return %c0_i32, %c0_i32_0 : i32, i32
  }
  func.func @transform_4(%arg0: i32, %arg1: i32) -> (i32, i32, i32) {
    %c0_i32 = arith.constant 0 : i32
    %c0_i32_0 = arith.constant 0 : i32
    return %arg0, %arg1, %c0_i32 : i32, i32, i32
  }
}

</mosaic_0001>

<llo_original>
// kernel: partitioner_forward.8
$region0: #{partitioner_forward.8}
  #allocation0 [shape = 'u32[]', space=smem, size = 0x4, offset = 0x4, fixed_abs, tag = 'smem constant byte address 0x4 - core index']
  #allocation1 [shape = 'u32[144,128]{1,0:T(1,128)}', space=vmem, size = 0x12000, scoped, tag = 'internal scratch']
  %s0 = inlined_call_operand.vmem [shape: f32[8,32], index: 0, kind: input, shape index: {}]
  %s1 = inlined_call_operand.vmem [shape: f32[1,32], index: 1, kind: input, shape index: {}]
  %s2 = inlined_call_operand.vmem [shape: f32[1,32], index: 2, kind: input, shape index: {}]
  %s3 = inlined_call_operand.vmem [shape: bf16[32,64], index: 3, kind: input, shape index: {}]
  %s4 = inlined_call_operand.vmem [shape: f32[1,64], index: 4, kind: input, shape index: {}]
  %s5 = inlined_call_operand.vmem [shape: bf16[64,32], index: 5, kind: input, shape index: {}]
  %s6 = inlined_call_operand.vmem [shape: f32[1,32], index: 6, kind: input, shape index: {}]
  %s7 = inlined_call_operand.vmem [shape: f32[8,32], index: 7, kind: output, shape index: {}]
  %s8 = sld [smem:[#allocation0]]
  $region38: #{partitioner_forward.8} parent=0
    _
  %s10 = ssub.s32 1, %s8
  %s11 = scalar_select 0, %s10, %s8
  // Predicated region
  $region2: #{partitioner_forward.8} parent=0 // pred_check
    _
  $region3: #{partitioner_forward.8} parent=0 // pred_check_branch
    %13 = sbr.rel (0) target = $region5
  $region4: #{partitioner_forward.8} parent=0 // pred_region
    _
  $region5: #{partitioner_forward.8} parent=0 // pred_fallthru
    _
  // Predicated region
  $region6: #{partitioner_forward.8} parent=0 // pred_check
    _
  $region7: #{partitioner_forward.8} parent=0 // pred_check_branch
    %15 = sbr.rel (0) target = $region9
  $region8: #{partitioner_forward.8} parent=0 // pred_region
    _
  $region9: #{partitioner_forward.8} parent=0 // pred_fallthru
    _
  // Predicated region
  $region10: #{partitioner_forward.8} parent=0 // pred_check
    _
  $region11: #{partitioner_forward.8} parent=0 // pred_check_branch
    %17 = sbr.rel (0) target = $region13
  $region12: #{partitioner_forward.8} parent=0 // pred_region
    _
  $region13: #{partitioner_forward.8} parent=0 // pred_fallthru
    _
  // Predicated region
  $region14: #{partitioner_forward.8} parent=0 // pred_check
    _
  $region15: #{partitioner_forward.8} parent=0 // pred_check_branch
    %19 = sbr.rel (0) target = $region17
  $region16: #{partitioner_forward.8} parent=0 // pred_region
    _
  $region17: #{partitioner_forward.8} parent=0 // pred_fallthru
    _
  // Predicated region
  $region18: #{partitioner_forward.8} parent=0 // pred_check
    _
  $region19: #{partitioner_forward.8} parent=0 // pred_check_branch
    %21 = sbr.rel (0) target = $region21
  $region20: #{partitioner_forward.8} parent=0 // pred_region
    _
  $region21: #{partitioner_forward.8} parent=0 // pred_fallthru
    _
  // Predicated region
  $region22: #{partitioner_forward.8} parent=0 // pred_check
    _
  $region23: #{partitioner_forward.8} parent=0 // pred_check_branch
    %23 = sbr.rel (0) target = $region25
  $region24: #{partitioner_forward.8} parent=0 // pred_region
    _
  $region25: #{partitioner_forward.8} parent=0 // pred_fallthru
    _
  // Predicated region
  $region26: #{partitioner_forward.8} parent=0 // pred_check
    _
  $region27: #{partitioner_forward.8} parent=0 // pred_check_branch
    %25 = sbr.rel (0) target = $region29
  $region28: #{partitioner_forward.8} parent=0 // pred_region
    _
  $region29: #{partitioner_forward.8} parent=0 // pred_fallthru
    _
  %v27 = vld [vmem:[%s0] sm:$0xff]
  %vm28 = vcmask 261120
  %v29 = vsel %vm28, %v27, 0.0
  %30 = vadd.xlane.f32.xlu0 %v29
  %v31 = vpop.xlane.xlu0 %30
  %v32 = vrcp.pop 32.0
  %v33 = vmul.f32 %v31, %v32
  %v34 = vsub.f32 %v27, %v33
  %v35 = vmul.f32 %v34, %v34
  %v36 = vsel %vm28, %v35, 0.0
  %37 = vadd.xlane.f32.xlu0 %v36
  %v38 = vpop.xlane.xlu0 %37
  %v39 = vmul.f32 %v38, %v32
  %v40 = vadd.f32 %v39, 1e-05
  %v41 = vrsqrt.pop %v40
  %v42 = vmul.f32 %v34, %v41
  %v43 = vld [vmem:[%s1] sm:$0x1]
  %v45 = vlaneseq
  %v46 = vshrl.u32 %v45, 7
  %v47 = vsub.s32 0, %v46
  %v48 = vrot.slane %v43, %v47
  %v50 = vmul.f32 %v42, %v48
  %v51 = vld [vmem:[%s2] sm:$0x1]
  %v53 = vlaneseq
  %v54 = vshrl.u32 %v53, 7
  %v55 = vsub.s32 0, %v54
  %v56 = vrot.slane %v51, %v55
  %v58 = vadd.f32 %v50, %v56
  %v59 = vpack.c.bf16 %v58, %v58
  %v60 = vld [vmem:[%s3] sm:$0xf]
  %v61 = vld [vmem:[%s3 + $0x4] sm:$0xf]
  %v62 = vld [vmem:[%s3 + $0x8] sm:$0xf]
  %v63 = vld [vmem:[%s3 + $0xc] sm:$0xf]
  %v64 = vld [vmem:[%s4] sm:$0x1]
  %v66 = vlaneseq
  %v67 = vshrl.u32 %v66, 7
  %v68 = vsub.s32 0, %v67
  %v69 = vrot.slane %v64, %v68
  %v75 = vunpack.c.l.b16 %v60
  %v76 = vunpack.c.l.b16 %v61
  %v77 = vunpack.c.l.b16 %v62
  %v78 = vunpack.c.l.b16 %v63
  %v79 = vpack.c.b16 %v76, %v75
  %v80 = vpack.c.b16 %v78, %v77
  %v84 = vsel %vm28, %v59, 0
  %86 = vmatprep.subr.bf16.mxu0 0
  %87 = vmatpush1.bf16.msra.mxu0 %v79
  %88 = vmatprep.subr.bf16.mxu0 0
  %89 = vmatpush1.bf16.msra.mxu0 %v80
  %90 = vmatprep.subr.bf16.mxu0 0
  %91 = vmatpush1.bf16.msra.mxu0 0
  %92 = vmatprep.subr.bf16.mxu0 0
  %93 = vmatpush1.bf16.msra.mxu0 0
  %94 = vmatprep.subr.bf16.mxu0 0
  %95 = vmatpush1.bf16.msra.mxu0 0
  %96 = vmatprep.subr.bf16.mxu0 0
  %97 = vmatpush1.bf16.msra.mxu0 0
  %98 = vmatprep.subr.bf16.mxu0 0
  %99 = vmatpush1.bf16.msra.mxu0 0
  %100 = vmatprep.subr.bf16.mxu0 0
  %101 = vmatpush1.bf16.msra.mxu0 0
  %102 = vmatprep.subr.bf16.mxu0 0
  %103 = vmatpush1.bf16.msra.mxu0 0
  %104 = vmatprep.subr.bf16.mxu0 0
  %105 = vmatpush1.bf16.msra.mxu0 0
  %106 = vmatprep.subr.bf16.mxu0 0
  %107 = vmatpush1.bf16.msra.mxu0 0
  %108 = vmatprep.subr.bf16.mxu0 0
  %109 = vmatpush1.bf16.msra.mxu0 0
  %110 = vmatprep.subr.bf16.mxu0 0
  %111 = vmatpush1.bf16.msra.mxu0 0
  %112 = vmatprep.subr.bf16.mxu0 0
  %113 = vmatpush1.bf16.msra.mxu0 0
  %114 = vmatprep.subr.bf16.mxu0 0
  %115 = vmatpush1.bf16.msra.mxu0 0
  %116 = vmatprep.subr.bf16.mxu0 0
  %117 = vmatpush1.bf16.msra.mxu0 0
  %118 = vmatprep.mubr.bf16.mxu0 0
  %119 = vmatmul.mubr.bf16.gmra.mrb[0].mxu0 %v84
  %v120 = vpop.f32.mrb[0].mxu0
  %v121 = vadd.f32 %v69, %v120
  %v122 = vpop.f32.mrb[0].mxu0
  %v123 = vpop.f32.mrb[0].mxu0
  %v124 = vpop.f32.mrb[0].mxu0
  %125 = vdwg.mxu0
  %v126 = vmul.f32 %v121, %v121
  %v127 = vmul.f32 %v121, %v126
  %v128 = vmul.f32 %v127, 0.044715
  %v129 = vadd.f32 %v121, %v128
  %v130 = vmul.f32 %v129, 0.7978846
  %v131 = vtanh.pop %v130
  %v132 = vadd.f32 %v131, 1.0
  %v133 = vmul.f32 %v132, 0.5
  %v134 = vmul.f32 %v121, %v133
  %v135 = vpack.c.bf16 %v134, %v134
  %v136 = vld [vmem:[%s5] sm:$0xf]
  %v137 = vld [vmem:[%s5 + $0x4] sm:$0xf]
  %v138 = vld [vmem:[%s5 + $0x8] sm:$0xf]
  %v139 = vld [vmem:[%s5 + $0xc] sm:$0xf]
  %v140 = vld [vmem:[%s5 + $0x10] sm:$0xf]
  %v141 = vld [vmem:[%s5 + $0x14] sm:$0xf]
  %v142 = vld [vmem:[%s5 + $0x18] sm:$0xf]
  %v143 = vld [vmem:[%s5 + $0x1c] sm:$0xf]
  %v144 = vld [vmem:[%s6] sm:$0x1]
  %v146 = vlaneseq
  %v147 = vshrl.u32 %v146, 7
  %v148 = vsub.s32 0, %v147
  %v149 = vrot.slane %v144, %v148
  %v159 = vunpack.c.l.b16 %v136
  %v160 = vunpack.c.l.b16 %v137
  %v161 = vunpack.c.l.b16 %v138
  %v162 = vunpack.c.l.b16 %v139
  %v163 = vunpack.c.l.b16 %v140
  %v164 = vunpack.c.l.b16 %v141
  %v165 = vunpack.c.l.b16 %v142
  %v166 = vunpack.c.l.b16 %v143
  %v167 = vpack.c.b16 %v160, %v159
  %v168 = vpack.c.b16 %v162, %v161
  %v169 = vpack.c.b16 %v164, %v163
  %v170 = vpack.c.b16 %v166, %v165
  %vm175 = vcmask 523264
  %v177 = vsel %vm175, %v135, 0
  %179 = vmatprep.subr.bf16.mxu0 0
  %180 = vmatpush1.bf16.msra.mxu0 %v167
  %181 = vmatprep.subr.bf16.mxu0 0
  %182 = vmatpush1.bf16.msra.mxu0 %v168
  %183 = vmatprep.subr.bf16.mxu0 0
  %184 = vmatpush1.bf16.msra.mxu0 %v169
  %185 = vmatprep.subr.bf16.mxu0 0
  %186 = vmatpush1.bf16.msra.mxu0 %v170
  %187 = vmatprep.subr.bf16.mxu0 0
  %188 = vmatpush1.bf16.msra.mxu0 0
  %189 = vmatprep.subr.bf16.mxu0 0
  %190 = vmatpush1.bf16.msra.mxu0 0
  %191 = vmatprep.subr.bf16.mxu0 0
  %192 = vmatpush1.bf16.msra.mxu0 0
  %193 = vmatprep.subr.bf16.mxu0 0
  %194 = vmatpush1.bf16.msra.mxu0 0
  %195 = vmatprep.subr.bf16.mxu0 0
  %196 = vmatpush1.bf16.msra.mxu0 0
  %197 = vmatprep.subr.bf16.mxu0 0
  %198 = vmatpush1.bf16.msra.mxu0 0
  %199 = vmatprep.subr.bf16.mxu0 0
  %200 = vmatpush1.bf16.msra.mxu0 0
  %201 = vmatprep.subr.bf16.mxu0 0
  %202 = vmatpush1.bf16.msra.mxu0 0
  %203 = vmatprep.subr.bf16.mxu0 0
  %204 = vmatpush1.bf16.msra.mxu0 0
  %205 = vmatprep.subr.bf16.mxu0 0
  %206 = vmatpush1.bf16.msra.mxu0 0
  %207 = vmatprep.subr.bf16.mxu0 0
  %208 = vmatpush1.bf16.msra.mxu0 0
  %209 = vmatprep.subr.bf16.mxu0 0
  %210 = vmatpush1.bf16.msra.mxu0 0
  %211 = vmatprep.mubr.bf16.mxu0 0
  %212 = vmatmul.mubr.bf16.gmra.mrb[0].mxu0 %v177
  %v213 = vpop.f32.mrb[0].mxu0
  %v214 = vadd.f32 %v149, %v213
  %v215 = vpop.f32.mrb[0].mxu0
  %v216 = vpop.f32.mrb[0].mxu0
  %v217 = vpop.f32.mrb[0].mxu0
  %218 = vdwg.mxu0
  %v219 = vadd.f32 %v27, %v214
  %220 = vst.msk [vmem:[%s7] sm:$0xff] %vm28, %v219
  // Predicated region
  $region30: #{partitioner_forward.8} parent=0 // pred_check
    _
  $region31: #{partitioner_forward.8} parent=0 // pred_check_branch
    %222 = sbr.rel (0) target = $region33
  $region32: #{partitioner_forward.8} parent=0 // pred_region
    _
  $region33: #{partitioner_forward.8} parent=0 // pred_fallthru
    _
  // Predicated region
  $region34: #{partitioner_forward.8} parent=0 // pred_check
    _
  $region35: #{partitioner_forward.8} parent=0 // pred_check_branch
    %224 = sbr.rel (0) target = $region37
  $region36: #{partitioner_forward.8} parent=0 // pred_region
    _
  $region37: #{partitioner_forward.8} parent=0 // pred_fallthru
    _

// kernel: partitioner_forward.5
$region0: #{partitioner_forward.5}
  #allocation0 [shape = 'u32[]', space=smem, size = 0x4, offset = 0x4, fixed_abs, tag = 'smem constant byte address 0x4 - core index']
  #allocation1 [shape = 'u32[144,128]{1,0:T(1,128)}', space=vmem, size = 0x12000, scoped, tag = 'internal scratch']
  #allocation2 [shape = 'f32[1,1]{1,0:T(1,128)S(1)}', space=vmem, size = 0x200, scoped, tag = 'scoped memory for partitioner_forward.5']
  %s0 = inlined_call_operand.vmem [shape: f32[128,4], index: 0, kind: input, shape index: {}]
  %s1 = inlined_call_operand.vmem [shape: bf16[4,32], index: 1, kind: input, shape index: {}]
  %s2 = inlined_call_operand.vmem [shape: f32[1,32], index: 2, kind: input, shape index: {}]
  %s3 = inlined_call_operand.vmem [shape: f32[1,4], index: 3, kind: input, shape index: {}]
  %s4 = inlined_call_operand.<no memory space> [shape: f32[1,1], index: 4, kind: input, shape index: {}]
  %s5 = inlined_call_operand.vmem [shape: f32[1,32], index: 5, kind: input, shape index: {}]
  %s6 = inlined_call_operand.vmem [shape: f32[1,32], index: 6, kind: input, shape index: {}]
  %s7 = inlined_call_operand.vmem [shape: f32[1,32], index: 7, kind: input, shape index: {}]
  %s8 = inlined_call_operand.vmem [shape: f32[128,32], index: 8, kind: output, shape index: {}]
  %s9 = sld [smem:[#allocation0]]
  $region42: #{partitioner_forward.5} parent=0
    _
  %s11 = ssub.s32 1, %s9
  %s12 = scalar_select 0, %s11, %s9
  %v13 = vstv %s4
  %14 = vst [vmem:[#allocation2] sm:$0x1] %v13
  // Predicated region
  $region2: #{partitioner_forward.5} parent=0 // pred_check
    _
  $region3: #{partitioner_forward.5} parent=0 // pred_check_branch
    %16 = sbr.rel (0) target = $region5
  $region4: #{partitioner_forward.5} parent=0 // pred_region
    _
  $region5: #{partitioner_forward.5} parent=0 // pred_fallthru
    _
  // Predicated region
  $region6: #{partitioner_forward.5} parent=0 // pred_check
    _
  $region7: #{partitioner_forward.5} parent=0 // pred_check_branch
    %18 = sbr.rel (0) target = $region9
  $region8: #{partitioner_forward.5} parent=0 // pred_region
    _
  $region9: #{partitioner_forward.5} parent=0 // pred_fallthru
    _
  // Predicated region
  $region10: #{partitioner_forward.5} parent=0 // pred_check
    _
  $region11: #{partitioner_forward.5} parent=0 // pred_check_branch
    %20 = sbr.rel (0) target = $region13
  $region12: #{partitioner_forward.5} parent=0 // pred_region
    _
  $region13: #{partitioner_forward.5} parent=0 // pred_fallthru
    _
  // Predicated region
  $region14: #{partitioner_forward.5} parent=0 // pred_check
    _
  $region15: #{partitioner_forward.5} parent=0 // pred_check_branch
    %22 = sbr.rel (0) target = $region17
  $region16: #{partitioner_forward.5} parent=0 // pred_region
    _
  $region17: #{partitioner_forward.5} parent=0 // pred_fallthru
    _
  // Predicated region
  $region18: #{partitioner_forward.5} parent=0 // pred_check
    _
  $region19: #{partitioner_forward.5} parent=0 // pred_check_branch
    %24 = sbr.rel (0) target = $region21
  $region20: #{partitioner_forward.5} parent=0 // pred_region
    _
  $region21: #{partitioner_forward.5} parent=0 // pred_fallthru
    _
  // Predicated region
  $region22: #{partitioner_forward.5} parent=0 // pred_check
    _
  $region23: #{partitioner_forward.5} parent=0 // pred_check_branch
    %26 = sbr.rel (0) target = $region25
  $region24: #{partitioner_forward.5} parent=0 // pred_region
    _
  $region25: #{partitioner_forward.5} parent=0 // pred_fallthru
    _
  // Predicated region
  $region26: #{partitioner_forward.5} parent=0 // pred_check
    _
  $region27: #{partitioner_forward.5} parent=0 // pred_check_branch
    %28 = sbr.rel (0) target = $region29
  $region28: #{partitioner_forward.5} parent=0 // pred_region
    _
  $region29: #{partitioner_forward.5} parent=0 // pred_fallthru
    _
  // Predicated region
  $region30: #{partitioner_forward.5} parent=0 // pred_check
    _
  $region31: #{partitioner_forward.5} parent=0 // pred_check_branch
    %30 = sbr.rel (0) target = $region33
  $region32: #{partitioner_forward.5} parent=0 // pred_region
    _
  $region33: #{partitioner_forward.5} parent=0 // pred_fallthru
    _
  %v32 = vld [vmem:[%s0] sm:$0xff]
  %v33 = vld [vmem:[%s0 + $0x8] sm:$0xff]
  %v34 = vld [vmem:[%s0 + $0x10] sm:$0xff]
  %v35 = vld [vmem:[%s0 + $0x18] sm:$0xff]
  %v36 = vld [vmem:[%s0 + $0x20] sm:$0xff]
  %v37 = vld [vmem:[%s0 + $0x28] sm:$0xff]
  %v38 = vld [vmem:[%s0 + $0x30] sm:$0xff]
  %v39 = vld [vmem:[%s0 + $0x38] sm:$0xff]
  %v40 = vld [vmem:[%s0 + $0x40] sm:$0xff]
  %v41 = vld [vmem:[%s0 + $0x48] sm:$0xff]
  %v42 = vld [vmem:[%s0 + $0x50] sm:$0xff]
  %v43 = vld [vmem:[%s0 + $0x58] sm:$0xff]
  %v44 = vld [vmem:[%s0 + $0x60] sm:$0xff]
  %v45 = vld [vmem:[%s0 + $0x68] sm:$0xff]
  %v46 = vld [vmem:[%s0 + $0x70] sm:$0xff]
  %v47 = vld [vmem:[%s0 + $0x78] sm:$0xff]
  %v48 = vpack.c.bf16 %v33, %v32
  %v49 = vpack.c.bf16 %v35, %v34
  %v50 = vpack.c.bf16 %v37, %v36
  %v51 = vpack.c.bf16 %v39, %v38
  %v52 = vpack.c.bf16 %v41, %v40
  %v53 = vpack.c.bf16 %v43, %v42
  %v54 = vpack.c.bf16 %v45, %v44
  %v55 = vpack.c.bf16 %v47, %v46
  %v56 = vld [vmem:[%s1] sm:$0x3]
  %v57 = vld [vmem:[%s2] sm:$0x1]
  %v59 = vlaneseq
  %v60 = vshrl.u32 %v59, 7
  %v61 = vsub.s32 0, %v60
  %v62 = vrot.slane %v57, %v61
  %vm64 = vcmask 31744
  %v66 = vsel %vm64, %v48, 0
  %v69 = vsel %vm64, %v49, 0
  %v72 = vsel %vm64, %v50, 0
  %v75 = vsel %vm64, %v51, 0
  %v78 = vsel %vm64, %v52, 0
  %v81 = vsel %vm64, %v53, 0
  %v84 = vsel %vm64, %v54, 0
  %v87 = vsel %vm64, %v55, 0
  %vm89 = vcmask 1041408
  %v91 = vsel %vm89, %v56, 0
  %93 = vmatprep.subr.bf16.mxu0 0
  %94 = vmatpush1.bf16.msra.mxu0 %v91
  %95 = vmatprep.subr.bf16.mxu0 0
  %96 = vmatpush1.bf16.msra.mxu0 0
  %97 = vmatprep.subr.bf16.mxu0 0
  %98 = vmatpush1.bf16.msra.mxu0 0
  %99 = vmatprep.subr.bf16.mxu0 0
  %100 = vmatpush1.bf16.msra.mxu0 0
  %101 = vmatprep.subr.bf16.mxu0 0
  %102 = vmatpush1.bf16.msra.mxu0 0
  %103 = vmatprep.subr.bf16.mxu0 0
  %104 = vmatpush1.bf16.msra.mxu0 0
  %105 = vmatprep.subr.bf16.mxu0 0
  %106 = vmatpush1.bf16.msra.mxu0 0
  %107 = vmatprep.subr.bf16.mxu0 0
  %108 = vmatpush1.bf16.msra.mxu0 0
  %109 = vmatprep.subr.bf16.mxu0 0
  %110 = vmatpush1.bf16.msra.mxu0 0
  %111 = vmatprep.subr.bf16.mxu0 0
  %112 = vmatpush1.bf16.msra.mxu0 0
  %113 = vmatprep.subr.bf16.mxu0 0
  %114 = vmatpush1.bf16.msra.mxu0 0
  %115 = vmatprep.subr.bf16.mxu0 0
  %116 = vmatpush1.bf16.msra.mxu0 0
  %117 = vmatprep.subr.bf16.mxu0 0
  %118 = vmatpush1.bf16.msra.mxu0 0
  %119 = vmatprep.subr.bf16.mxu0 0
  %120 = vmatpush1.bf16.msra.mxu0 0
  %121 = vmatprep.subr.bf16.mxu0 0
  %122 = vmatpush1.bf16.msra.mxu0 0
  %123 = vmatprep.subr.bf16.mxu0 0
  %124 = vmatpush1.bf16.msra.mxu0 0
  %125 = vmatprep.mubr.bf16.mxu0 0
  %126 = vmatmul.mubr.bf16.gmra.mrb[0].mxu0 %v66
  %v127 = vpop.f32.mrb[0].mxu0
  %v128 = vadd.f32 %v62, %v127
  %v129 = vpop.f32.mrb[0].mxu0
  %v130 = vpop.f32.mrb[0].mxu0
  %v131 = vadd.f32 %v62, %v130
  %v132 = vpop.f32.mrb[0].mxu0
  %133 = vmatprep.mubr.bf16.mxu0 0
  %134 = vmatmul.mubr.bf16.gmra.mrb[0].mxu0 %v69
  %v135 = vpop.f32.mrb[0].mxu0
  %v136 = vadd.f32 %v62, %v135
  %v137 = vpop.f32.mrb[0].mxu0
  %v138 = vpop.f32.mrb[0].mxu0
  %v139 = vadd.f32 %v62, %v138
  %v140 = vpop.f32.mrb[0].mxu0
  %141 = vmatprep.mubr.bf16.mxu0 0
  %142 = vmatmul.mubr.bf16.gmra.mrb[0].mxu0 %v72
  %v143 = vpop.f32.mrb[0].mxu0
  %v144 = vadd.f32 %v62, %v143
  %v145 = vpop.f32.mrb[0].mxu0
  %v146 = vpop.f32.mrb[0].mxu0
  %v147 = vadd.f32 %v62, %v146
  %v148 = vpop.f32.mrb[0].mxu0
  %149 = vmatprep.mubr.bf16.mxu0 0
  %150 = vmatmul.mubr.bf16.gmra.mrb[0].mxu0 %v75
  %v151 = vpop.f32.mrb[0].mxu0
  %v152 = vadd.f32 %v62, %v151
  %v153 = vpop.f32.mrb[0].mxu0
  %v154 = vpop.f32.mrb[0].mxu0
  %v155 = vadd.f32 %v62, %v154
  %v156 = vpop.f32.mrb[0].mxu0
  %157 = vmatprep.mubr.bf16.mxu0 0
  %158 = vmatmul.mubr.bf16.gmra.mrb[0].mxu0 %v78
  %v159 = vpop.f32.mrb[0].mxu0
  %v160 = vadd.f32 %v62, %v159
  %v161 = vpop.f32.mrb[0].mxu0
  %v162 = vpop.f32.mrb[0].mxu0
  %v163 = vadd.f32 %v62, %v162
  %v164 = vpop.f32.mrb[0].mxu0
  %165 = vmatprep.mubr.bf16.mxu0 0
  %166 = vmatmul.mubr.bf16.gmra.mrb[0].mxu0 %v81
  %v167 = vpop.f32.mrb[0].mxu0
  %v168 = vadd.f32 %v62, %v167
  %v169 = vpop.f32.mrb[0].mxu0
  %v170 = vpop.f32.mrb[0].mxu0
  %v171 = vadd.f32 %v62, %v170
  %v172 = vpop.f32.mrb[0].mxu0
  %173 = vmatprep.mubr.bf16.mxu0 0
  %174 = vmatmul.mubr.bf16.gmra.mrb[0].mxu0 %v84
  %v175 = vpop.f32.mrb[0].mxu0
  %v176 = vadd.f32 %v62, %v175
  %v177 = vpop.f32.mrb[0].mxu0
  %v178 = vpop.f32.mrb[0].mxu0
  %v179 = vadd.f32 %v62, %v178
  %v180 = vpop.f32.mrb[0].mxu0
  %181 = vmatprep.mubr.bf16.mxu0 0
  %182 = vmatmul.mubr.bf16.gmra.mrb[0].mxu0 %v87
  %v183 = vpop.f32.mrb[0].mxu0
  %v184 = vadd.f32 %v62, %v183
  %v185 = vpop.f32.mrb[0].mxu0
  %v186 = vpop.f32.mrb[0].mxu0
  %v187 = vadd.f32 %v62, %v186
  %v188 = vpop.f32.mrb[0].mxu0
  %189 = vdwg.mxu0
  %v190 = vld [vmem:[%s3] sm:$0x1]
  %v192 = vlaneseq
  %v193 = vshrl.u32 %v192, 7
  %v194 = vsub.s32 0, %v193
  %v195 = vrot.slane %v190, %v194
  %v197 = vmul.f32 %v32, %v195
  %v198 = vmul.f32 %v33, %v195
  %v199 = vmul.f32 %v34, %v195
  %v200 = vmul.f32 %v35, %v195
  %v201 = vmul.f32 %v36, %v195
  %v202 = vmul.f32 %v37, %v195
  %v203 = vmul.f32 %v38, %v195
  %v204 = vmul.f32 %v39, %v195
  %v205 = vmul.f32 %v40, %v195
  %v206 = vmul.f32 %v41, %v195
  %v207 = vmul.f32 %v42, %v195
  %v208 = vmul.f32 %v43, %v195
  %v209 = vmul.f32 %v44, %v195
  %v210 = vmul.f32 %v45, %v195
  %v211 = vmul.f32 %v46, %v195
  %v212 = vmul.f32 %v47, %v195
  %v213 = vsel %vm64, %v197, 0.0
  %214 = vadd.xlane.f32.xlu0 %v213
  %v215 = vpop.xlane.xlu0 %214
  %v216 = vsel %vm64, %v198, 0.0
  %217 = vadd.xlane.f32.xlu0 %v216
  %v218 = vpop.xlane.xlu0 %217
  %v219 = vsel %vm64, %v199, 0.0
  %220 = vadd.xlane.f32.xlu0 %v219
  %v221 = vpop.xlane.xlu0 %220
  %v222 = vsel %vm64, %v200, 0.0
  %223 = vadd.xlane.f32.xlu0 %v222
  %v224 = vpop.xlane.xlu0 %223
  %v225 = vsel %vm64, %v201, 0.0
  %226 = vadd.xlane.f32.xlu0 %v225
  %v227 = vpop.xlane.xlu0 %226
  %v228 = vsel %vm64, %v202, 0.0
  %229 = vadd.xlane.f32.xlu0 %v228
  %v230 = vpop.xlane.xlu0 %229
  %v231 = vsel %vm64, %v203, 0.0
  %232 = vadd.xlane.f32.xlu0 %v231
  %v233 = vpop.xlane.xlu0 %232
  %v234 = vsel %vm64, %v204, 0.0
  %235 = vadd.xlane.f32.xlu0 %v234
  %v236 = vpop.xlane.xlu0 %235
  %v237 = vsel %vm64, %v205, 0.0
  %238 = vadd.xlane.f32.xlu0 %v237
  %v239 = vpop.xlane.xlu0 %238
  %v240 = vsel %vm64, %v206, 0.0
  %241 = vadd.xlane.f32.xlu0 %v240
  %v242 = vpop.xlane.xlu0 %241
  %v243 = vsel %vm64, %v207, 0.0
  %244 = vadd.xlane.f32.xlu0 %v243
  %v245 = vpop.xlane.xlu0 %244
  %v246 = vsel %vm64, %v208, 0.0
  %247 = vadd.xlane.f32.xlu0 %v246
  %v248 = vpop.xlane.xlu0 %247
  %v249 = vsel %vm64, %v209, 0.0
  %250 = vadd.xlane.f32.xlu0 %v249
  %v251 = vpop.xlane.xlu0 %250
  %v252 = vsel %vm64, %v210, 0.0
  %253 = vadd.xlane.f32.xlu0 %v252
  %v254 = vpop.xlane.xlu0 %253
  %v255 = vsel %vm64, %v211, 0.0
  %256 = vadd.xlane.f32.xlu0 %v255
  %v257 = vpop.xlane.xlu0 %256
  %v258 = vsel %vm64, %v212, 0.0
  %259 = vadd.xlane.f32.xlu0 %v258
  %v260 = vpop.xlane.xlu0 %259
  %v261 = vld [vmem:[#allocation2] sm:$0x1]
  %v263 = vlaneseq
  %v264 = vshrl.u32 %v263, 7
  %v265 = vsub.s32 0, %v264
  %v266 = vrot.slane %v261, %v265
  %v268 = vadd.f32 %v215, %v266
  %v269 = vadd.f32 %v218, %v266
  %v270 = vadd.f32 %v221, %v266
  %v271 = vadd.f32 %v224, %v266
  %v272 = vadd.f32 %v227, %v266
  %v273 = vadd.f32 %v230, %v266
  %v274 = vadd.f32 %v233, %v266
  %v275 = vadd.f32 %v236, %v266
  %v276 = vadd.f32 %v239, %v266
  %v277 = vadd.f32 %v242, %v266
  %v278 = vadd.f32 %v245, %v266
  %v279 = vadd.f32 %v248, %v266
  %v280 = vadd.f32 %v251, %v266
  %v281 = vadd.f32 %v254, %v266
  %v282 = vadd.f32 %v257, %v266
  %v283 = vadd.f32 %v260, %v266
  %v284 = vld [vmem:[%s5] sm:$0x1]
  %v286 = vlaneseq
  %v287 = vshrl.u32 %v286, 7
  %v288 = vsub.s32 0, %v287
  %v289 = vrot.slane %v284, %v288
  %v291 = vmul.f32 %v289, %v128
  %v292 = vmul.f32 %v289, %v131
  %v293 = vmul.f32 %v289, %v136
  %v294 = vmul.f32 %v289, %v139
  %v295 = vmul.f32 %v289, %v144
  %v296 = vmul.f32 %v289, %v147
  %v297 = vmul.f32 %v289, %v152
  %v298 = vmul.f32 %v289, %v155
  %v299 = vmul.f32 %v289, %v160
  %v300 = vmul.f32 %v289, %v163
  %v301 = vmul.f32 %v289, %v168
  %v302 = vmul.f32 %v289, %v171
  %v303 = vmul.f32 %v289, %v176
  %v304 = vmul.f32 %v289, %v179
  %v305 = vmul.f32 %v289, %v184
  %v306 = vmul.f32 %v289, %v187
  %308 = vset.pattern.permute.xlu0 0
  %309 = vperm.xlu0 %308, %v268
  %v310 = vpop.permute.xlu0 %309
  %313 = vset.pattern.permute.xlu0 0
  %314 = vperm.xlu0 %313, %v269
  %v315 = vpop.permute.xlu0 %314
  %318 = vset.pattern.permute.xlu0 0
  %319 = vperm.xlu0 %318, %v270
  %v320 = vpop.permute.xlu0 %319
  %323 = vset.pattern.permute.xlu0 0
  %324 = vperm.xlu0 %323, %v271
  %v325 = vpop.permute.xlu0 %324
  %328 = vset.pattern.permute.xlu0 0
  %329 = vperm.xlu0 %328, %v272
  %v330 = vpop.permute.xlu0 %329
  %333 = vset.pattern.permute.xlu0 0
  %334 = vperm.xlu0 %333, %v273
  %v335 = vpop.permute.xlu0 %334
  %338 = vset.pattern.permute.xlu0 0
  %339 = vperm.xlu0 %338, %v274
  %v340 = vpop.permute.xlu0 %339
  %343 = vset.pattern.permute.xlu0 0
  %344 = vperm.xlu0 %343, %v275
  %v345 = vpop.permute.xlu0 %344
  %348 = vset.pattern.permute.xlu0 0
  %349 = vperm.xlu0 %348, %v276
  %v350 = vpop.permute.xlu0 %349
  %353 = vset.pattern.permute.xlu0 0
  %354 = vperm.xlu0 %353, %v277
  %v355 = vpop.permute.xlu0 %354
  %358 = vset.pattern.permute.xlu0 0
  %359 = vperm.xlu0 %358, %v278
  %v360 = vpop.permute.xlu0 %359
  %363 = vset.pattern.permute.xlu0 0
  %364 = vperm.xlu0 %363, %v279
  %v365 = vpop.permute.xlu0 %364
  %368 = vset.pattern.permute.xlu0 0
  %369 = vperm.xlu0 %368, %v280
  %v370 = vpop.permute.xlu0 %369
  %373 = vset.pattern.permute.xlu0 0
  %374 = vperm.xlu0 %373, %v281
  %v375 = vpop.permute.xlu0 %374
  %378 = vset.pattern.permute.xlu0 0
  %379 = vperm.xlu0 %378, %v282
  %v380 = vpop.permute.xlu0 %379
  %383 = vset.pattern.permute.xlu0 0
  %384 = vperm.xlu0 %383, %v283
  %v385 = vpop.permute.xlu0 %384
  %v387 = vmul.f32 %v291, %v310
  %v388 = vmul.f32 %v292, %v315
  %v389 = vmul.f32 %v293, %v320
  %v390 = vmul.f32 %v294, %v325
  %v391 = vmul.f32 %v295, %v330
  %v392 = vmul.f32 %v296, %v335
  %v393 = vmul.f32 %v297, %v340
  %v394 = vmul.f32 %v298, %v345
  %v395 = vmul.f32 %v299, %v350
  %v396 = vmul.f32 %v300, %v355
  %v397 = vmul.f32 %v301, %v360
  %v398 = vmul.f32 %v302, %v365
  %v399 = vmul.f32 %v303, %v370
  %v400 = vmul.f32 %v304, %v375
  %v401 = vmul.f32 %v305, %v380
  %v402 = vmul.f32 %v306, %v385
  %vm403 = vcmask 261120
  %v404 = vsel %vm403, %v387, 0.0
  %405 = vadd.xlane.f32.xlu0 %v404
  %v406 = vpop.xlane.xlu0 %405
  %v407 = vsel %vm403, %v388, 0.0
  %408 = vadd.xlane.f32.xlu0 %v407
  %v409 = vpop.xlane.xlu0 %408
  %v410 = vsel %vm403, %v389, 0.0
  %411 = vadd.xlane.f32.xlu0 %v410
  %v412 = vpop.xlane.xlu0 %411
  %v413 = vsel %vm403, %v390, 0.0
  %414 = vadd.xlane.f32.xlu0 %v413
  %v415 = vpop.xlane.xlu0 %414
  %v416 = vsel %vm403, %v391, 0.0
  %417 = vadd.xlane.f32.xlu0 %v416
  %v418 = vpop.xlane.xlu0 %417
  %v419 = vsel %vm403, %v392, 0.0
  %420 = vadd.xlane.f32.xlu0 %v419
  %v421 = vpop.xlane.xlu0 %420
  %v422 = vsel %vm403, %v393, 0.0
  %423 = vadd.xlane.f32.xlu0 %v422
  %v424 = vpop.xlane.xlu0 %423
  %v425 = vsel %vm403, %v394, 0.0
  %426 = vadd.xlane.f32.xlu0 %v425
  %v427 = vpop.xlane.xlu0 %426
  %v428 = vsel %vm403, %v395, 0.0
  %429 = vadd.xlane.f32.xlu0 %v428
  %v430 = vpop.xlane.xlu0 %429
  %v431 = vsel %vm403, %v396, 0.0
  %432 = vadd.xlane.f32.xlu0 %v431
  %v433 = vpop.xlane.xlu0 %432
  %v434 = vsel %vm403, %v397, 0.0
  %435 = vadd.xlane.f32.xlu0 %v434
  %v436 = vpop.xlane.xlu0 %435
  %v437 = vsel %vm403, %v398, 0.0
  %438 = vadd.xlane.f32.xlu0 %v437
  %v439 = vpop.xlane.xlu0 %438
  %v440 = vsel %vm403, %v399, 0.0
  %441 = vadd.xlane.f32.xlu0 %v440
  %v442 = vpop.xlane.xlu0 %441
  %v443 = vsel %vm403, %v400, 0.0
  %444 = vadd.xlane.f32.xlu0 %v443
  %v445 = vpop.xlane.xlu0 %444
  %v446 = vsel %vm403, %v401, 0.0
  %447 = vadd.xlane.f32.xlu0 %v446
  %v448 = vpop.xlane.xlu0 %447
  %v449 = vsel %vm403, %v402, 0.0
  %450 = vadd.xlane.f32.xlu0 %v449
  %v451 = vpop.xlane.xlu0 %450
  %v452 = vrcp.pop 32.0
  %v453 = vmul.f32 %v406, %v452
  %v454 = vmul.f32 %v409, %v452
  %v455 = vmul.f32 %v412, %v452
  %v456 = vmul.f32 %v415, %v452
  %v457 = vmul.f32 %v418, %v452
  %v458 = vmul.f32 %v421, %v452
  %v459 = vmul.f32 %v424, %v452
  %v460 = vmul.f32 %v427, %v452
  %v461 = vmul.f32 %v430, %v452
  %v462 = vmul.f32 %v433, %v452
  %v463 = vmul.f32 %v436, %v452
  %v464 = vmul.f32 %v439, %v452
  %v465 = vmul.f32 %v442, %v452
  %v466 = vmul.f32 %v445, %v452
  %v467 = vmul.f32 %v448, %v452
  %v468 = vmul.f32 %v451, %v452
  %v469 = vsub.f32 %v387, %v453
  %v470 = vsub.f32 %v388, %v454
  %v471 = vsub.f32 %v389, %v455
  %v472 = vsub.f32 %v390, %v456
  %v473 = vsub.f32 %v391, %v457
  %v474 = vsub.f32 %v392, %v458
  %v475 = vsub.f32 %v393, %v459
  %v476 = vsub.f32 %v394, %v460
  %v477 = vsub.f32 %v395, %v461
  %v478 = vsub.f32 %v396, %v462
  %v479 = vsub.f32 %v397, %v463
  %v480 = vsub.f32 %v398, %v464
  %v481 = vsub.f32 %v399, %v465
  %v482 = vsub.f32 %v400, %v466
  %v483 = vsub.f32 %v401, %v467
  %v484 = vsub.f32 %v402, %v468
  %v485 = vmul.f32 %v469, %v469
  %v486 = vmul.f32 %v470, %v470
  %v487 = vmul.f32 %v471, %v471
  %v488 = vmul.f32 %v472, %v472
  %v489 = vmul.f32 %v473, %v473
  %v490 = vmul.f32 %v474, %v474
  %v491 = vmul.f32 %v475, %v475
  %v492 = vmul.f32 %v476, %v476
  %v493 = vmul.f32 %v477, %v477
  %v494 = vmul.f32 %v478, %v478
  %v495 = vmul.f32 %v479, %v479
  %v496 = vmul.f32 %v480, %v480
  %v497 = vmul.f32 %v481, %v481
  %v498 = vmul.f32 %v482, %v482
  %v499 = vmul.f32 %v483, %v483
  %v500 = vmul.f32 %v484, %v484
  %v501 = vsel %vm403, %v485, 0.0
  %502 = vadd.xlane.f32.xlu0 %v501
  %v503 = vpop.xlane.xlu0 %502
  %v504 = vsel %vm403, %v486, 0.0
  %505 = vadd.xlane.f32.xlu0 %v504
  %v506 = vpop.xlane.xlu0 %505
  %v507 = vsel %vm403, %v487, 0.0
  %508 = vadd.xlane.f32.xlu0 %v507
  %v509 = vpop.xlane.xlu0 %508
  %v510 = vsel %vm403, %v488, 0.0
  %511 = vadd.xlane.f32.xlu0 %v510
  %v512 = vpop.xlane.xlu0 %511
  %v513 = vsel %vm403, %v489, 0.0
  %514 = vadd.xlane.f32.xlu0 %v513
  %v515 = vpop.xlane.xlu0 %514
  %v516 = vsel %vm403, %v490, 0.0
  %517 = vadd.xlane.f32.xlu0 %v516
  %v518 = vpop.xlane.xlu0 %517
  %v519 = vsel %vm403, %v491, 0.0
  %520 = vadd.xlane.f32.xlu0 %v519
  %v521 = vpop.xlane.xlu0 %520
  %v522 = vsel %vm403, %v492, 0.0
  %523 = vadd.xlane.f32.xlu0 %v522
  %v524 = vpop.xlane.xlu0 %523
  %v525 = vsel %vm403, %v493, 0.0
  %526 = vadd.xlane.f32.xlu0 %v525
  %v527 = vpop.xlane.xlu0 %526
  %v528 = vsel %vm403, %v494, 0.0
  %529 = vadd.xlane.f32.xlu0 %v528
  %v530 = vpop.xlane.xlu0 %529
  %v531 = vsel %vm403, %v495, 0.0
  %532 = vadd.xlane.f32.xlu0 %v531
  %v533 = vpop.xlane.xlu0 %532
  %v534 = vsel %vm403, %v496, 0.0
  %535 = vadd.xlane.f32.xlu0 %v534
  %v536 = vpop.xlane.xlu0 %535
  %v537 = vsel %vm403, %v497, 0.0
  %538 = vadd.xlane.f32.xlu0 %v537
  %v539 = vpop.xlane.xlu0 %538
  %v540 = vsel %vm403, %v498, 0.0
  %541 = vadd.xlane.f32.xlu0 %v540
  %v542 = vpop.xlane.xlu0 %541
  %v543 = vsel %vm403, %v499, 0.0
  %544 = vadd.xlane.f32.xlu0 %v543
  %v545 = vpop.xlane.xlu0 %544
  %v546 = vsel %vm403, %v500, 0.0
  %547 = vadd.xlane.f32.xlu0 %v546
  %v548 = vpop.xlane.xlu0 %547
  %v549 = vmul.f32 %v503, %v452
  %v550 = vmul.f32 %v506, %v452
  %v551 = vmul.f32 %v509, %v452
  %v552 = vmul.f32 %v512, %v452
  %v553 = vmul.f32 %v515, %v452
  %v554 = vmul.f32 %v518, %v452
  %v555 = vmul.f32 %v521, %v452
  %v556 = vmul.f32 %v524, %v452
  %v557 = vmul.f32 %v527, %v452
  %v558 = vmul.f32 %v530, %v452
  %v559 = vmul.f32 %v533, %v452
  %v560 = vmul.f32 %v536, %v452
  %v561 = vmul.f32 %v539, %v452
  %v562 = vmul.f32 %v542, %v452
  %v563 = vmul.f32 %v545, %v452
  %v564 = vmul.f32 %v548, %v452
  %v565 = vadd.f32 %v549, 1e-05
  %v566 = vadd.f32 %v550, 1e-05
  %v567 = vadd.f32 %v551, 1e-05
  %v568 = vadd.f32 %v552, 1e-05
  %v569 = vadd.f32 %v553, 1e-05
  %v570 = vadd.f32 %v554, 1e-05
  %v571 = vadd.f32 %v555, 1e-05
  %v572 = vadd.f32 %v556, 1e-05
  %v573 = vadd.f32 %v557, 1e-05
  %v574 = vadd.f32 %v558, 1e-05
  %v575 = vadd.f32 %v559, 1e-05
  %v576 = vadd.f32 %v560, 1e-05
  %v577 = vadd.f32 %v561, 1e-05
  %v578 = vadd.f32 %v562, 1e-05
  %v579 = vadd.f32 %v563, 1e-05
  %v580 = vadd.f32 %v564, 1e-05
  %v581 = vrsqrt.pop %v565
  %v582 = vrsqrt.pop %v566
  %v583 = vrsqrt.pop %v567
  %v584 = vrsqrt.pop %v568
  %v585 = vrsqrt.pop %v569
  %v586 = vrsqrt.pop %v570
  %v587 = vrsqrt.pop %v571
  %v588 = vrsqrt.pop %v572
  %v589 = vrsqrt.pop %v573
  %v590 = vrsqrt.pop %v574
  %v591 = vrsqrt.pop %v575
  %v592 = vrsqrt.pop %v576
  %v593 = vrsqrt.pop %v577
  %v594 = vrsqrt.pop %v578
  %v595 = vrsqrt.pop %v579
  %v596 = vrsqrt.pop %v580
  %v597 = vmul.f32 %v469, %v581
  %v598 = vmul.f32 %v470, %v582
  %v599 = vmul.f32 %v471, %v583
  %v600 = vmul.f32 %v472, %v584
  %v601 = vmul.f32 %v473, %v585
  %v602 = vmul.f32 %v474, %v586
  %v603 = vmul.f32 %v475, %v587
  %v604 = vmul.f32 %v476, %v588
  %v605 = vmul.f32 %v477, %v589
  %v606 = vmul.f32 %v478, %v590
  %v607 = vmul.f32 %v479, %v591
  %v608 = vmul.f32 %v480, %v592
  %v609 = vmul.f32 %v481, %v593
  %v610 = vmul.f32 %v482, %v594
  %v611 = vmul.f32 %v483, %v595
  %v612 = vmul.f32 %v484, %v596
  %v613 = vld [vmem:[%s6] sm:$0x1]
  %v615 = vlaneseq
  %v616 = vshrl.u32 %v615, 7
  %v617 = vsub.s32 0, %v616
  %v618 = vrot.slane %v613, %v617
  %v620 = vmul.f32 %v597, %v618
  %v621 = vmul.f32 %v598, %v618
  %v622 = vmul.f32 %v599, %v618
  %v623 = vmul.f32 %v600, %v618
  %v624 = vmul.f32 %v601, %v618
  %v625 = vmul.f32 %v602, %v618
  %v626 = vmul.f32 %v603, %v618
  %v627 = vmul.f32 %v604, %v618
  %v628 = vmul.f32 %v605, %v618
  %v629 = vmul.f32 %v606, %v618
  %v630 = vmul.f32 %v607, %v618
  %v631 = vmul.f32 %v608, %v618
  %v632 = vmul.f32 %v609, %v618
  %v633 = vmul.f32 %v610, %v618
  %v634 = vmul.f32 %v611, %v618
  %v635 = vmul.f32 %v612, %v618
  %v636 = vld [vmem:[%s7] sm:$0x1]
  %v638 = vlaneseq
  %v639 = vshrl.u32 %v638, 7
  %v640 = vsub.s32 0, %v639
  %v641 = vrot.slane %v636, %v640
  %v643 = vadd.f32 %v620, %v641
  %v644 = vadd.f32 %v621, %v641
  %v645 = vadd.f32 %v622, %v641
  %v646 = vadd.f32 %v623, %v641
  %v647 = vadd.f32 %v624, %v641
  %v648 = vadd.f32 %v625, %v641
  %v649 = vadd.f32 %v626, %v641
  %v650 = vadd.f32 %v627, %v641
  %v651 = vadd.f32 %v628, %v641
  %v652 = vadd.f32 %v629, %v641
  %v653 = vadd.f32 %v630, %v641
  %v654 = vadd.f32 %v631, %v641
  %v655 = vadd.f32 %v632, %v641
  %v656 = vadd.f32 %v633, %v641
  %v657 = vadd.f32 %v634, %v641
  %v658 = vadd.f32 %v635, %v641
  %659 = vst.msk [vmem:[%s8] sm:$0xff] %vm403, %v643
  %660 = vst.msk [vmem:[%s8 + $0x8] sm:$0xff] %vm403, %v644
  %661 = vst.msk [vmem:[%s8 + $0x10] sm:$0xff] %vm403, %v645
  %662 = vst.msk [vmem:[%s8 + $0x18] sm:$0xff] %vm403, %v646
  %663 = vst.msk [vmem:[%s8 + $0x20] sm:$0xff] %vm403, %v647
  %664 = vst.msk [vmem:[%s8 + $0x28] sm:$0xff] %vm403, %v648
  %665 = vst.msk [vmem:[%s8 + $0x30] sm:$0xff] %vm403, %v649
  %666 = vst.msk [vmem:[%s8 + $0x38] sm:$0xff] %vm403, %v650
  %667 = vst.msk [vmem:[%s8 + $0x40] sm:$0xff] %vm403, %v651
  %668 = vst.msk [vmem:[%s8 + $0x48] sm:$0xff] %vm403, %v652
  %669 = vst.msk [vmem:[%s8 + $0x50] sm:$0xff] %vm403, %v653
  %670 = vst.msk [vmem:[%s8 + $0x58] sm:$0xff] %vm403, %v654
  %671 = vst.msk [vmem:[%s8 + $0x60] sm:$0xff] %vm403, %v655
  %672 = vst.msk [vmem:[%s8 + $0x68] sm:$0xff] %vm403, %v656
  %673 = vst.msk [vmem:[%s8 + $0x70] sm:$0xff] %vm403, %v657
  %674 = vst.msk [vmem:[%s8 + $0x78] sm:$0xff] %vm403, %v658
  // Predicated region
  $region34: #{partitioner_forward.5} parent=0 // pred_check
    _
  $region35: #{partitioner_forward.5} parent=0 // pred_check_branch
    %676 = sbr.rel (0) target = $region37
  $region36: #{partitioner_forward.5} parent=0 // pred_region
    _
  $region37: #{partitioner_forward.5} parent=0 // pred_fallthru
    _
  // Predicated region
  $region38: #{partitioner_forward.5} parent=0 // pred_check
    _
  $region39: #{partitioner_forward.5} parent=0 // pred_check_branch
    %678 = sbr.rel (0) target = $region41
  $region40: #{partitioner_forward.5} parent=0 // pred_region
    _
  $region41: #{partitioner_forward.5} parent=0 // pred_fallthru
    _

// kernel: partitioner_forward.7
$region0: #{partitioner_forward.7}
  #allocation0 [shape = 'u32[]', space=smem, size = 0x4, offset = 0x4, fixed_abs, tag = 'smem constant byte address 0x4 - core index']
  #allocation1 [shape = 'u32[144,128]{1,0:T(1,128)}', space=vmem, size = 0x12000, scoped, tag = 'internal scratch']
  %s0 = inlined_call_operand.vmem [shape: f32[2,4,32], index: 0, kind: input, shape index: {}]
  %s1 = inlined_call_operand.vmem [shape: f32[1,32], index: 1, kind: input, shape index: {}]
  %s2 = inlined_call_operand.vmem [shape: f32[1,32], index: 2, kind: input, shape index: {}]
  %s3 = inlined_call_operand.vmem [shape: bf16[32,16], index: 3, kind: input, shape index: {}]
  %s4 = inlined_call_operand.vmem [shape: f32[1,16], index: 4, kind: input, shape index: {}]
  %s5 = inlined_call_operand.vmem [shape: bf16[32,32], index: 5, kind: input, shape index: {}]
  %s6 = inlined_call_operand.vmem [shape: f32[1,32], index: 6, kind: input, shape index: {}]
  %s7 = inlined_call_operand.vmem [shape: bf16[16,32], index: 7, kind: input, shape index: {}]
  %s8 = inlined_call_operand.vmem [shape: f32[1,32], index: 8, kind: input, shape index: {}]
  %s9 = inlined_call_operand.vmem [shape: f32[2,4,32], index: 9, kind: output, shape index: {}]
  %s10 = sld [smem:[#allocation0]]
  $region69: #{partitioner_forward.7} parent=0
    _
  %s12 = ssub.s32 1, %s10
  %s13 = scalar_select 0, %s12, %s10
  loop: start=0, step=1, limit=4
  $region2: #{partitioner_forward.7} parent=0 // loop_pre_header
    _
  $region3: #{partitioner_forward.7} parent=0 // loop_header
    %s15 = sphi 0, %s19
    %p16 = scmp.ge.s32.totalorder %s15, 4
    %s22 = sphi 0, %s34
    %s23 = sphi 0, %s30
    %s24 = sphi 0, %s22
    %s25 = sphi 0, %s23
    %s26 = sphi 0, %s24
    %s27 = sphi 0, %s25
    %s37 = sphi 0, %s39
    %s40 = sphi 0, %s37
    %s41 = sphi 0, %s40
    %s57 = sphi 0, %s41
    %s61 = sphi 0, %s61
    %s63 = sphi 0, %s61
    %s64 = sphi 0, %s63
    %s78 = sphi 0, %s64
    %s82 = sphi 0, %s82
    %s84 = sphi 0, %s82
    %s85 = sphi 0, %s84
    %s99 = sphi 0, %s85
    %s103 = sphi 0, %s103
    %s105 = sphi 0, %s103
    %s106 = sphi 0, %s105
    %s120 = sphi 0, %s106
    %s124 = sphi 0, %s124
    %s126 = sphi 0, %s124
    %s127 = sphi 0, %s126
    %s141 = sphi 0, %s127
    %s145 = sphi 0, %s145
    %s147 = sphi 0, %s145
    %s148 = sphi 0, %s147
    %s162 = sphi 0, %s148
    %s166 = sphi 0, %s166
    %s168 = sphi 0, %s166
    %s169 = sphi 0, %s168
    %s183 = sphi 0, %s169
    %s187 = sphi 0, %s187
    %s189 = sphi 0, %s187
    %s190 = sphi 0, %s189
    %s204 = sphi 0, %s190
    %s208 = sphi 0, %s208
    %s210 = sphi 0, %s208
    %s211 = sphi 0, %s210
    %s225 = sphi 0, %s211
    %s233 = sphi 0, %s235
    %s236 = sphi 0, %s233
    %s237 = sphi 0, %s236
    %s253 = sphi 0, %s237
  $region4: #{partitioner_forward.7} parent=0 // loop_header_branch
    %18 = sbr.rel (%p16) target = $region8
  $region5: #{partitioner_forward.7} parent=0 // loop_body
    %s20 = ssub.s32 %s15, 1
    %s21 = ssub.s32 %s15, 2
    %s28 = sadd.s32 1, %s23
    %p29 = scmp.ge.s32.totalorder %s28, 1
    %s30 = scalar_select %p29, 0, %s28
    %s31 = sadd.s32 1, %s22
    %s32 = scalar_select %p29, %s31, %s22
    %p33 = scmp.ge.s32.totalorder %s32, 2
    %s34 = scalar_select %p33, 0, %s32
    %s35 = ssub.s32 %s22, %s34
    %p36 = scmp.eq.s32.totalorder %s35, 0
    %s38 = sadd.s32 %s37, 1
    %s39 = scalar_select %p36, %s37, %s38
    %p42 = pneg %p36
    %p43 = scmp.eq.s32.totalorder %s15, 1
    %p44 = por %p42, %p43
    %p45 = scmp.ne.s32.totalorder %s37, %s40
    %p46 = scmp.eq.s32.totalorder %s15, 0
    %p47 = por %p45, %p46
    %p48 = scmp.ne.s32.totalorder %s37, %s40
    %p49 = scmp.eq.s32.totalorder %s20, 1
    %p50 = por %p48, %p49
    %p51 = scmp.ne.s32.totalorder %s40, %s41
    %p52 = scmp.eq.s32.totalorder %s20, 0
    %p53 = por %p51, %p52
    %p54 = scmp.ne.s32.totalorder %s40, %s41
    %p55 = scmp.eq.s32.totalorder %s21, 1
    %p56 = por %p54, %p55
    %p58 = scmp.ne.s32.totalorder %s41, %s57
    %p59 = scmp.eq.s32.totalorder %s21, 0
    %p60 = por %p58, %p59
    %s62 = sadd.s32 %s61, 1
    %p65 = scmp.eq.s32.totalorder %s15, 1
    %p66 = scmp.ne.s32.totalorder %s61, %s63
    %p67 = scmp.eq.s32.totalorder %s15, 0
    %p68 = por %p66, %p67
    %p69 = scmp.ne.s32.totalorder %s61, %s63
    %p70 = scmp.eq.s32.totalorder %s20, 1
    %p71 = por %p69, %p70
    %p72 = scmp.ne.s32.totalorder %s63, %s64
    %p73 = scmp.eq.s32.totalorder %s20, 0
    %p74 = por %p72, %p73
    %p75 = scmp.ne.s32.totalorder %s63, %s64
    %p76 = scmp.eq.s32.totalorder %s21, 1
    %p77 = por %p75, %p76
    %p79 = scmp.ne.s32.totalorder %s64, %s78
    %p80 = scmp.eq.s32.totalorder %s21, 0
    %p81 = por %p79, %p80
    %s83 = sadd.s32 %s82, 1
    %p86 = scmp.eq.s32.totalorder %s15, 1
    %p87 = scmp.ne.s32.totalorder %s82, %s84
    %p88 = scmp.eq.s32.totalorder %s15, 0
    %p89 = por %p87, %p88
    %p90 = scmp.ne.s32.totalorder %s82, %s84
    %p91 = scmp.eq.s32.totalorder %s20, 1
    %p92 = por %p90, %p91
    %p93 = scmp.ne.s32.totalorder %s84, %s85
    %p94 = scmp.eq.s32.totalorder %s20, 0
    %p95 = por %p93, %p94
    %p96 = scmp.ne.s32.totalorder %s84, %s85
    %p97 = scmp.eq.s32.totalorder %s21, 1
    %p98 = por %p96, %p97
    %p100 = scmp.ne.s32.totalorder %s85, %s99
    %p101 = scmp.eq.s32.totalorder %s21, 0
    %p102 = por %p100, %p101
    %s104 = sadd.s32 %s103, 1
    %p107 = scmp.eq.s32.totalorder %s15, 1
    %p108 = scmp.ne.s32.totalorder %s103, %s105
    %p109 = scmp.eq.s32.totalorder %s15, 0
    %p110 = por %p108, %p109
    %p111 = scmp.ne.s32.totalorder %s103, %s105
    %p112 = scmp.eq.s32.totalorder %s20, 1
    %p113 = por %p111, %p112
    %p114 = scmp.ne.s32.totalorder %s105, %s106
    %p115 = scmp.eq.s32.totalorder %s20, 0
    %p116 = por %p114, %p115
    %p117 = scmp.ne.s32.totalorder %s105, %s106
    %p118 = scmp.eq.s32.totalorder %s21, 1
    %p119 = por %p117, %p118
    %p121 = scmp.ne.s32.totalorder %s106, %s120
    %p122 = scmp.eq.s32.totalorder %s21, 0
    %p123 = por %p121, %p122
    %s125 = sadd.s32 %s124, 1
    %p128 = scmp.eq.s32.totalorder %s15, 1
    %p129 = scmp.ne.s32.totalorder %s124, %s126
    %p130 = scmp.eq.s32.totalorder %s15, 0
    %p131 = por %p129, %p130
    %p132 = scmp.ne.s32.totalorder %s124, %s126
    %p133 = scmp.eq.s32.totalorder %s20, 1
    %p134 = por %p132, %p133
    %p135 = scmp.ne.s32.totalorder %s126, %s127
    %p136 = scmp.eq.s32.totalorder %s20, 0
    %p137 = por %p135, %p136
    %p138 = scmp.ne.s32.totalorder %s126, %s127
    %p139 = scmp.eq.s32.totalorder %s21, 1
    %p140 = por %p138, %p139
    %p142 = scmp.ne.s32.totalorder %s127, %s141
    %p143 = scmp.eq.s32.totalorder %s21, 0
    %p144 = por %p142, %p143
    %s146 = sadd.s32 %s145, 1
    %p149 = scmp.eq.s32.totalorder %s15, 1
    %p150 = scmp.ne.s32.totalorder %s145, %s147
    %p151 = scmp.eq.s32.totalorder %s15, 0
    %p152 = por %p150, %p151
    %p153 = scmp.ne.s32.totalorder %s145, %s147
    %p154 = scmp.eq.s32.totalorder %s20, 1
    %p155 = por %p153, %p154
    %p156 = scmp.ne.s32.totalorder %s147, %s148
    %p157 = scmp.eq.s32.totalorder %s20, 0
    %p158 = por %p156, %p157
    %p159 = scmp.ne.s32.totalorder %s147, %s148
    %p160 = scmp.eq.s32.totalorder %s21, 1
    %p161 = por %p159, %p160
    %p163 = scmp.ne.s32.totalorder %s148, %s162
    %p164 = scmp.eq.s32.totalorder %s21, 0
    %p165 = por %p163, %p164
    %s167 = sadd.s32 %s166, 1
    %p170 = scmp.eq.s32.totalorder %s15, 1
    %p171 = scmp.ne.s32.totalorder %s166, %s168
    %p172 = scmp.eq.s32.totalorder %s15, 0
    %p173 = por %p171, %p172
    %p174 = scmp.ne.s32.totalorder %s166, %s168
    %p175 = scmp.eq.s32.totalorder %s20, 1
    %p176 = por %p174, %p175
    %p177 = scmp.ne.s32.totalorder %s168, %s169
    %p178 = scmp.eq.s32.totalorder %s20, 0
    %p179 = por %p177, %p178
    %p180 = scmp.ne.s32.totalorder %s168, %s169
    %p181 = scmp.eq.s32.totalorder %s21, 1
    %p182 = por %p180, %p181
    %p184 = scmp.ne.s32.totalorder %s169, %s183
    %p185 = scmp.eq.s32.totalorder %s21, 0
    %p186 = por %p184, %p185
    %s188 = sadd.s32 %s187, 1
    %p191 = scmp.eq.s32.totalorder %s15, 1
    %p192 = scmp.ne.s32.totalorder %s187, %s189
    %p193 = scmp.eq.s32.totalorder %s15, 0
    %p194 = por %p192, %p193
    %p195 = scmp.ne.s32.totalorder %s187, %s189
    %p196 = scmp.eq.s32.totalorder %s20, 1
    %p197 = por %p195, %p196
    %p198 = scmp.ne.s32.totalorder %s189, %s190
    %p199 = scmp.eq.s32.totalorder %s20, 0
    %p200 = por %p198, %p199
    %p201 = scmp.ne.s32.totalorder %s189, %s190
    %p202 = scmp.eq.s32.totalorder %s21, 1
    %p203 = por %p201, %p202
    %p205 = scmp.ne.s32.totalorder %s190, %s204
    %p206 = scmp.eq.s32.totalorder %s21, 0
    %p207 = por %p205, %p206
    %s209 = sadd.s32 %s208, 1
    %p212 = scmp.eq.s32.totalorder %s15, 1
    %p213 = scmp.ne.s32.totalorder %s208, %s210
    %p214 = scmp.eq.s32.totalorder %s15, 0
    %p215 = por %p213, %p214
    %p216 = scmp.ne.s32.totalorder %s208, %s210
    %p217 = scmp.eq.s32.totalorder %s20, 1
    %p218 = por %p216, %p217
    %p219 = scmp.ne.s32.totalorder %s210, %s211
    %p220 = scmp.eq.s32.totalorder %s20, 0
    %p221 = por %p219, %p220
    %p222 = scmp.ne.s32.totalorder %s210, %s211
    %p223 = scmp.eq.s32.totalorder %s21, 1
    %p224 = por %p222, %p223
    %p226 = scmp.ne.s32.totalorder %s211, %s225
    %p227 = scmp.eq.s32.totalorder %s21, 0
    %p228 = por %p226, %p227
    %s229 = ssub.s32 %s22, %s34
    %s230 = ssub.s32 %s23, %s30
    %s231 = sor.u32 %s229, %s230
    %p232 = scmp.eq.s32.totalorder %s231, 0
    %s234 = sadd.s32 %s233, 1
    %s235 = scalar_select %p232, %s233, %s234
    %p238 = pneg %p232
    %p239 = scmp.eq.s32.totalorder %s15, 1
    %p240 = por %p238, %p239
    %p241 = scmp.ne.s32.totalorder %s233, %s236
    %p242 = scmp.eq.s32.totalorder %s15, 0
    %p243 = por %p241, %p242
    %p244 = scmp.ne.s32.totalorder %s233, %s236
    %p245 = scmp.eq.s32.totalorder %s20, 1
    %p246 = por %p244, %p245
    %p247 = scmp.ne.s32.totalorder %s236, %s237
    %p248 = scmp.eq.s32.totalorder %s20, 0
    %p249 = por %p247, %p248
    %p250 = scmp.ne.s32.totalorder %s236, %s237
    %p251 = scmp.eq.s32.totalorder %s21, 1
    %p252 = por %p250, %p251
    %p254 = scmp.ne.s32.totalorder %s237, %s253
    %p255 = scmp.eq.s32.totalorder %s21, 0
    %p256 = por %p254, %p255
    %p257 = scmp.le.s32.totalorder 1, %s15
    %p258 = scmp.lt.s32.totalorder %s15, 3
    %p259 = pnand %p257, %p258
    %p260 = pneg %p259
    // Predicated region
    $region9: #{partitioner_forward.7} parent=5 // pred_check
      _
    $region10: #{partitioner_forward.7} parent=5 // pred_check_branch
      %262 = sbr.rel (%p259) target = $region12
    $region11: #{partitioner_forward.7} parent=5 // pred_region
      %s263 = ssub.s32 %s15, 1
      // Predicated region
      $region13: #{partitioner_forward.7} parent=11 // pred_check
        %p264 = pneg %p74
      $region14: #{partitioner_forward.7} parent=11 // pred_check_branch
        %266 = sbr.rel (%p264) target = $region16
      $region15: #{partitioner_forward.7} parent=11 // pred_region
        _
      $region16: #{partitioner_forward.7} parent=11 // pred_fallthru
        _
      // Predicated region
      $region17: #{partitioner_forward.7} parent=11 // pred_check
        %p267 = pneg %p95
      $region18: #{partitioner_forward.7} parent=11 // pred_check_branch
        %269 = sbr.rel (%p267) target = $region20
      $region19: #{partitioner_forward.7} parent=11 // pred_region
        _
      $region20: #{partitioner_forward.7} parent=11 // pred_fallthru
        _
      // Predicated region
      $region21: #{partitioner_forward.7} parent=11 // pred_check
        %p270 = pneg %p116
      $region22: #{partitioner_forward.7} parent=11 // pred_check_branch
        %272 = sbr.rel (%p270) target = $region24
      $region23: #{partitioner_forward.7} parent=11 // pred_region
        _
      $region24: #{partitioner_forward.7} parent=11 // pred_fallthru
        _
      // Predicated region
      $region25: #{partitioner_forward.7} parent=11 // pred_check
        %p273 = pneg %p137
      $region26: #{partitioner_forward.7} parent=11 // pred_check_branch
        %275 = sbr.rel (%p273) target = $region28
      $region27: #{partitioner_forward.7} parent=11 // pred_region
        _
      $region28: #{partitioner_forward.7} parent=11 // pred_fallthru
        _
      // Predicated region
      $region29: #{partitioner_forward.7} parent=11 // pred_check
        %p276 = pneg %p158
      $region30: #{partitioner_forward.7} parent=11 // pred_check_branch
        %278 = sbr.rel (%p276) target = $region32
      $region31: #{partitioner_forward.7} parent=11 // pred_region
        _
      $region32: #{partitioner_forward.7} parent=11 // pred_fallthru
        _
      // Predicated region
      $region33: #{partitioner_forward.7} parent=11 // pred_check
        %p279 = pneg %p179
      $region34: #{partitioner_forward.7} parent=11 // pred_check_branch
        %281 = sbr.rel (%p279) target = $region36
      $region35: #{partitioner_forward.7} parent=11 // pred_region
        _
      $region36: #{partitioner_forward.7} parent=11 // pred_fallthru
        _
      // Predicated region
      $region37: #{partitioner_forward.7} parent=11 // pred_check
        %p282 = pneg %p200
      $region38: #{partitioner_forward.7} parent=11 // pred_check_branch
        %284 = sbr.rel (%p282) target = $region40
      $region39: #{partitioner_forward.7} parent=11 // pred_region
        _
      $region40: #{partitioner_forward.7} parent=11 // pred_fallthru
        _
      // Predicated region
      $region41: #{partitioner_forward.7} parent=11 // pred_check
        %p285 = pneg %p221
      $region42: #{partitioner_forward.7} parent=11 // pred_check_branch
        %287 = sbr.rel (%p285) target = $region44
      $region43: #{partitioner_forward.7} parent=11 // pred_region
        _
      $region44: #{partitioner_forward.7} parent=11 // pred_fallthru
        _
    $region12: #{partitioner_forward.7} parent=5 // pred_fallthru
      _
    %p288 = scmp.lt.s32.totalorder %s15, 2
    // Predicated region
    $region45: #{partitioner_forward.7} parent=5 // pred_check
      %p289 = pneg %p288
    $region46: #{partitioner_forward.7} parent=5 // pred_check_branch
      %291 = sbr.rel (%p289) target = $region48
    $region47: #{partitioner_forward.7} parent=5 // pred_region
      // Predicated region
      $region49: #{partitioner_forward.7} parent=47 // pred_check
        %p292 = pneg %p47
      $region50: #{partitioner_forward.7} parent=47 // pred_check_branch
        %294 = sbr.rel (%p292) target = $region52
      $region51: #{partitioner_forward.7} parent=47 // pred_region
        %p295 = scmp.lt.s32.totalorder %s22, 1
        %s296 = scalar_select %p295, %s22, 1
        %s297 = smul.addr %s296, 4
        %s298 = scalar_lea.vmem %s0, %s297
      $region52: #{partitioner_forward.7} parent=47 // pred_fallthru
        _
    $region48: #{partitioner_forward.7} parent=5 // pred_fallthru
      _
    %p299 = scmp.le.s32.totalorder 1, %s15
    %p300 = scmp.lt.s32.totalorder %s15, 3
    %p301 = pnand %p299, %p300
    %p302 = pneg %p301
    // Predicated region
    $region53: #{partitioner_forward.7} parent=5 // pred_check
      _
    $region54: #{partitioner_forward.7} parent=5 // pred_check_branch
      %304 = sbr.rel (%p301) target = $region56
    $region55: #{partitioner_forward.7} parent=5 // pred_region
      %s305 = ssub.s32 %s15, 1
      %p306 = scmp.lt.s32.totalorder %s24, 1
      %s307 = scalar_select %p306, %s24, 1
      %s308 = smul.addr %s307, 4
      %s309 = scalar_lea.vmem %s0, %s308
      %p310 = pneg %p53
      %p311 = pneg %p50
      %p312 = pneg %p74
      %p313 = pneg %p71
      %p314 = pneg %p95
      %p315 = pneg %p92
      %p316 = pneg %p116
      %p317 = pneg %p113
      %p318 = pneg %p137
      %p319 = pneg %p134
      %p320 = pneg %p158
      %p321 = pneg %p155
      %p322 = pneg %p179
      %p323 = pneg %p176
      %p324 = pneg %p200
      %p325 = pneg %p197
      %p326 = pneg %p221
      %p327 = pneg %p218
      %p328 = pneg %p249
      %p329 = pneg %p246
      %p330 = scmp.lt.s32.totalorder %s24, 1
      %s331 = scalar_select %p330, %s24, 1
      %p332 = scmp.lt.s32.totalorder %s25, 0
      %s333 = scalar_select %p332, %s25, 0
      %s334 = sadd.s32 %s333, %s331
      %s335 = smul.addr %s334, 4
      %s336 = scalar_lea.vmem %s9, %s335
      %p337 = scmp.lt.s32.totalorder %s24, 1
      %s338 = scalar_select %p337, %s24, 1
      %s339 = smul.addr %s338, 4
      %s340 = scalar_lea.vmem %s0, %s339
      %p341 = scmp.lt.s32.totalorder %s24, 1
      %s342 = scalar_select %p341, %s24, 1
      %p343 = scmp.lt.s32.totalorder %s25, 0
      %s344 = scalar_select %p343, %s25, 0
      %s345 = sadd.s32 %s344, %s342
      %s346 = smul.addr %s345, 4
      %s347 = scalar_lea.vmem %s9, %s346
      %v349 = vld [vmem:[%s340] sm:$0xf]
      %vm350 = vcmask 257024
      %v351 = vsel %vm350, %v349, 0.0
      %352 = vadd.xlane.f32.xlu0 %v351
      %v353 = vpop.xlane.xlu0 %352
      %v354 = vrcp.pop 32.0
      %v355 = vmul.f32 %v353, %v354
      %v356 = vsub.f32 %v349, %v355
      %v357 = vmul.f32 %v356, %v356
      %v358 = vsel %vm350, %v357, 0.0
      %359 = vadd.xlane.f32.xlu0 %v358
      %v360 = vpop.xlane.xlu0 %359
      %v361 = vmul.f32 %v360, %v354
      %v362 = vadd.f32 %v361, 1e-05
      %v363 = vrsqrt.pop %v362
      %v364 = vmul.f32 %v356, %v363
      %v365 = vld [vmem:[%s1] sm:$0x1]
      %v367 = vlaneseq
      %v368 = vshrl.u32 %v367, 7
      %v369 = vsub.s32 0, %v368
      %v370 = vrot.slane %v365, %v369
      %v372 = vmul.f32 %v364, %v370
      %v373 = vld [vmem:[%s2] sm:$0x1]
      %v375 = vlaneseq
      %v376 = vshrl.u32 %v375, 7
      %v377 = vsub.s32 0, %v376
      %v378 = vrot.slane %v373, %v377
      %v380 = vadd.f32 %v372, %v378
      %v381 = vpack.c.bf16 %v380, %v380
      %v382 = vld [vmem:[%s5] sm:$0xf]
      %v383 = vld [vmem:[%s5 + $0x4] sm:$0xf]
      %v384 = vld [vmem:[%s5 + $0x8] sm:$0xf]
      %v385 = vld [vmem:[%s5 + $0xc] sm:$0xf]
      %v386 = vld [vmem:[%s6] sm:$0x1]
      %v388 = vlaneseq
      %v389 = vshrl.u32 %v388, 7
      %v390 = vsub.s32 0, %v389
      %v391 = vrot.slane %v386, %v390
      %v397 = vunpack.c.l.b16 %v382
      %v398 = vunpack.c.l.b16 %v383
      %v399 = vunpack.c.l.b16 %v384
      %v400 = vunpack.c.l.b16 %v385
      %v401 = vpack.c.b16 %v398, %v397
      %v402 = vpack.c.b16 %v400, %v399
      %vm405 = vcmask 261120
      %v407 = vsel %vm405, %v381, 0
      %409 = vmatprep.subr.bf16.mxu0 0
      %410 = vmatpush1.bf16.msra.mxu0 %v401
      %411 = vmatprep.subr.bf16.mxu0 0
      %412 = vmatpush1.bf16.msra.mxu0 %v402
      %413 = vmatprep.subr.bf16.mxu0 0
      %414 = vmatpush1.bf16.msra.mxu0 0
      %415 = vmatprep.subr.bf16.mxu0 0
      %416 = vmatpush1.bf16.msra.mxu0 0
      %417 = vmatprep.subr.bf16.mxu0 0
      %418 = vmatpush1.bf16.msra.mxu0 0
      %419 = vmatprep.subr.bf16.mxu0 0
      %420 = vmatpush1.bf16.msra.mxu0 0
      %421 = vmatprep.subr.bf16.mxu0 0
      %422 = vmatpush1.bf16.msra.mxu0 0
      %423 = vmatprep.subr.bf16.mxu0 0
      %424 = vmatpush1.bf16.msra.mxu0 0
      %425 = vmatprep.subr.bf16.mxu0 0
      %426 = vmatpush1.bf16.msra.mxu0 0
      %427 = vmatprep.subr.bf16.mxu0 0
      %428 = vmatpush1.bf16.msra.mxu0 0
      %429 = vmatprep.subr.bf16.mxu0 0
      %430 = vmatpush1.bf16.msra.mxu0 0
      %431 = vmatprep.subr.bf16.mxu0 0
      %432 = vmatpush1.bf16.msra.mxu0 0
      %433 = vmatprep.subr.bf16.mxu0 0
      %434 = vmatpush1.bf16.msra.mxu0 0
      %435 = vmatprep.subr.bf16.mxu0 0
      %436 = vmatpush1.bf16.msra.mxu0 0
      %437 = vmatprep.subr.bf16.mxu0 0
      %438 = vmatpush1.bf16.msra.mxu0 0
      %439 = vmatprep.subr.bf16.mxu0 0
      %440 = vmatpush1.bf16.msra.mxu0 0
      %441 = vmatprep.mubr.bf16.mxu0 0
      %442 = vmatmul.mubr.bf16.gmra.mrb[0].mxu0 %v407
      %v443 = vpop.f32.mrb[0].mxu0
      %v444 = vadd.f32 %v391, %v443
      %v445 = vpop.f32.mrb[0].mxu0
      %v446 = vpop.f32.mrb[0].mxu0
      %v447 = vpop.f32.mrb[0].mxu0
      %448 = vdwg.mxu0
      %v449 = vld [vmem:[%s3] sm:$0xf]
      %v450 = vld [vmem:[%s3 + $0x4] sm:$0xf]
      %v451 = vld [vmem:[%s3 + $0x8] sm:$0xf]
      %v452 = vld [vmem:[%s3 + $0xc] sm:$0xf]
      %v453 = vld [vmem:[%s4] sm:$0x1]
      %v455 = vlaneseq
      %v456 = vshrl.u32 %v455, 7
      %v457 = vsub.s32 0, %v456
      %v458 = vrot.slane %v453, %v457
      %v464 = vunpack.c.l.b16 %v449
      %v465 = vunpack.c.l.b16 %v450
      %v466 = vunpack.c.l.b16 %v451
      %v467 = vunpack.c.l.b16 %v452
      %v468 = vpack.c.b16 %v465, %v464
      %v469 = vpack.c.b16 %v467, %v466
      %472 = vmatprep.subr.bf16.mxu0 0
      %473 = vmatpush1.bf16.msra.mxu0 %v468
      %474 = vmatprep.subr.bf16.mxu0 0
      %475 = vmatpush1.bf16.msra.mxu0 %v469
      %476 = vmatprep.subr.bf16.mxu0 0
      %477 = vmatpush1.bf16.msra.mxu0 0
      %478 = vmatprep.subr.bf16.mxu0 0
      %479 = vmatpush1.bf16.msra.mxu0 0
      %480 = vmatprep.subr.bf16.mxu0 0
      %481 = vmatpush1.bf16.msra.mxu0 0
      %482 = vmatprep.subr.bf16.mxu0 0
      %483 = vmatpush1.bf16.msra.mxu0 0
      %484 = vmatprep.subr.bf16.mxu0 0
      %485 = vmatpush1.bf16.msra.mxu0 0
      %486 = vmatprep.subr.bf16.mxu0 0
      %487 = vmatpush1.bf16.msra.mxu0 0
      %488 = vmatprep.subr.bf16.mxu0 0
      %489 = vmatpush1.bf16.msra.mxu0 0
      %490 = vmatprep.subr.bf16.mxu0 0
      %491 = vmatpush1.bf16.msra.mxu0 0
      %492 = vmatprep.subr.bf16.mxu0 0
      %493 = vmatpush1.bf16.msra.mxu0 0
      %494 = vmatprep.subr.bf16.mxu0 0
      %495 = vmatpush1.bf16.msra.mxu0 0
      %496 = vmatprep.subr.bf16.mxu0 0
      %497 = vmatpush1.bf16.msra.mxu0 0
      %498 = vmatprep.subr.bf16.mxu0 0
      %499 = vmatpush1.bf16.msra.mxu0 0
      %500 = vmatprep.subr.bf16.mxu0 0
      %501 = vmatpush1.bf16.msra.mxu0 0
      %502 = vmatprep.subr.bf16.mxu0 0
      %503 = vmatpush1.bf16.msra.mxu0 0
      %504 = vmatprep.mubr.bf16.mxu0 0
      %505 = vmatmul.mubr.bf16.gmra.mrb[0].mxu0 %v407
      %v506 = vpop.f32.mrb[0].mxu0
      %v507 = vadd.f32 %v458, %v506
      %v508 = vpop.f32.mrb[0].mxu0
      %v509 = vpop.f32.mrb[0].mxu0
      %v510 = vpop.f32.mrb[0].mxu0
      %511 = vdwg.mxu0
      %v512 = vpack.c.bf16 %v507, %v507
      %v513 = vpack.c.bf16 %v444, %v444
      %vm514 = vcmask 64512
      %v516 = vsel %vm514, %v512, 0
      %v519 = vsel %vm514, %v513, 0
      %521 = vmatprep.subr.bf16.mxu0 0
      %522 = vmatpush1.bf16.xpose.msra.mxu0 %v519
      %523 = vmatprep.subr.bf16.mxu0 0
      %524 = vmatpush1.bf16.xpose.msra.mxu0 0
      %525 = vmatprep.subr.bf16.mxu0 0
      %526 = vmatpush1.bf16.xpose.msra.mxu0 0
      %527 = vmatprep.subr.bf16.mxu0 0
      %528 = vmatpush1.bf16.xpose.msra.mxu0 0
      %529 = vmatprep.subr.bf16.mxu0 0
      %530 = vmatpush1.bf16.xpose.msra.mxu0 0
      %531 = vmatprep.subr.bf16.mxu0 0
      %532 = vmatpush1.bf16.xpose.msra.mxu0 0
      %533 = vmatprep.subr.bf16.mxu0 0
      %534 = vmatpush1.bf16.xpose.msra.mxu0 0
      %535 = vmatprep.subr.bf16.mxu0 0
      %536 = vmatpush1.bf16.xpose.msra.mxu0 0
      %537 = vmatprep.subr.bf16.mxu0 0
      %538 = vmatpush1.bf16.xpose.msra.mxu0 0
      %539 = vmatprep.subr.bf16.mxu0 0
      %540 = vmatpush1.bf16.xpose.msra.mxu0 0
      %541 = vmatprep.subr.bf16.mxu0 0
      %542 = vmatpush1.bf16.xpose.msra.mxu0 0
      %543 = vmatprep.subr.bf16.mxu0 0
      %544 = vmatpush1.bf16.xpose.msra.mxu0 0
      %545 = vmatprep.subr.bf16.mxu0 0
      %546 = vmatpush1.bf16.xpose.msra.mxu0 0
      %547 = vmatprep.subr.bf16.mxu0 0
      %548 = vmatpush1.bf16.xpose.msra.mxu0 0
      %549 = vmatprep.subr.bf16.mxu0 0
      %550 = vmatpush1.bf16.xpose.msra.mxu0 0
      %551 = vmatprep.subr.bf16.mxu0 0
      %552 = vmatpush1.bf16.xpose.msra.mxu0 0
      %553 = vmatprep.mubr.bf16.mxu0 0
      %554 = vmatmul.mubr.bf16.gmra.mrb[0].mxu0 %v516
      %v555 = vpop.f32.mrb[0].mxu0
      %v556 = vadd.f32 0.0, %v555
      %v557 = vpop.f32.mrb[0].mxu0
      %v558 = vpop.f32.mrb[0].mxu0
      %v559 = vpop.f32.mrb[0].mxu0
      %560 = vdwg.mxu0
      %v561 = vmul.f32 %v556, 0.35355338
      %vm562 = vcmask 27648
      %v563 = vsel %vm562, %v561, -inf
      %564 = vmax.xlane.f32.xlu0 %v563
      %v565 = vpop.xlane.xlu0 %564
      %v566 = vsub.f32 %v561, %v565
      %v567 = vmul.f32 %v566, 1.442695
      %v568 = vpow.pop %v567
      %v569 = vsel %vm562, %v568, 0.0
      %570 = vadd.xlane.f32.xlu0 %v569
      %v571 = vpop.xlane.xlu0 %570
      %v572 = vrcp.pop %v571
      %v573 = vmul.f32 %v568, %v572
      %v574 = vpack.c.bf16 %v573, %v573
      %576 = vrot.lane.b32.xlu0 %v513, 112
      %v577 = vpop.permute.xlu0 %576
      %vm578 = vcmask 31744
      %v580 = vsel %vm578, %v574, 0
      %vm582 = vcmask 1041408
      %v584 = vsel %vm582, %v577, 0
      %586 = vmatprep.subr.bf16.mxu0 0
      %587 = vmatpush1.bf16.msra.mxu0 %v584
      %588 = vmatprep.subr.bf16.mxu0 0
      %589 = vmatpush1.bf16.msra.mxu0 0
      %590 = vmatprep.subr.bf16.mxu0 0
      %591 = vmatpush1.bf16.msra.mxu0 0
      %592 = vmatprep.subr.bf16.mxu0 0
      %593 = vmatpush1.bf16.msra.mxu0 0
      %594 = vmatprep.subr.bf16.mxu0 0
      %595 = vmatpush1.bf16.msra.mxu0 0
      %596 = vmatprep.subr.bf16.mxu0 0
      %597 = vmatpush1.bf16.msra.mxu0 0
      %598 = vmatprep.subr.bf16.mxu0 0
      %599 = vmatpush1.bf16.msra.mxu0 0
      %600 = vmatprep.subr.bf16.mxu0 0
      %601 = vmatpush1.bf16.msra.mxu0 0
      %602 = vmatprep.subr.bf16.mxu0 0
      %603 = vmatpush1.bf16.msra.mxu0 0
      %604 = vmatprep.subr.bf16.mxu0 0
      %605 = vmatpush1.bf16.msra.mxu0 0
      %606 = vmatprep.subr.bf16.mxu0 0
      %607 = vmatpush1.bf16.msra.mxu0 0
      %608 = vmatprep.subr.bf16.mxu0 0
      %609 = vmatpush1.bf16.msra.mxu0 0
      %610 = vmatprep.subr.bf16.mxu0 0
      %611 = vmatpush1.bf16.msra.mxu0 0
      %612 = vmatprep.subr.bf16.mxu0 0
      %613 = vmatpush1.bf16.msra.mxu0 0
      %614 = vmatprep.subr.bf16.mxu0 0
      %615 = vmatpush1.bf16.msra.mxu0 0
      %616 = vmatprep.subr.bf16.mxu0 0
      %617 = vmatpush1.bf16.msra.mxu0 0
      %618 = vmatprep.mubr.bf16.mxu0 0
      %619 = vmatmul.mubr.bf16.gmra.mrb[0].mxu0 %v580
      %v620 = vpop.f32.mrb[0].mxu0
      %v621 = vadd.f32 0.0, %v620
      %v622 = vpop.f32.mrb[0].mxu0
      %v623 = vpop.f32.mrb[0].mxu0
      %v624 = vpop.f32.mrb[0].mxu0
      %625 = vdwg.mxu0
      %627 = vrot.lane.b32.xlu0 %v512, 120
      %v628 = vpop.permute.xlu0 %627
      %629 = vrot.lane.b32.xlu0 %v513, 120
      %v630 = vpop.permute.xlu0 %629
      %v632 = vsel %vm514, %v628, 0
      %v635 = vsel %vm514, %v630, 0
      %637 = vmatprep.subr.bf16.mxu0 0
      %638 = vmatpush1.bf16.xpose.msra.mxu0 %v635
      %639 = vmatprep.subr.bf16.mxu0 0
      %640 = vmatpush1.bf16.xpose.msra.mxu0 0
      %641 = vmatprep.subr.bf16.mxu0 0
      %642 = vmatpush1.bf16.xpose.msra.mxu0 0
      %643 = vmatprep.subr.bf16.mxu0 0
      %644 = vmatpush1.bf16.xpose.msra.mxu0 0
      %645 = vmatprep.subr.bf16.mxu0 0
      %646 = vmatpush1.bf16.xpose.msra.mxu0 0
      %647 = vmatprep.subr.bf16.mxu0 0
      %648 = vmatpush1.bf16.xpose.msra.mxu0 0
      %649 = vmatprep.subr.bf16.mxu0 0
      %650 = vmatpush1.bf16.xpose.msra.mxu0 0
      %651 = vmatprep.subr.bf16.mxu0 0
      %652 = vmatpush1.bf16.xpose.msra.mxu0 0
      %653 = vmatprep.subr.bf16.mxu0 0
      %654 = vmatpush1.bf16.xpose.msra.mxu0 0
      %655 = vmatprep.subr.bf16.mxu0 0
      %656 = vmatpush1.bf16.xpose.msra.mxu0 0
      %657 = vmatprep.subr.bf16.mxu0 0
      %658 = vmatpush1.bf16.xpose.msra.mxu0 0
      %659 = vmatprep.subr.bf16.mxu0 0
      %660 = vmatpush1.bf16.xpose.msra.mxu0 0
      %661 = vmatprep.subr.bf16.mxu0 0
      %662 = vmatpush1.bf16.xpose.msra.mxu0 0
      %663 = vmatprep.subr.bf16.mxu0 0
      %664 = vmatpush1.bf16.xpose.msra.mxu0 0
      %665 = vmatprep.subr.bf16.mxu0 0
      %666 = vmatpush1.bf16.xpose.msra.mxu0 0
      %667 = vmatprep.subr.bf16.mxu0 0
      %668 = vmatpush1.bf16.xpose.msra.mxu0 0
      %669 = vmatprep.mubr.bf16.mxu0 0
      %670 = vmatmul.mubr.bf16.gmra.mrb[0].mxu0 %v632
      %v671 = vpop.f32.mrb[0].mxu0
      %v672 = vadd.f32 0.0, %v671
      %v673 = vpop.f32.mrb[0].mxu0
      %v674 = vpop.f32.mrb[0].mxu0
      %v675 = vpop.f32.mrb[0].mxu0
      %676 = vdwg.mxu0
      %v677 = vmul.f32 %v672, 0.35355338
      %v678 = vsel %vm562, %v677, -inf
      %679 = vmax.xlane.f32.xlu0 %v678
      %v680 = vpop.xlane.xlu0 %679
      %v681 = vsub.f32 %v677, %v680
      %v682 = vmul.f32 %v681, 1.442695
      %v683 = vpow.pop %v682
      %v684 = vsel %vm562, %v683, 0.0
      %685 = vadd.xlane.f32.xlu0 %v684
      %v686 = vpop.xlane.xlu0 %685
      %v687 = vrcp.pop %v686
      %v688 = vmul.f32 %v683, %v687
      %v689 = vpack.c.bf16 %v688, %v688
      %690 = vrot.lane.b32.xlu0 %v513, 104
      %v691 = vpop.permute.xlu0 %690
      %v693 = vsel %vm578, %v689, 0
      %v696 = vsel %vm582, %v691, 0
      %698 = vmatprep.subr.bf16.mxu0 0
      %699 = vmatpush1.bf16.msra.mxu0 %v696
      %700 = vmatprep.subr.bf16.mxu0 0
      %701 = vmatpush1.bf16.msra.mxu0 0
      %702 = vmatprep.subr.bf16.mxu0 0
      %703 = vmatpush1.bf16.msra.mxu0 0
      %704 = vmatprep.subr.bf16.mxu0 0
      %705 = vmatpush1.bf16.msra.mxu0 0
      %706 = vmatprep.subr.bf16.mxu0 0
      %707 = vmatpush1.bf16.msra.mxu0 0
      %708 = vmatprep.subr.bf16.mxu0 0
      %709 = vmatpush1.bf16.msra.mxu0 0
      %710 = vmatprep.subr.bf16.mxu0 0
      %711 = vmatpush1.bf16.msra.mxu0 0
      %712 = vmatprep.subr.bf16.mxu0 0
      %713 = vmatpush1.bf16.msra.mxu0 0
      %714 = vmatprep.subr.bf16.mxu0 0
      %715 = vmatpush1.bf16.msra.mxu0 0
      %716 = vmatprep.subr.bf16.mxu0 0
      %717 = vmatpush1.bf16.msra.mxu0 0
      %718 = vmatprep.subr.bf16.mxu0 0
      %719 = vmatpush1.bf16.msra.mxu0 0
      %720 = vmatprep.subr.bf16.mxu0 0
      %721 = vmatpush1.bf16.msra.mxu0 0
      %722 = vmatprep.subr.bf16.mxu0 0
      %723 = vmatpush1.bf16.msra.mxu0 0
      %724 = vmatprep.subr.bf16.mxu0 0
      %725 = vmatpush1.bf16.msra.mxu0 0
      %726 = vmatprep.subr.bf16.mxu0 0
      %727 = vmatpush1.bf16.msra.mxu0 0
      %728 = vmatprep.subr.bf16.mxu0 0
      %729 = vmatpush1.bf16.msra.mxu0 0
      %730 = vmatprep.mubr.bf16.mxu0 0
      %731 = vmatmul.mubr.bf16.gmra.mrb[0].mxu0 %v693
      %v732 = vpop.f32.mrb[0].mxu0
      %v733 = vadd.f32 0.0, %v732
      %v734 = vpop.f32.mrb[0].mxu0
      %v735 = vpop.f32.mrb[0].mxu0
      %v736 = vpop.f32.mrb[0].mxu0
      %737 = vdwg.mxu0
      %739 = vrot.lane.b32.xlu0 %v733, 8
      %v740 = vpop.permute.xlu0 %739
      %v742 = vsel %vm514, %v621, %v740
      %v743 = vpack.c.bf16 %v742, %v742
      %v744 = vld [vmem:[%s7] sm:$0xf]
      %v745 = vld [vmem:[%s7 + $0x4] sm:$0xf]
      %v746 = vld [vmem:[%s8] sm:$0x1]
      %v748 = vlaneseq
      %v749 = vshrl.u32 %v748, 7
      %v750 = vsub.s32 0, %v749
      %v751 = vrot.slane %v746, %v750
      %v755 = vunpack.c.l.b16 %v744
      %v756 = vunpack.c.l.b16 %v745
      %v757 = vpack.c.b16 %v756, %v755
      %vm759 = vcmask 130048
      %v761 = vsel %vm759, %v743, 0
      %763 = vmatprep.subr.bf16.mxu0 0
      %764 = vmatpush1.bf16.msra.mxu0 %v757
      %765 = vmatprep.subr.bf16.mxu0 0
      %766 = vmatpush1.bf16.msra.mxu0 0
      %767 = vmatprep.subr.bf16.mxu0 0
      %768 = vmatpush1.bf16.msra.mxu0 0
      %769 = vmatprep.subr.bf16.mxu0 0
      %770 = vmatpush1.bf16.msra.mxu0 0
      %771 = vmatprep.subr.bf16.mxu0 0
      %772 = vmatpush1.bf16.msra.mxu0 0
      %773 = vmatprep.subr.bf16.mxu0 0
      %774 = vmatpush1.bf16.msra.mxu0 0
      %775 = vmatprep.subr.bf16.mxu0 0
      %776 = vmatpush1.bf16.msra.mxu0 0
      %777 = vmatprep.subr.bf16.mxu0 0
      %778 = vmatpush1.bf16.msra.mxu0 0
      %779 = vmatprep.subr.bf16.mxu0 0
      %780 = vmatpush1.bf16.msra.mxu0 0
      %781 = vmatprep.subr.bf16.mxu0 0
      %782 = vmatpush1.bf16.msra.mxu0 0
      %783 = vmatprep.subr.bf16.mxu0 0
      %784 = vmatpush1.bf16.msra.mxu0 0
      %785 = vmatprep.subr.bf16.mxu0 0
      %786 = vmatpush1.bf16.msra.mxu0 0
      %787 = vmatprep.subr.bf16.mxu0 0
      %788 = vmatpush1.bf16.msra.mxu0 0
      %789 = vmatprep.subr.bf16.mxu0 0
      %790 = vmatpush1.bf16.msra.mxu0 0
      %791 = vmatprep.subr.bf16.mxu0 0
      %792 = vmatpush1.bf16.msra.mxu0 0
      %793 = vmatprep.subr.bf16.mxu0 0
      %794 = vmatpush1.bf16.msra.mxu0 0
      %795 = vmatprep.mubr.bf16.mxu0 0
      %796 = vmatmul.mubr.bf16.gmra.mrb[0].mxu0 %v761
      %v797 = vpop.f32.mrb[0].mxu0
      %v798 = vadd.f32 %v751, %v797
      %v799 = vpop.f32.mrb[0].mxu0
      %v800 = vpop.f32.mrb[0].mxu0
      %v801 = vpop.f32.mrb[0].mxu0
      %802 = vdwg.mxu0
      %v803 = vadd.f32 %v349, %v798
      %804 = vst.msk [vmem:[%s347] sm:$0xf] %vm350, %v803
      %p805 = scmp.lt.s32.totalorder %s24, 1
      %s806 = scalar_select %p805, %s24, 1
      %p807 = scmp.lt.s32.totalorder %s25, 0
      %s808 = scalar_select %p807, %s25, 0
      %s809 = sadd.s32 %s808, %s806
      %s810 = smul.addr %s809, 4
      %s811 = scalar_lea.vmem %s9, %s810
      // Predicated region
      $region57: #{partitioner_forward.7} parent=55 // pred_check
        %p812 = pneg %p246
      $region58: #{partitioner_forward.7} parent=55 // pred_check_branch
        %814 = sbr.rel (%p812) target = $region60
      $region59: #{partitioner_forward.7} parent=55 // pred_region
        _
      $region60: #{partitioner_forward.7} parent=55 // pred_fallthru
        _
    $region56: #{partitioner_forward.7} parent=5 // pred_fallthru
      _
    %p815 = scmp.le.s32.totalorder 2, %s15
    // Predicated region
    $region61: #{partitioner_forward.7} parent=5 // pred_check
      %p816 = pneg %p815
    $region62: #{partitioner_forward.7} parent=5 // pred_check_branch
      %818 = sbr.rel (%p816) target = $region64
    $region63: #{partitioner_forward.7} parent=5 // pred_region
      %s819 = ssub.s32 %s15, 2
      // Predicated region
      $region65: #{partitioner_forward.7} parent=63 // pred_check
        %p820 = pneg %p252
      $region66: #{partitioner_forward.7} parent=63 // pred_check_branch
        %822 = sbr.rel (%p820) target = $region68
      $region67: #{partitioner_forward.7} parent=63 // pred_region
        %p823 = scmp.lt.s32.totalorder %s26, 1
        %s824 = scalar_select %p823, %s26, 1
        %p825 = scmp.lt.s32.totalorder %s27, 0
        %s826 = scalar_select %p825, %s27, 0
        %s827 = sadd.s32 %s826, %s824
        %s828 = smul.addr %s827, 4
        %s829 = scalar_lea.vmem %s9, %s828
      $region68: #{partitioner_forward.7} parent=63 // pred_fallthru
        _
    $region64: #{partitioner_forward.7} parent=5 // pred_fallthru
      _
  $region6: #{partitioner_forward.7} parent=0 // loop_footer
    %s19 = sadd.s32 1, %s15
  $region7: #{partitioner_forward.7} parent=0 // loop_footer_branch
    %14 = sbr.rel target = $region3
  $region8: #{partitioner_forward.7} parent=0 // loop_exit
    _

// kernel: partitioner_forward.6
$region0: #{partitioner_forward.6}
  #allocation0 [shape = 'u32[]', space=smem, size = 0x4, offset = 0x4, fixed_abs, tag = 'smem constant byte address 0x4 - core index']
  #allocation1 [shape = 'u32[144,128]{1,0:T(1,128)}', space=vmem, size = 0x12000, scoped, tag = 'internal scratch']
  %s0 = inlined_call_operand.vmem [shape: f32[2,2,4,2,4,32], index: 0, kind: input, shape index: {}]
  %s1 = inlined_call_operand.vmem [shape: bf16[4,4,32,32], index: 1, kind: input, shape index: {}]
  %s2 = inlined_call_operand.vmem [shape: f32[1,32], index: 2, kind: input, shape index: {}]
  %s3 = inlined_call_operand.vmem [shape: f32[2,2,2,32], index: 3, kind: output, shape index: {}]
  %s4 = sld [smem:[#allocation0]]
  $region45: #{partitioner_forward.6} parent=0
    _
  %s6 = ssub.s32 1, %s4
  %s7 = scalar_select 0, %s6, %s4
  loop: start=0, step=1, limit=6
  $region2: #{partitioner_forward.6} parent=0 // loop_pre_header
    _
  $region3: #{partitioner_forward.6} parent=0 // loop_header
    %s9 = sphi 0, %s13
    %p10 = scmp.ge.s32.totalorder %s9, 6
    %s16 = sphi 0, %s28
    %s17 = sphi 0, %s24
    %s18 = sphi 0, %s16
    %s19 = sphi 0, %s17
    %s20 = sphi 0, %s18
    %s21 = sphi 0, %s19
    %s33 = sphi 0, %s35
    %s36 = sphi 0, %s33
    %s37 = sphi 0, %s36
    %s53 = sphi 0, %s37
    %s57 = sphi 0, %s57
    %s59 = sphi 0, %s57
    %s60 = sphi 0, %s59
    %s74 = sphi 0, %s60
    %s78 = sphi 0, %s78
    %s80 = sphi 0, %s78
    %s81 = sphi 0, %s80
    %s95 = sphi 0, %s81
    %s103 = sphi 0, %s105
    %s106 = sphi 0, %s103
    %s107 = sphi 0, %s106
    %s123 = sphi 0, %s107
  $region4: #{partitioner_forward.6} parent=0 // loop_header_branch
    %12 = sbr.rel (%p10) target = $region8
  $region5: #{partitioner_forward.6} parent=0 // loop_body
    %s14 = ssub.s32 %s9, 1
    %s15 = ssub.s32 %s9, 2
    %s22 = sadd.s32 1, %s17
    %p23 = scmp.ge.s32.totalorder %s22, 2
    %s24 = scalar_select %p23, 0, %s22
    %s25 = sadd.s32 1, %s16
    %s26 = scalar_select %p23, %s25, %s16
    %p27 = scmp.ge.s32.totalorder %s26, 2
    %s28 = scalar_select %p27, 0, %s26
    %s29 = ssub.s32 %s16, %s28
    %s30 = ssub.s32 %s17, %s24
    %s31 = sor.u32 %s29, %s30
    %p32 = scmp.eq.s32.totalorder %s31, 0
    %s34 = sadd.s32 %s33, 1
    %s35 = scalar_select %p32, %s33, %s34
    %p38 = pneg %p32
    %p39 = scmp.eq.s32.totalorder %s9, 3
    %p40 = por %p38, %p39
    %p41 = scmp.ne.s32.totalorder %s33, %s36
    %p42 = scmp.eq.s32.totalorder %s9, 0
    %p43 = por %p41, %p42
    %p44 = scmp.ne.s32.totalorder %s33, %s36
    %p45 = scmp.eq.s32.totalorder %s14, 3
    %p46 = por %p44, %p45
    %p47 = scmp.ne.s32.totalorder %s36, %s37
    %p48 = scmp.eq.s32.totalorder %s14, 0
    %p49 = por %p47, %p48
    %p50 = scmp.ne.s32.totalorder %s36, %s37
    %p51 = scmp.eq.s32.totalorder %s15, 3
    %p52 = por %p50, %p51
    %p54 = scmp.ne.s32.totalorder %s37, %s53
    %p55 = scmp.eq.s32.totalorder %s15, 0
    %p56 = por %p54, %p55
    %s58 = sadd.s32 %s57, 1
    %p61 = scmp.eq.s32.totalorder %s9, 3
    %p62 = scmp.ne.s32.totalorder %s57, %s59
    %p63 = scmp.eq.s32.totalorder %s9, 0
    %p64 = por %p62, %p63
    %p65 = scmp.ne.s32.totalorder %s57, %s59
    %p66 = scmp.eq.s32.totalorder %s14, 3
    %p67 = por %p65, %p66
    %p68 = scmp.ne.s32.totalorder %s59, %s60
    %p69 = scmp.eq.s32.totalorder %s14, 0
    %p70 = por %p68, %p69
    %p71 = scmp.ne.s32.totalorder %s59, %s60
    %p72 = scmp.eq.s32.totalorder %s15, 3
    %p73 = por %p71, %p72
    %p75 = scmp.ne.s32.totalorder %s60, %s74
    %p76 = scmp.eq.s32.totalorder %s15, 0
    %p77 = por %p75, %p76
    %s79 = sadd.s32 %s78, 1
    %p82 = scmp.eq.s32.totalorder %s9, 3
    %p83 = scmp.ne.s32.totalorder %s78, %s80
    %p84 = scmp.eq.s32.totalorder %s9, 0
    %p85 = por %p83, %p84
    %p86 = scmp.ne.s32.totalorder %s78, %s80
    %p87 = scmp.eq.s32.totalorder %s14, 3
    %p88 = por %p86, %p87
    %p89 = scmp.ne.s32.totalorder %s80, %s81
    %p90 = scmp.eq.s32.totalorder %s14, 0
    %p91 = por %p89, %p90
    %p92 = scmp.ne.s32.totalorder %s80, %s81
    %p93 = scmp.eq.s32.totalorder %s15, 3
    %p94 = por %p92, %p93
    %p96 = scmp.ne.s32.totalorder %s81, %s95
    %p97 = scmp.eq.s32.totalorder %s15, 0
    %p98 = por %p96, %p97
    %s99 = ssub.s32 %s16, %s28
    %s100 = ssub.s32 %s17, %s24
    %s101 = sor.u32 %s99, %s100
    %p102 = scmp.eq.s32.totalorder %s101, 0
    %s104 = sadd.s32 %s103, 1
    %s105 = scalar_select %p102, %s103, %s104
    %p108 = pneg %p102
    %p109 = scmp.eq.s32.totalorder %s9, 3
    %p110 = por %p108, %p109
    %p111 = scmp.ne.s32.totalorder %s103, %s106
    %p112 = scmp.eq.s32.totalorder %s9, 0
    %p113 = por %p111, %p112
    %p114 = scmp.ne.s32.totalorder %s103, %s106
    %p115 = scmp.eq.s32.totalorder %s14, 3
    %p116 = por %p114, %p115
    %p117 = scmp.ne.s32.totalorder %s106, %s107
    %p118 = scmp.eq.s32.totalorder %s14, 0
    %p119 = por %p117, %p118
    %p120 = scmp.ne.s32.totalorder %s106, %s107
    %p121 = scmp.eq.s32.totalorder %s15, 3
    %p122 = por %p120, %p121
    %p124 = scmp.ne.s32.totalorder %s107, %s123
    %p125 = scmp.eq.s32.totalorder %s15, 0
    %p126 = por %p124, %p125
    %p127 = scmp.le.s32.totalorder 1, %s9
    %p128 = scmp.lt.s32.totalorder %s9, 5
    %p129 = pnand %p127, %p128
    %p130 = pneg %p129
    // Predicated region
    $region9: #{partitioner_forward.6} parent=5 // pred_check
      _
    $region10: #{partitioner_forward.6} parent=5 // pred_check_branch
      %132 = sbr.rel (%p129) target = $region12
    $region11: #{partitioner_forward.6} parent=5 // pred_region
      %s133 = ssub.s32 %s9, 1
      // Predicated region
      $region13: #{partitioner_forward.6} parent=11 // pred_check
        %p134 = pneg %p70
      $region14: #{partitioner_forward.6} parent=11 // pred_check_branch
        %136 = sbr.rel (%p134) target = $region16
      $region15: #{partitioner_forward.6} parent=11 // pred_region
        _
      $region16: #{partitioner_forward.6} parent=11 // pred_fallthru
        _
      // Predicated region
      $region17: #{partitioner_forward.6} parent=11 // pred_check
        %p137 = pneg %p91
      $region18: #{partitioner_forward.6} parent=11 // pred_check_branch
        %139 = sbr.rel (%p137) target = $region20
      $region19: #{partitioner_forward.6} parent=11 // pred_region
        _
      $region20: #{partitioner_forward.6} parent=11 // pred_fallthru
        _
    $region12: #{partitioner_forward.6} parent=5 // pred_fallthru
      _
    %p140 = scmp.lt.s32.totalorder %s9, 4
    // Predicated region
    $region21: #{partitioner_forward.6} parent=5 // pred_check
      %p141 = pneg %p140
    $region22: #{partitioner_forward.6} parent=5 // pred_check_branch
      %143 = sbr.rel (%p141) target = $region24
    $region23: #{partitioner_forward.6} parent=5 // pred_region
      // Predicated region
      $region25: #{partitioner_forward.6} parent=23 // pred_check
        %p144 = pneg %p43
      $region26: #{partitioner_forward.6} parent=23 // pred_check_branch
        %146 = sbr.rel (%p144) target = $region28
      $region27: #{partitioner_forward.6} parent=23 // pred_region
        %p147 = scmp.lt.s32.totalorder %s16, 1
        %s148 = scalar_select %p147, %s16, 1
        %p149 = scmp.lt.s32.totalorder %s17, 1
        %s150 = scalar_select %p149, %s17, 1
        %s151 = smul.addr %s150, 8
        %s152 = smul.addr %s148, 16
        %s153 = sadd.s32 %s151, %s152
        %s154 = smul.addr %s153, 4
        %s155 = scalar_lea.vmem %s0, %s154
      $region28: #{partitioner_forward.6} parent=23 // pred_fallthru
        _
    $region24: #{partitioner_forward.6} parent=5 // pred_fallthru
      _
    %p156 = scmp.le.s32.totalorder 1, %s9
    %p157 = scmp.lt.s32.totalorder %s9, 5
    %p158 = pnand %p156, %p157
    %p159 = pneg %p158
    // Predicated region
    $region29: #{partitioner_forward.6} parent=5 // pred_check
      _
    $region30: #{partitioner_forward.6} parent=5 // pred_check_branch
      %161 = sbr.rel (%p158) target = $region32
    $region31: #{partitioner_forward.6} parent=5 // pred_region
      %s162 = ssub.s32 %s9, 1
      %p163 = scmp.lt.s32.totalorder %s18, 1
      %s164 = scalar_select %p163, %s18, 1
      %p165 = scmp.lt.s32.totalorder %s19, 1
      %s166 = scalar_select %p165, %s19, 1
      %s167 = smul.addr %s166, 8
      %s168 = smul.addr %s164, 16
      %s169 = sadd.s32 %s167, %s168
      %s170 = smul.addr %s169, 4
      %s171 = scalar_lea.vmem %s0, %s170
      %p172 = pneg %p49
      %p173 = pneg %p46
      %p174 = pneg %p70
      %p175 = pneg %p67
      %p176 = pneg %p91
      %p177 = pneg %p88
      %p178 = pneg %p119
      %p179 = pneg %p116
      %p180 = scmp.lt.s32.totalorder %s18, 1
      %s181 = scalar_select %p180, %s18, 1
      %p182 = scmp.lt.s32.totalorder %s19, 1
      %s183 = scalar_select %p182, %s19, 1
      %s184 = smul.addr %s181, 2
      %s185 = sadd.s32 %s183, %s184
      %s186 = smul.addr %s185, 2
      %s187 = scalar_lea.vmem %s3, %s186
      %p188 = scmp.lt.s32.totalorder %s18, 1
      %s189 = scalar_select %p188, %s18, 1
      %p190 = scmp.lt.s32.totalorder %s19, 1
      %s191 = scalar_select %p190, %s19, 1
      %s192 = smul.addr %s191, 8
      %s193 = smul.addr %s189, 16
      %s194 = sadd.s32 %s192, %s193
      %s195 = smul.addr %s194, 4
      %s196 = scalar_lea.vmem %s0, %s195
      %p197 = scmp.lt.s32.totalorder %s18, 1
      %s198 = scalar_select %p197, %s18, 1
      %p199 = scmp.lt.s32.totalorder %s19, 1
      %s200 = scalar_select %p199, %s19, 1
      %s201 = smul.addr %s198, 2
      %s202 = sadd.s32 %s200, %s201
      %s203 = smul.addr %s202, 2
      %s204 = scalar_lea.vmem %s3, %s203
      %v206 = vld [vmem:[%s196] sm:$0x1]
      %v207 = vld [vmem:[%s196 + $0x4] sm:$0x1]
      %v208 = vpack.c.bf16 %v206, %v206
      %v209 = vpack.c.bf16 %v207, %v207
      %v210 = vld [vmem:[%s1] sm:$0xf]
      %v211 = vld [vmem:[%s1 + $0x4] sm:$0xf]
      %v212 = vld [vmem:[%s1 + $0x8] sm:$0xf]
      %v213 = vld [vmem:[%s1 + $0xc] sm:$0xf]
      %v214 = vld [vmem:[%s196 + $0x1] sm:$0x1]
      %v215 = vld [vmem:[%s196 + $0x5] sm:$0x1]
      %v216 = vpack.c.bf16 %v214, %v214
      %v217 = vpack.c.bf16 %v215, %v215
      %s218 = scalar_lea.vmem %s1, 16
      %v219 = vld [vmem:[%s218] sm:$0xf]
      %v220 = vld [vmem:[%s218 + $0x4] sm:$0xf]
      %v221 = vld [vmem:[%s218 + $0x8] sm:$0xf]
      %v222 = vld [vmem:[%s218 + $0xc] sm:$0xf]
      %v225 = vunpack.c.l.b16 %v216
      %v226 = vunpack.c.l.b16 %v217
      %v227 = vrot.slane %v226, 7
      %vm228 = vcmask 1041409
      %v229 = vsel %vm228, %v227, %v225
      %v230 = vpack.c.b16 %v229, %v229
      %v235 = vunpack.c.l.b16 %v219
      %v236 = vunpack.c.l.b16 %v220
      %v237 = vunpack.c.l.b16 %v221
      %v238 = vunpack.c.l.b16 %v222
      %v239 = vpack.c.b16 %v236, %v235
      %v240 = vpack.c.b16 %v238, %v237
      %vm243 = vcmask 261120
      %v245 = vsel %vm243, %v230, 0
      %247 = vmatprep.subr.bf16.mxu0 0
      %248 = vmatpush1.bf16.msra.mxu0 %v239
      %249 = vmatprep.subr.bf16.mxu0 0
      %250 = vmatpush1.bf16.msra.mxu0 %v240
      %251 = vmatprep.subr.bf16.mxu0 0
      %252 = vmatpush1.bf16.msra.mxu0 0
      %253 = vmatprep.subr.bf16.mxu0 0
      %254 = vmatpush1.bf16.msra.mxu0 0
      %255 = vmatprep.subr.bf16.mxu0 0
      %256 = vmatpush1.bf16.msra.mxu0 0
      %257 = vmatprep.subr.bf16.mxu0 0
      %258 = vmatpush1.bf16.msra.mxu0 0
      %259 = vmatprep.subr.bf16.mxu0 0
      %260 = vmatpush1.bf16.msra.mxu0 0
      %261 = vmatprep.subr.bf16.mxu0 0
      %262 = vmatpush1.bf16.msra.mxu0 0
      %263 = vmatprep.subr.bf16.mxu0 0
      %264 = vmatpush1.bf16.msra.mxu0 0
      %265 = vmatprep.subr.bf16.mxu0 0
      %266 = vmatpush1.bf16.msra.mxu0 0
      %267 = vmatprep.subr.bf16.mxu0 0
      %268 = vmatpush1.bf16.msra.mxu0 0
      %269 = vmatprep.subr.bf16.mxu0 0
      %270 = vmatpush1.bf16.msra.mxu0 0
      %271 = vmatprep.subr.bf16.mxu0 0
      %272 = vmatpush1.bf16.msra.mxu0 0
      %273 = vmatprep.subr.bf16.mxu0 0
      %274 = vmatpush1.bf16.msra.mxu0 0
      %275 = vmatprep.subr.bf16.mxu0 0
      %276 = vmatpush1.bf16.msra.mxu0 0
      %277 = vmatprep.subr.bf16.mxu0 0
      %278 = vmatpush1.bf16.msra.mxu0 0
      %279 = vmatprep.mubr.bf16.mxu0 0
      %280 = vmatmul.mubr.bf16.gmra.mrb[0].mxu0 %v245
      %v281 = vpop.f32.mrb[0].mxu0
      %v282 = vadd.f32 0.0, %v281
      %v283 = vpop.f32.mrb[0].mxu0
      %v284 = vpop.f32.mrb[0].mxu0
      %v285 = vpop.f32.mrb[0].mxu0
      %286 = vdwg.mxu0
      %v289 = vunpack.c.l.b16 %v208
      %v290 = vunpack.c.l.b16 %v209
      %v291 = vrot.slane %v290, 7
      %v292 = vsel %vm228, %v291, %v289
      %v293 = vpack.c.b16 %v292, %v292
      %v298 = vunpack.c.l.b16 %v210
      %v299 = vunpack.c.l.b16 %v211
      %v300 = vunpack.c.l.b16 %v212
      %v301 = vunpack.c.l.b16 %v213
      %v302 = vpack.c.b16 %v299, %v298
      %v303 = vpack.c.b16 %v301, %v300
      %v307 = vsel %vm243, %v293, 0
      %309 = vmatprep.subr.bf16.mxu0 0
      %310 = vmatpush1.bf16.msra.mxu0 %v302
      %311 = vmatprep.subr.bf16.mxu0 0
      %312 = vmatpush1.bf16.msra.mxu0 %v303
      %313 = vmatprep.subr.bf16.mxu0 0
      %314 = vmatpush1.bf16.msra.mxu0 0
      %315 = vmatprep.subr.bf16.mxu0 0
      %316 = vmatpush1.bf16.msra.mxu0 0
      %317 = vmatprep.subr.bf16.mxu0 0
      %318 = vmatpush1.bf16.msra.mxu0 0
      %319 = vmatprep.subr.bf16.mxu0 0
      %320 = vmatpush1.bf16.msra.mxu0 0
      %321 = vmatprep.subr.bf16.mxu0 0
      %322 = vmatpush1.bf16.msra.mxu0 0
      %323 = vmatprep.subr.bf16.mxu0 0
      %324 = vmatpush1.bf16.msra.mxu0 0
      %325 = vmatprep.subr.bf16.mxu0 0
      %326 = vmatpush1.bf16.msra.mxu0 0
      %327 = vmatprep.subr.bf16.mxu0 0
      %328 = vmatpush1.bf16.msra.mxu0 0
      %329 = vmatprep.subr.bf16.mxu0 0
      %330 = vmatpush1.bf16.msra.mxu0 0
      %331 = vmatprep.subr.bf16.mxu0 0
      %332 = vmatpush1.bf16.msra.mxu0 0
      %333 = vmatprep.subr.bf16.mxu0 0
      %334 = vmatpush1.bf16.msra.mxu0 0
      %335 = vmatprep.subr.bf16.mxu0 0
      %336 = vmatpush1.bf16.msra.mxu0 0
      %337 = vmatprep.subr.bf16.mxu0 0
      %338 = vmatpush1.bf16.msra.mxu0 0
      %339 = vmatprep.subr.bf16.mxu0 0
      %340 = vmatpush1.bf16.msra.mxu0 0
      %341 = vmatprep.mubr.bf16.mxu0 0
      %342 = vmatmul.mubr.bf16.gmra.mrb[0].mxu0 %v307
      %v343 = vpop.f32.mrb[0].mxu0
      %v344 = vadd.f32 %v282, %v343
      %v345 = vpop.f32.mrb[0].mxu0
      %v346 = vpop.f32.mrb[0].mxu0
      %v347 = vpop.f32.mrb[0].mxu0
      %348 = vdwg.mxu0
      %v349 = vld [vmem:[%s196 + $0x2] sm:$0x1]
      %v350 = vld [vmem:[%s196 + $0x6] sm:$0x1]
      %v351 = vpack.c.bf16 %v349, %v349
      %v352 = vpack.c.bf16 %v350, %v350
      %s353 = scalar_lea.vmem %s1, 32
      %v354 = vld [vmem:[%s353] sm:$0xf]
      %v355 = vld [vmem:[%s353 + $0x4] sm:$0xf]
      %v356 = vld [vmem:[%s353 + $0x8] sm:$0xf]
      %v357 = vld [vmem:[%s353 + $0xc] sm:$0xf]
      %v360 = vunpack.c.l.b16 %v351
      %v361 = vunpack.c.l.b16 %v352
      %v362 = vrot.slane %v361, 7
      %v363 = vsel %vm228, %v362, %v360
      %v364 = vpack.c.b16 %v363, %v363
      %v369 = vunpack.c.l.b16 %v354
      %v370 = vunpack.c.l.b16 %v355
      %v371 = vunpack.c.l.b16 %v356
      %v372 = vunpack.c.l.b16 %v357
      %v373 = vpack.c.b16 %v370, %v369
      %v374 = vpack.c.b16 %v372, %v371
      %v378 = vsel %vm243, %v364, 0
      %380 = vmatprep.subr.bf16.mxu0 0
      %381 = vmatpush1.bf16.msra.mxu0 %v373
      %382 = vmatprep.subr.bf16.mxu0 0
      %383 = vmatpush1.bf16.msra.mxu0 %v374
      %384 = vmatprep.subr.bf16.mxu0 0
      %385 = vmatpush1.bf16.msra.mxu0 0
      %386 = vmatprep.subr.bf16.mxu0 0
      %387 = vmatpush1.bf16.msra.mxu0 0
      %388 = vmatprep.subr.bf16.mxu0 0
      %389 = vmatpush1.bf16.msra.mxu0 0
      %390 = vmatprep.subr.bf16.mxu0 0
      %391 = vmatpush1.bf16.msra.mxu0 0
      %392 = vmatprep.subr.bf16.mxu0 0
      %393 = vmatpush1.bf16.msra.mxu0 0
      %394 = vmatprep.subr.bf16.mxu0 0
      %395 = vmatpush1.bf16.msra.mxu0 0
      %396 = vmatprep.subr.bf16.mxu0 0
      %397 = vmatpush1.bf16.msra.mxu0 0
      %398 = vmatprep.subr.bf16.mxu0 0
      %399 = vmatpush1.bf16.msra.mxu0 0
      %400 = vmatprep.subr.bf16.mxu0 0
      %401 = vmatpush1.bf16.msra.mxu0 0
      %402 = vmatprep.subr.bf16.mxu0 0
      %403 = vmatpush1.bf16.msra.mxu0 0
      %404 = vmatprep.subr.bf16.mxu0 0
      %405 = vmatpush1.bf16.msra.mxu0 0
      %406 = vmatprep.subr.bf16.mxu0 0
      %407 = vmatpush1.bf16.msra.mxu0 0
      %408 = vmatprep.subr.bf16.mxu0 0
      %409 = vmatpush1.bf16.msra.mxu0 0
      %410 = vmatprep.subr.bf16.mxu0 0
      %411 = vmatpush1.bf16.msra.mxu0 0
      %412 = vmatprep.mubr.bf16.mxu0 0
      %413 = vmatmul.mubr.bf16.gmra.mrb[0].mxu0 %v378
      %v414 = vpop.f32.mrb[0].mxu0
      %v415 = vadd.f32 0.0, %v414
      %v416 = vpop.f32.mrb[0].mxu0
      %v417 = vpop.f32.mrb[0].mxu0
      %v418 = vpop.f32.mrb[0].mxu0
      %419 = vdwg.mxu0
      %v420 = vadd.f32 %v344, %v415
      %v421 = vld [vmem:[%s196 + $0x3] sm:$0x1]
      %v422 = vld [vmem:[%s196 + $0x7] sm:$0x1]
      %v423 = vpack.c.bf16 %v421, %v421
      %v424 = vpack.c.bf16 %v422, %v422
      %s425 = scalar_lea.vmem %s1, 48
      %v426 = vld [vmem:[%s425] sm:$0xf]
      %v427 = vld [vmem:[%s425 + $0x4] sm:$0xf]
      %v428 = vld [vmem:[%s425 + $0x8] sm:$0xf]
      %v429 = vld [vmem:[%s425 + $0xc] sm:$0xf]
      %v432 = vunpack.c.l.b16 %v423
      %v433 = vunpack.c.l.b16 %v424
      %v434 = vrot.slane %v433, 7
      %v435 = vsel %vm228, %v434, %v432
      %v436 = vpack.c.b16 %v435, %v435
      %v441 = vunpack.c.l.b16 %v426
      %v442 = vunpack.c.l.b16 %v427
      %v443 = vunpack.c.l.b16 %v428
      %v444 = vunpack.c.l.b16 %v429
      %v445 = vpack.c.b16 %v442, %v441
      %v446 = vpack.c.b16 %v444, %v443
      %v450 = vsel %vm243, %v436, 0
      %452 = vmatprep.subr.bf16.mxu0 0
      %453 = vmatpush1.bf16.msra.mxu0 %v445
      %454 = vmatprep.subr.bf16.mxu0 0
      %455 = vmatpush1.bf16.msra.mxu0 %v446
      %456 = vmatprep.subr.bf16.mxu0 0
      %457 = vmatpush1.bf16.msra.mxu0 0
      %458 = vmatprep.subr.bf16.mxu0 0
      %459 = vmatpush1.bf16.msra.mxu0 0
      %460 = vmatprep.subr.bf16.mxu0 0
      %461 = vmatpush1.bf16.msra.mxu0 0
      %462 = vmatprep.subr.bf16.mxu0 0
      %463 = vmatpush1.bf16.msra.mxu0 0
      %464 = vmatprep.subr.bf16.mxu0 0
      %465 = vmatpush1.bf16.msra.mxu0 0
      %466 = vmatprep.subr.bf16.mxu0 0
      %467 = vmatpush1.bf16.msra.mxu0 0
      %468 = vmatprep.subr.bf16.mxu0 0
      %469 = vmatpush1.bf16.msra.mxu0 0
      %470 = vmatprep.subr.bf16.mxu0 0
      %471 = vmatpush1.bf16.msra.mxu0 0
      %472 = vmatprep.subr.bf16.mxu0 0
      %473 = vmatpush1.bf16.msra.mxu0 0
      %474 = vmatprep.subr.bf16.mxu0 0
      %475 = vmatpush1.bf16.msra.mxu0 0
      %476 = vmatprep.subr.bf16.mxu0 0
      %477 = vmatpush1.bf16.msra.mxu0 0
      %478 = vmatprep.subr.bf16.mxu0 0
      %479 = vmatpush1.bf16.msra.mxu0 0
      %480 = vmatprep.subr.bf16.mxu0 0
      %481 = vmatpush1.bf16.msra.mxu0 0
      %482 = vmatprep.subr.bf16.mxu0 0
      %483 = vmatpush1.bf16.msra.mxu0 0
      %484 = vmatprep.mubr.bf16.mxu0 0
      %485 = vmatmul.mubr.bf16.gmra.mrb[0].mxu0 %v450
      %v486 = vpop.f32.mrb[0].mxu0
      %v487 = vadd.f32 0.0, %v486
      %v488 = vpop.f32.mrb[0].mxu0
      %v489 = vpop.f32.mrb[0].mxu0
      %v490 = vpop.f32.mrb[0].mxu0
      %491 = vdwg.mxu0
      %v492 = vadd.f32 %v420, %v487
      %s493 = scalar_lea.vmem %s196, 8
      %v494 = vld [vmem:[%s493] sm:$0x1]
      %v495 = vld [vmem:[%s493 + $0x4] sm:$0x1]
      %v496 = vpack.c.bf16 %v494, %v494
      %v497 = vpack.c.bf16 %v495, %v495
      %s498 = scalar_lea.vmem %s1, 64
      %v499 = vld [vmem:[%s498] sm:$0xf]
      %v500 = vld [vmem:[%s498 + $0x4] sm:$0xf]
      %v501 = vld [vmem:[%s498 + $0x8] sm:$0xf]
      %v502 = vld [vmem:[%s498 + $0xc] sm:$0xf]
      %v505 = vunpack.c.l.b16 %v496
      %v506 = vunpack.c.l.b16 %v497
      %v507 = vrot.slane %v506, 7
      %v508 = vsel %vm228, %v507, %v505
      %v509 = vpack.c.b16 %v508, %v508
      %v514 = vunpack.c.l.b16 %v499
      %v515 = vunpack.c.l.b16 %v500
      %v516 = vunpack.c.l.b16 %v501
      %v517 = vunpack.c.l.b16 %v502
      %v518 = vpack.c.b16 %v515, %v514
      %v519 = vpack.c.b16 %v517, %v516
      %v523 = vsel %vm243, %v509, 0
      %525 = vmatprep.subr.bf16.mxu0 0
      %526 = vmatpush1.bf16.msra.mxu0 %v518
      %527 = vmatprep.subr.bf16.mxu0 0
      %528 = vmatpush1.bf16.msra.mxu0 %v519
      %529 = vmatprep.subr.bf16.mxu0 0
      %530 = vmatpush1.bf16.msra.mxu0 0
      %531 = vmatprep.subr.bf16.mxu0 0
      %532 = vmatpush1.bf16.msra.mxu0 0
      %533 = vmatprep.subr.bf16.mxu0 0
      %534 = vmatpush1.bf16.msra.mxu0 0
      %535 = vmatprep.subr.bf16.mxu0 0
      %536 = vmatpush1.bf16.msra.mxu0 0
      %537 = vmatprep.subr.bf16.mxu0 0
      %538 = vmatpush1.bf16.msra.mxu0 0
      %539 = vmatprep.subr.bf16.mxu0 0
      %540 = vmatpush1.bf16.msra.mxu0 0
      %541 = vmatprep.subr.bf16.mxu0 0
      %542 = vmatpush1.bf16.msra.mxu0 0
      %543 = vmatprep.subr.bf16.mxu0 0
      %544 = vmatpush1.bf16.msra.mxu0 0
      %545 = vmatprep.subr.bf16.mxu0 0
      %546 = vmatpush1.bf16.msra.mxu0 0
      %547 = vmatprep.subr.bf16.mxu0 0
      %548 = vmatpush1.bf16.msra.mxu0 0
      %549 = vmatprep.subr.bf16.mxu0 0
      %550 = vmatpush1.bf16.msra.mxu0 0
      %551 = vmatprep.subr.bf16.mxu0 0
      %552 = vmatpush1.bf16.msra.mxu0 0
      %553 = vmatprep.subr.bf16.mxu0 0
      %554 = vmatpush1.bf16.msra.mxu0 0
      %555 = vmatprep.subr.bf16.mxu0 0
      %556 = vmatpush1.bf16.msra.mxu0 0
      %557 = vmatprep.mubr.bf16.mxu0 0
      %558 = vmatmul.mubr.bf16.gmra.mrb[0].mxu0 %v523
      %v559 = vpop.f32.mrb[0].mxu0
      %v560 = vadd.f32 0.0, %v559
      %v561 = vpop.f32.mrb[0].mxu0
      %v562 = vpop.f32.mrb[0].mxu0
      %v563 = vpop.f32.mrb[0].mxu0
      %564 = vdwg.mxu0
      %v565 = vadd.f32 %v492, %v560
      %v566 = vld [vmem:[%s493 + $0x1] sm:$0x1]
      %v567 = vld [vmem:[%s493 + $0x5] sm:$0x1]
      %v568 = vpack.c.bf16 %v566, %v566
      %v569 = vpack.c.bf16 %v567, %v567
      %s570 = scalar_lea.vmem %s1, 80
      %v571 = vld [vmem:[%s570] sm:$0xf]
      %v572 = vld [vmem:[%s570 + $0x4] sm:$0xf]
      %v573 = vld [vmem:[%s570 + $0x8] sm:$0xf]
      %v574 = vld [vmem:[%s570 + $0xc] sm:$0xf]
      %v577 = vunpack.c.l.b16 %v568
      %v578 = vunpack.c.l.b16 %v569
      %v579 = vrot.slane %v578, 7
      %v580 = vsel %vm228, %v579, %v577
      %v581 = vpack.c.b16 %v580, %v580
      %v586 = vunpack.c.l.b16 %v571
      %v587 = vunpack.c.l.b16 %v572
      %v588 = vunpack.c.l.b16 %v573
      %v589 = vunpack.c.l.b16 %v574
      %v590 = vpack.c.b16 %v587, %v586
      %v591 = vpack.c.b16 %v589, %v588
      %v595 = vsel %vm243, %v581, 0
      %597 = vmatprep.subr.bf16.mxu0 0
      %598 = vmatpush1.bf16.msra.mxu0 %v590
      %599 = vmatprep.subr.bf16.mxu0 0
      %600 = vmatpush1.bf16.msra.mxu0 %v591
      %601 = vmatprep.subr.bf16.mxu0 0
      %602 = vmatpush1.bf16.msra.mxu0 0
      %603 = vmatprep.subr.bf16.mxu0 0
      %604 = vmatpush1.bf16.msra.mxu0 0
      %605 = vmatprep.subr.bf16.mxu0 0
      %606 = vmatpush1.bf16.msra.mxu0 0
      %607 = vmatprep.subr.bf16.mxu0 0
      %608 = vmatpush1.bf16.msra.mxu0 0
      %609 = vmatprep.subr.bf16.mxu0 0
      %610 = vmatpush1.bf16.msra.mxu0 0
      %611 = vmatprep.subr.bf16.mxu0 0
      %612 = vmatpush1.bf16.msra.mxu0 0
      %613 = vmatprep.subr.bf16.mxu0 0
      %614 = vmatpush1.bf16.msra.mxu0 0
      %615 = vmatprep.subr.bf16.mxu0 0
      %616 = vmatpush1.bf16.msra.mxu0 0
      %617 = vmatprep.subr.bf16.mxu0 0
      %618 = vmatpush1.bf16.msra.mxu0 0
      %619 = vmatprep.subr.bf16.mxu0 0
      %620 = vmatpush1.bf16.msra.mxu0 0
      %621 = vmatprep.subr.bf16.mxu0 0
      %622 = vmatpush1.bf16.msra.mxu0 0
      %623 = vmatprep.subr.bf16.mxu0 0
      %624 = vmatpush1.bf16.msra.mxu0 0
      %625 = vmatprep.subr.bf16.mxu0 0
      %626 = vmatpush1.bf16.msra.mxu0 0
      %627 = vmatprep.subr.bf16.mxu0 0
      %628 = vmatpush1.bf16.msra.mxu0 0
      %629 = vmatprep.mubr.bf16.mxu0 0
      %630 = vmatmul.mubr.bf16.gmra.mrb[0].mxu0 %v595
      %v631 = vpop.f32.mrb[0].mxu0
      %v632 = vadd.f32 0.0, %v631
      %v633 = vpop.f32.mrb[0].mxu0
      %v634 = vpop.f32.mrb[0].mxu0
      %v635 = vpop.f32.mrb[0].mxu0
      %636 = vdwg.mxu0
      %v637 = vadd.f32 %v565, %v632
      %v638 = vld [vmem:[%s493 + $0x2] sm:$0x1]
      %v639 = vld [vmem:[%s493 + $0x6] sm:$0x1]
      %v640 = vpack.c.bf16 %v638, %v638
      %v641 = vpack.c.bf16 %v639, %v639
      %s642 = scalar_lea.vmem %s1, 96
      %v643 = vld [vmem:[%s642] sm:$0xf]
      %v644 = vld [vmem:[%s642 + $0x4] sm:$0xf]
      %v645 = vld [vmem:[%s642 + $0x8] sm:$0xf]
      %v646 = vld [vmem:[%s642 + $0xc] sm:$0xf]
      %v649 = vunpack.c.l.b16 %v640
      %v650 = vunpack.c.l.b16 %v641
      %v651 = vrot.slane %v650, 7
      %v652 = vsel %vm228, %v651, %v649
      %v653 = vpack.c.b16 %v652, %v652
      %v658 = vunpack.c.l.b16 %v643
      %v659 = vunpack.c.l.b16 %v644
      %v660 = vunpack.c.l.b16 %v645
      %v661 = vunpack.c.l.b16 %v646
      %v662 = vpack.c.b16 %v659, %v658
      %v663 = vpack.c.b16 %v661, %v660
      %v667 = vsel %vm243, %v653, 0
      %669 = vmatprep.subr.bf16.mxu0 0
      %670 = vmatpush1.bf16.msra.mxu0 %v662
      %671 = vmatprep.subr.bf16.mxu0 0
      %672 = vmatpush1.bf16.msra.mxu0 %v663
      %673 = vmatprep.subr.bf16.mxu0 0
      %674 = vmatpush1.bf16.msra.mxu0 0
      %675 = vmatprep.subr.bf16.mxu0 0
      %676 = vmatpush1.bf16.msra.mxu0 0
      %677 = vmatprep.subr.bf16.mxu0 0
      %678 = vmatpush1.bf16.msra.mxu0 0
      %679 = vmatprep.subr.bf16.mxu0 0
      %680 = vmatpush1.bf16.msra.mxu0 0
      %681 = vmatprep.subr.bf16.mxu0 0
      %682 = vmatpush1.bf16.msra.mxu0 0
      %683 = vmatprep.subr.bf16.mxu0 0
      %684 = vmatpush1.bf16.msra.mxu0 0
      %685 = vmatprep.subr.bf16.mxu0 0
      %686 = vmatpush1.bf16.msra.mxu0 0
      %687 = vmatprep.subr.bf16.mxu0 0
      %688 = vmatpush1.bf16.msra.mxu0 0
      %689 = vmatprep.subr.bf16.mxu0 0
      %690 = vmatpush1.bf16.msra.mxu0 0
      %691 = vmatprep.subr.bf16.mxu0 0
      %692 = vmatpush1.bf16.msra.mxu0 0
      %693 = vmatprep.subr.bf16.mxu0 0
      %694 = vmatpush1.bf16.msra.mxu0 0
      %695 = vmatprep.subr.bf16.mxu0 0
      %696 = vmatpush1.bf16.msra.mxu0 0
      %697 = vmatprep.subr.bf16.mxu0 0
      %698 = vmatpush1.bf16.msra.mxu0 0
      %699 = vmatprep.subr.bf16.mxu0 0
      %700 = vmatpush1.bf16.msra.mxu0 0
      %701 = vmatprep.mubr.bf16.mxu0 0
      %702 = vmatmul.mubr.bf16.gmra.mrb[0].mxu0 %v667
      %v703 = vpop.f32.mrb[0].mxu0
      %v704 = vadd.f32 0.0, %v703
      %v705 = vpop.f32.mrb[0].mxu0
      %v706 = vpop.f32.mrb[0].mxu0
      %v707 = vpop.f32.mrb[0].mxu0
      %708 = vdwg.mxu0
      %v709 = vadd.f32 %v637, %v704
      %v710 = vld [vmem:[%s493 + $0x3] sm:$0x1]
      %v711 = vld [vmem:[%s493 + $0x7] sm:$0x1]
      %v712 = vpack.c.bf16 %v710, %v710
      %v713 = vpack.c.bf16 %v711, %v711
      %s714 = scalar_lea.vmem %s1, 112
      %v715 = vld [vmem:[%s714] sm:$0xf]
      %v716 = vld [vmem:[%s714 + $0x4] sm:$0xf]
      %v717 = vld [vmem:[%s714 + $0x8] sm:$0xf]
      %v718 = vld [vmem:[%s714 + $0xc] sm:$0xf]
      %v721 = vunpack.c.l.b16 %v712
      %v722 = vunpack.c.l.b16 %v713
      %v723 = vrot.slane %v722, 7
      %v724 = vsel %vm228, %v723, %v721
      %v725 = vpack.c.b16 %v724, %v724
      %v730 = vunpack.c.l.b16 %v715
      %v731 = vunpack.c.l.b16 %v716
      %v732 = vunpack.c.l.b16 %v717
      %v733 = vunpack.c.l.b16 %v718
      %v734 = vpack.c.b16 %v731, %v730
      %v735 = vpack.c.b16 %v733, %v732
      %v739 = vsel %vm243, %v725, 0
      %741 = vmatprep.subr.bf16.mxu0 0
      %742 = vmatpush1.bf16.msra.mxu0 %v734
      %743 = vmatprep.subr.bf16.mxu0 0
      %744 = vmatpush1.bf16.msra.mxu0 %v735
      %745 = vmatprep.subr.bf16.mxu0 0
      %746 = vmatpush1.bf16.msra.mxu0 0
      %747 = vmatprep.subr.bf16.mxu0 0
      %748 = vmatpush1.bf16.msra.mxu0 0
      %749 = vmatprep.subr.bf16.mxu0 0
      %750 = vmatpush1.bf16.msra.mxu0 0
      %751 = vmatprep.subr.bf16.mxu0 0
      %752 = vmatpush1.bf16.msra.mxu0 0
      %753 = vmatprep.subr.bf16.mxu0 0
      %754 = vmatpush1.bf16.msra.mxu0 0
      %755 = vmatprep.subr.bf16.mxu0 0
      %756 = vmatpush1.bf16.msra.mxu0 0
      %757 = vmatprep.subr.bf16.mxu0 0
      %758 = vmatpush1.bf16.msra.mxu0 0
      %759 = vmatprep.subr.bf16.mxu0 0
      %760 = vmatpush1.bf16.msra.mxu0 0
      %761 = vmatprep.subr.bf16.mxu0 0
      %762 = vmatpush1.bf16.msra.mxu0 0
      %763 = vmatprep.subr.bf16.mxu0 0
      %764 = vmatpush1.bf16.msra.mxu0 0
      %765 = vmatprep.subr.bf16.mxu0 0
      %766 = vmatpush1.bf16.msra.mxu0 0
      %767 = vmatprep.subr.bf16.mxu0 0
      %768 = vmatpush1.bf16.msra.mxu0 0
      %769 = vmatprep.subr.bf16.mxu0 0
      %770 = vmatpush1.bf16.msra.mxu0 0
      %771 = vmatprep.subr.bf16.mxu0 0
      %772 = vmatpush1.bf16.msra.mxu0 0
      %773 = vmatprep.mubr.bf16.mxu0 0
      %774 = vmatmul.mubr.bf16.gmra.mrb[0].mxu0 %v739
      %v775 = vpop.f32.mrb[0].mxu0
      %v776 = vadd.f32 0.0, %v775
      %v777 = vpop.f32.mrb[0].mxu0
      %v778 = vpop.f32.mrb[0].mxu0
      %v779 = vpop.f32.mrb[0].mxu0
      %780 = vdwg.mxu0
      %v781 = vadd.f32 %v709, %v776
      %s782 = scalar_lea.vmem %s196, 16
      %v783 = vld [vmem:[%s782] sm:$0x1]
      %v784 = vld [vmem:[%s782 + $0x4] sm:$0x1]
      %v785 = vpack.c.bf16 %v783, %v783
      %v786 = vpack.c.bf16 %v784, %v784
      %s787 = scalar_lea.vmem %s1, 128
      %v788 = vld [vmem:[%s787] sm:$0xf]
      %v789 = vld [vmem:[%s787 + $0x4] sm:$0xf]
      %v790 = vld [vmem:[%s787 + $0x8] sm:$0xf]
      %v791 = vld [vmem:[%s787 + $0xc] sm:$0xf]
      %v794 = vunpack.c.l.b16 %v785
      %v795 = vunpack.c.l.b16 %v786
      %v796 = vrot.slane %v795, 7
      %v797 = vsel %vm228, %v796, %v794
      %v798 = vpack.c.b16 %v797, %v797
      %v803 = vunpack.c.l.b16 %v788
      %v804 = vunpack.c.l.b16 %v789
      %v805 = vunpack.c.l.b16 %v790
      %v806 = vunpack.c.l.b16 %v791
      %v807 = vpack.c.b16 %v804, %v803
      %v808 = vpack.c.b16 %v806, %v805
      %v812 = vsel %vm243, %v798, 0
      %814 = vmatprep.subr.bf16.mxu0 0
      %815 = vmatpush1.bf16.msra.mxu0 %v807
      %816 = vmatprep.subr.bf16.mxu0 0
      %817 = vmatpush1.bf16.msra.mxu0 %v808
      %818 = vmatprep.subr.bf16.mxu0 0
      %819 = vmatpush1.bf16.msra.mxu0 0
      %820 = vmatprep.subr.bf16.mxu0 0
      %821 = vmatpush1.bf16.msra.mxu0 0
      %822 = vmatprep.subr.bf16.mxu0 0
      %823 = vmatpush1.bf16.msra.mxu0 0
      %824 = vmatprep.subr.bf16.mxu0 0
      %825 = vmatpush1.bf16.msra.mxu0 0
      %826 = vmatprep.subr.bf16.mxu0 0
      %827 = vmatpush1.bf16.msra.mxu0 0
      %828 = vmatprep.subr.bf16.mxu0 0
      %829 = vmatpush1.bf16.msra.mxu0 0
      %830 = vmatprep.subr.bf16.mxu0 0
      %831 = vmatpush1.bf16.msra.mxu0 0
      %832 = vmatprep.subr.bf16.mxu0 0
      %833 = vmatpush1.bf16.msra.mxu0 0
      %834 = vmatprep.subr.bf16.mxu0 0
      %835 = vmatpush1.bf16.msra.mxu0 0
      %836 = vmatprep.subr.bf16.mxu0 0
      %837 = vmatpush1.bf16.msra.mxu0 0
      %838 = vmatprep.subr.bf16.mxu0 0
      %839 = vmatpush1.bf16.msra.mxu0 0
      %840 = vmatprep.subr.bf16.mxu0 0
      %841 = vmatpush1.bf16.msra.mxu0 0
      %842 = vmatprep.subr.bf16.mxu0 0
      %843 = vmatpush1.bf16.msra.mxu0 0
      %844 = vmatprep.subr.bf16.mxu0 0
      %845 = vmatpush1.bf16.msra.mxu0 0
      %846 = vmatprep.mubr.bf16.mxu0 0
      %847 = vmatmul.mubr.bf16.gmra.mrb[0].mxu0 %v812
      %v848 = vpop.f32.mrb[0].mxu0
      %v849 = vadd.f32 0.0, %v848
      %v850 = vpop.f32.mrb[0].mxu0
      %v851 = vpop.f32.mrb[0].mxu0
      %v852 = vpop.f32.mrb[0].mxu0
      %853 = vdwg.mxu0
      %v854 = vadd.f32 %v781, %v849
      %v855 = vld [vmem:[%s782 + $0x1] sm:$0x1]
      %v856 = vld [vmem:[%s782 + $0x5] sm:$0x1]
      %v857 = vpack.c.bf16 %v855, %v855
      %v858 = vpack.c.bf16 %v856, %v856
      %s859 = scalar_lea.vmem %s1, 144
      %v860 = vld [vmem:[%s859] sm:$0xf]
      %v861 = vld [vmem:[%s859 + $0x4] sm:$0xf]
      %v862 = vld [vmem:[%s859 + $0x8] sm:$0xf]
      %v863 = vld [vmem:[%s859 + $0xc] sm:$0xf]
      %v866 = vunpack.c.l.b16 %v857
      %v867 = vunpack.c.l.b16 %v858
      %v868 = vrot.slane %v867, 7
      %v869 = vsel %vm228, %v868, %v866
      %v870 = vpack.c.b16 %v869, %v869
      %v875 = vunpack.c.l.b16 %v860
      %v876 = vunpack.c.l.b16 %v861
      %v877 = vunpack.c.l.b16 %v862
      %v878 = vunpack.c.l.b16 %v863
      %v879 = vpack.c.b16 %v876, %v875
      %v880 = vpack.c.b16 %v878, %v877
      %v884 = vsel %vm243, %v870, 0
      %886 = vmatprep.subr.bf16.mxu0 0
      %887 = vmatpush1.bf16.msra.mxu0 %v879
      %888 = vmatprep.subr.bf16.mxu0 0
      %889 = vmatpush1.bf16.msra.mxu0 %v880
      %890 = vmatprep.subr.bf16.mxu0 0
      %891 = vmatpush1.bf16.msra.mxu0 0
      %892 = vmatprep.subr.bf16.mxu0 0
      %893 = vmatpush1.bf16.msra.mxu0 0
      %894 = vmatprep.subr.bf16.mxu0 0
      %895 = vmatpush1.bf16.msra.mxu0 0
      %896 = vmatprep.subr.bf16.mxu0 0
      %897 = vmatpush1.bf16.msra.mxu0 0
      %898 = vmatprep.subr.bf16.mxu0 0
      %899 = vmatpush1.bf16.msra.mxu0 0
      %900 = vmatprep.subr.bf16.mxu0 0
      %901 = vmatpush1.bf16.msra.mxu0 0
      %902 = vmatprep.subr.bf16.mxu0 0
      %903 = vmatpush1.bf16.msra.mxu0 0
      %904 = vmatprep.subr.bf16.mxu0 0
      %905 = vmatpush1.bf16.msra.mxu0 0
      %906 = vmatprep.subr.bf16.mxu0 0
      %907 = vmatpush1.bf16.msra.mxu0 0
      %908 = vmatprep.subr.bf16.mxu0 0
      %909 = vmatpush1.bf16.msra.mxu0 0
      %910 = vmatprep.subr.bf16.mxu0 0
      %911 = vmatpush1.bf16.msra.mxu0 0
      %912 = vmatprep.subr.bf16.mxu0 0
      %913 = vmatpush1.bf16.msra.mxu0 0
      %914 = vmatprep.subr.bf16.mxu0 0
      %915 = vmatpush1.bf16.msra.mxu0 0
      %916 = vmatprep.subr.bf16.mxu0 0
      %917 = vmatpush1.bf16.msra.mxu0 0
      %918 = vmatprep.mubr.bf16.mxu0 0
      %919 = vmatmul.mubr.bf16.gmra.mrb[0].mxu0 %v884
      %v920 = vpop.f32.mrb[0].mxu0
      %v921 = vadd.f32 0.0, %v920
      %v922 = vpop.f32.mrb[0].mxu0
      %v923 = vpop.f32.mrb[0].mxu0
      %v924 = vpop.f32.mrb[0].mxu0
      %925 = vdwg.mxu0
      %v926 = vadd.f32 %v854, %v921
      %v927 = vld [vmem:[%s782 + $0x2] sm:$0x1]
      %v928 = vld [vmem:[%s782 + $0x6] sm:$0x1]
      %v929 = vpack.c.bf16 %v927, %v927
      %v930 = vpack.c.bf16 %v928, %v928
      %s931 = scalar_lea.vmem %s1, 160
      %v932 = vld [vmem:[%s931] sm:$0xf]
      %v933 = vld [vmem:[%s931 + $0x4] sm:$0xf]
      %v934 = vld [vmem:[%s931 + $0x8] sm:$0xf]
      %v935 = vld [vmem:[%s931 + $0xc] sm:$0xf]
      %v938 = vunpack.c.l.b16 %v929
      %v939 = vunpack.c.l.b16 %v930
      %v940 = vrot.slane %v939, 7
      %v941 = vsel %vm228, %v940, %v938
      %v942 = vpack.c.b16 %v941, %v941
      %v947 = vunpack.c.l.b16 %v932
      %v948 = vunpack.c.l.b16 %v933
      %v949 = vunpack.c.l.b16 %v934
      %v950 = vunpack.c.l.b16 %v935
      %v951 = vpack.c.b16 %v948, %v947
      %v952 = vpack.c.b16 %v950, %v949
      %v956 = vsel %vm243, %v942, 0
      %958 = vmatprep.subr.bf16.mxu0 0
      %959 = vmatpush1.bf16.msra.mxu0 %v951
      %960 = vmatprep.subr.bf16.mxu0 0
      %961 = vmatpush1.bf16.msra.mxu0 %v952
      %962 = vmatprep.subr.bf16.mxu0 0
      %963 = vmatpush1.bf16.msra.mxu0 0
      %964 = vmatprep.subr.bf16.mxu0 0
      %965 = vmatpush1.bf16.msra.mxu0 0
      %966 = vmatprep.subr.bf16.mxu0 0
      %967 = vmatpush1.bf16.msra.mxu0 0
      %968 = vmatprep.subr.bf16.mxu0 0
      %969 = vmatpush1.bf16.msra.mxu0 0
      %970 = vmatprep.subr.bf16.mxu0 0
      %971 = vmatpush1.bf16.msra.mxu0 0
      %972 = vmatprep.subr.bf16.mxu0 0
      %973 = vmatpush1.bf16.msra.mxu0 0
      %974 = vmatprep.subr.bf16.mxu0 0
      %975 = vmatpush1.bf16.msra.mxu0 0
      %976 = vmatprep.subr.bf16.mxu0 0
      %977 = vmatpush1.bf16.msra.mxu0 0
      %978 = vmatprep.subr.bf16.mxu0 0
      %979 = vmatpush1.bf16.msra.mxu0 0
      %980 = vmatprep.subr.bf16.mxu0 0
      %981 = vmatpush1.bf16.msra.mxu0 0
      %982 = vmatprep.subr.bf16.mxu0 0
      %983 = vmatpush1.bf16.msra.mxu0 0
      %984 = vmatprep.subr.bf16.mxu0 0
      %985 = vmatpush1.bf16.msra.mxu0 0
      %986 = vmatprep.subr.bf16.mxu0 0
      %987 = vmatpush1.bf16.msra.mxu0 0
      %988 = vmatprep.subr.bf16.mxu0 0
      %989 = vmatpush1.bf16.msra.mxu0 0
      %990 = vmatprep.mubr.bf16.mxu0 0
      %991 = vmatmul.mubr.bf16.gmra.mrb[0].mxu0 %v956
      %v992 = vpop.f32.mrb[0].mxu0
      %v993 = vadd.f32 0.0, %v992
      %v994 = vpop.f32.mrb[0].mxu0
      %v995 = vpop.f32.mrb[0].mxu0
      %v996 = vpop.f32.mrb[0].mxu0
      %997 = vdwg.mxu0
      %v998 = vadd.f32 %v926, %v993
      %v999 = vld [vmem:[%s782 + $0x3] sm:$0x1]
      %v1000 = vld [vmem:[%s782 + $0x7] sm:$0x1]
      %v1001 = vpack.c.bf16 %v999, %v999
      %v1002 = vpack.c.bf16 %v1000, %v1000
      %s1003 = scalar_lea.vmem %s1, 176
      %v1004 = vld [vmem:[%s1003] sm:$0xf]
      %v1005 = vld [vmem:[%s1003 + $0x4] sm:$0xf]
      %v1006 = vld [vmem:[%s1003 + $0x8] sm:$0xf]
      %v1007 = vld [vmem:[%s1003 + $0xc] sm:$0xf]
      %v1010 = vunpack.c.l.b16 %v1001
      %v1011 = vunpack.c.l.b16 %v1002
      %v1012 = vrot.slane %v1011, 7
      %v1013 = vsel %vm228, %v1012, %v1010
      %v1014 = vpack.c.b16 %v1013, %v1013
      %v1019 = vunpack.c.l.b16 %v1004
      %v1020 = vunpack.c.l.b16 %v1005
      %v1021 = vunpack.c.l.b16 %v1006
      %v1022 = vunpack.c.l.b16 %v1007
      %v1023 = vpack.c.b16 %v1020, %v1019
      %v1024 = vpack.c.b16 %v1022, %v1021
      %v1028 = vsel %vm243, %v1014, 0
      %1030 = vmatprep.subr.bf16.mxu0 0
      %1031 = vmatpush1.bf16.msra.mxu0 %v1023
      %1032 = vmatprep.subr.bf16.mxu0 0
      %1033 = vmatpush1.bf16.msra.mxu0 %v1024
      %1034 = vmatprep.subr.bf16.mxu0 0
      %1035 = vmatpush1.bf16.msra.mxu0 0
      %1036 = vmatprep.subr.bf16.mxu0 0
      %1037 = vmatpush1.bf16.msra.mxu0 0
      %1038 = vmatprep.subr.bf16.mxu0 0
      %1039 = vmatpush1.bf16.msra.mxu0 0
      %1040 = vmatprep.subr.bf16.mxu0 0
      %1041 = vmatpush1.bf16.msra.mxu0 0
      %1042 = vmatprep.subr.bf16.mxu0 0
      %1043 = vmatpush1.bf16.msra.mxu0 0
      %1044 = vmatprep.subr.bf16.mxu0 0
      %1045 = vmatpush1.bf16.msra.mxu0 0
      %1046 = vmatprep.subr.bf16.mxu0 0
      %1047 = vmatpush1.bf16.msra.mxu0 0
      %1048 = vmatprep.subr.bf16.mxu0 0
      %1049 = vmatpush1.bf16.msra.mxu0 0
      %1050 = vmatprep.subr.bf16.mxu0 0
      %1051 = vmatpush1.bf16.msra.mxu0 0
      %1052 = vmatprep.subr.bf16.mxu0 0
      %1053 = vmatpush1.bf16.msra.mxu0 0
      %1054 = vmatprep.subr.bf16.mxu0 0
      %1055 = vmatpush1.bf16.msra.mxu0 0
      %1056 = vmatprep.subr.bf16.mxu0 0
      %1057 = vmatpush1.bf16.msra.mxu0 0
      %1058 = vmatprep.subr.bf16.mxu0 0
      %1059 = vmatpush1.bf16.msra.mxu0 0
      %1060 = vmatprep.subr.bf16.mxu0 0
      %1061 = vmatpush1.bf16.msra.mxu0 0
      %1062 = vmatprep.mubr.bf16.mxu0 0
      %1063 = vmatmul.mubr.bf16.gmra.mrb[0].mxu0 %v1028
      %v1064 = vpop.f32.mrb[0].mxu0
      %v1065 = vadd.f32 0.0, %v1064
      %v1066 = vpop.f32.mrb[0].mxu0
      %v1067 = vpop.f32.mrb[0].mxu0
      %v1068 = vpop.f32.mrb[0].mxu0
      %1069 = vdwg.mxu0
      %v1070 = vadd.f32 %v998, %v1065
      %s1071 = scalar_lea.vmem %s196, 24
      %v1072 = vld [vmem:[%s1071] sm:$0x1]
      %v1073 = vld [vmem:[%s1071 + $0x4] sm:$0x1]
      %v1074 = vpack.c.bf16 %v1072, %v1072
      %v1075 = vpack.c.bf16 %v1073, %v1073
      %s1076 = scalar_lea.vmem %s1, 192
      %v1077 = vld [vmem:[%s1076] sm:$0xf]
      %v1078 = vld [vmem:[%s1076 + $0x4] sm:$0xf]
      %v1079 = vld [vmem:[%s1076 + $0x8] sm:$0xf]
      %v1080 = vld [vmem:[%s1076 + $0xc] sm:$0xf]
      %v1083 = vunpack.c.l.b16 %v1074
      %v1084 = vunpack.c.l.b16 %v1075
      %v1085 = vrot.slane %v1084, 7
      %v1086 = vsel %vm228, %v1085, %v1083
      %v1087 = vpack.c.b16 %v1086, %v1086
      %v1092 = vunpack.c.l.b16 %v1077
      %v1093 = vunpack.c.l.b16 %v1078
      %v1094 = vunpack.c.l.b16 %v1079
      %v1095 = vunpack.c.l.b16 %v1080
      %v1096 = vpack.c.b16 %v1093, %v1092
      %v1097 = vpack.c.b16 %v1095, %v1094
      %v1101 = vsel %vm243, %v1087, 0
      %1103 = vmatprep.subr.bf16.mxu0 0
      %1104 = vmatpush1.bf16.msra.mxu0 %v1096
      %1105 = vmatprep.subr.bf16.mxu0 0
      %1106 = vmatpush1.bf16.msra.mxu0 %v1097
      %1107 = vmatprep.subr.bf16.mxu0 0
      %1108 = vmatpush1.bf16.msra.mxu0 0
      %1109 = vmatprep.subr.bf16.mxu0 0
      %1110 = vmatpush1.bf16.msra.mxu0 0
      %1111 = vmatprep.subr.bf16.mxu0 0
      %1112 = vmatpush1.bf16.msra.mxu0 0
      %1113 = vmatprep.subr.bf16.mxu0 0
      %1114 = vmatpush1.bf16.msra.mxu0 0
      %1115 = vmatprep.subr.bf16.mxu0 0
      %1116 = vmatpush1.bf16.msra.mxu0 0
      %1117 = vmatprep.subr.bf16.mxu0 0
      %1118 = vmatpush1.bf16.msra.mxu0 0
      %1119 = vmatprep.subr.bf16.mxu0 0
      %1120 = vmatpush1.bf16.msra.mxu0 0
      %1121 = vmatprep.subr.bf16.mxu0 0
      %1122 = vmatpush1.bf16.msra.mxu0 0
      %1123 = vmatprep.subr.bf16.mxu0 0
      %1124 = vmatpush1.bf16.msra.mxu0 0
      %1125 = vmatprep.subr.bf16.mxu0 0
      %1126 = vmatpush1.bf16.msra.mxu0 0
      %1127 = vmatprep.subr.bf16.mxu0 0
      %1128 = vmatpush1.bf16.msra.mxu0 0
      %1129 = vmatprep.subr.bf16.mxu0 0
      %1130 = vmatpush1.bf16.msra.mxu0 0
      %1131 = vmatprep.subr.bf16.mxu0 0
      %1132 = vmatpush1.bf16.msra.mxu0 0
      %1133 = vmatprep.subr.bf16.mxu0 0
      %1134 = vmatpush1.bf16.msra.mxu0 0
      %1135 = vmatprep.mubr.bf16.mxu0 0
      %1136 = vmatmul.mubr.bf16.gmra.mrb[0].mxu0 %v1101
      %v1137 = vpop.f32.mrb[0].mxu0
      %v1138 = vadd.f32 0.0, %v1137
      %v1139 = vpop.f32.mrb[0].mxu0
      %v1140 = vpop.f32.mrb[0].mxu0
      %v1141 = vpop.f32.mrb[0].mxu0
      %1142 = vdwg.mxu0
      %v1143 = vadd.f32 %v1070, %v1138
      %v1144 = vld [vmem:[%s1071 + $0x1] sm:$0x1]
      %v1145 = vld [vmem:[%s1071 + $0x5] sm:$0x1]
      %v1146 = vpack.c.bf16 %v1144, %v1144
      %v1147 = vpack.c.bf16 %v1145, %v1145
      %s1148 = scalar_lea.vmem %s1, 208
      %v1149 = vld [vmem:[%s1148] sm:$0xf]
      %v1150 = vld [vmem:[%s1148 + $0x4] sm:$0xf]
      %v1151 = vld [vmem:[%s1148 + $0x8] sm:$0xf]
      %v1152 = vld [vmem:[%s1148 + $0xc] sm:$0xf]
      %v1155 = vunpack.c.l.b16 %v1146
      %v1156 = vunpack.c.l.b16 %v1147
      %v1157 = vrot.slane %v1156, 7
      %v1158 = vsel %vm228, %v1157, %v1155
      %v1159 = vpack.c.b16 %v1158, %v1158
      %v1164 = vunpack.c.l.b16 %v1149
      %v1165 = vunpack.c.l.b16 %v1150
      %v1166 = vunpack.c.l.b16 %v1151
      %v1167 = vunpack.c.l.b16 %v1152
      %v1168 = vpack.c.b16 %v1165, %v1164
      %v1169 = vpack.c.b16 %v1167, %v1166
      %v1173 = vsel %vm243, %v1159, 0
      %1175 = vmatprep.subr.bf16.mxu0 0
      %1176 = vmatpush1.bf16.msra.mxu0 %v1168
      %1177 = vmatprep.subr.bf16.mxu0 0
      %1178 = vmatpush1.bf16.msra.mxu0 %v1169
      %1179 = vmatprep.subr.bf16.mxu0 0
      %1180 = vmatpush1.bf16.msra.mxu0 0
      %1181 = vmatprep.subr.bf16.mxu0 0
      %1182 = vmatpush1.bf16.msra.mxu0 0
      %1183 = vmatprep.subr.bf16.mxu0 0
      %1184 = vmatpush1.bf16.msra.mxu0 0
      %1185 = vmatprep.subr.bf16.mxu0 0
      %1186 = vmatpush1.bf16.msra.mxu0 0
      %1187 = vmatprep.subr.bf16.mxu0 0
      %1188 = vmatpush1.bf16.msra.mxu0 0
      %1189 = vmatprep.subr.bf16.mxu0 0
      %1190 = vmatpush1.bf16.msra.mxu0 0
      %1191 = vmatprep.subr.bf16.mxu0 0
      %1192 = vmatpush1.bf16.msra.mxu0 0
      %1193 = vmatprep.subr.bf16.mxu0 0
      %1194 = vmatpush1.bf16.msra.mxu0 0
      %1195 = vmatprep.subr.bf16.mxu0 0
      %1196 = vmatpush1.bf16.msra.mxu0 0
      %1197 = vmatprep.subr.bf16.mxu0 0
      %1198 = vmatpush1.bf16.msra.mxu0 0
      %1199 = vmatprep.subr.bf16.mxu0 0
      %1200 = vmatpush1.bf16.msra.mxu0 0
      %1201 = vmatprep.subr.bf16.mxu0 0
      %1202 = vmatpush1.bf16.msra.mxu0 0
      %1203 = vmatprep.subr.bf16.mxu0 0
      %1204 = vmatpush1.bf16.msra.mxu0 0
      %1205 = vmatprep.subr.bf16.mxu0 0
      %1206 = vmatpush1.bf16.msra.mxu0 0
      %1207 = vmatprep.mubr.bf16.mxu0 0
      %1208 = vmatmul.mubr.bf16.gmra.mrb[0].mxu0 %v1173
      %v1209 = vpop.f32.mrb[0].mxu0
      %v1210 = vadd.f32 0.0, %v1209
      %v1211 = vpop.f32.mrb[0].mxu0
      %v1212 = vpop.f32.mrb[0].mxu0
      %v1213 = vpop.f32.mrb[0].mxu0
      %1214 = vdwg.mxu0
      %v1215 = vadd.f32 %v1143, %v1210
      %v1216 = vld [vmem:[%s1071 + $0x2] sm:$0x1]
      %v1217 = vld [vmem:[%s1071 + $0x6] sm:$0x1]
      %v1218 = vpack.c.bf16 %v1216, %v1216
      %v1219 = vpack.c.bf16 %v1217, %v1217
      %s1220 = scalar_lea.vmem %s1, 224
      %v1221 = vld [vmem:[%s1220] sm:$0xf]
      %v1222 = vld [vmem:[%s1220 + $0x4] sm:$0xf]
      %v1223 = vld [vmem:[%s1220 + $0x8] sm:$0xf]
      %v1224 = vld [vmem:[%s1220 + $0xc] sm:$0xf]
      %v1227 = vunpack.c.l.b16 %v1218
      %v1228 = vunpack.c.l.b16 %v1219
      %v1229 = vrot.slane %v1228, 7
      %v1230 = vsel %vm228, %v1229, %v1227
      %v1231 = vpack.c.b16 %v1230, %v1230
      %v1236 = vunpack.c.l.b16 %v1221
      %v1237 = vunpack.c.l.b16 %v1222
      %v1238 = vunpack.c.l.b16 %v1223
      %v1239 = vunpack.c.l.b16 %v1224
      %v1240 = vpack.c.b16 %v1237, %v1236
      %v1241 = vpack.c.b16 %v1239, %v1238
      %v1245 = vsel %vm243, %v1231, 0
      %1247 = vmatprep.subr.bf16.mxu0 0
      %1248 = vmatpush1.bf16.msra.mxu0 %v1240
      %1249 = vmatprep.subr.bf16.mxu0 0
      %1250 = vmatpush1.bf16.msra.mxu0 %v1241
      %1251 = vmatprep.subr.bf16.mxu0 0
      %1252 = vmatpush1.bf16.msra.mxu0 0
      %1253 = vmatprep.subr.bf16.mxu0 0
      %1254 = vmatpush1.bf16.msra.mxu0 0
      %1255 = vmatprep.subr.bf16.mxu0 0
      %1256 = vmatpush1.bf16.msra.mxu0 0
      %1257 = vmatprep.subr.bf16.mxu0 0
      %1258 = vmatpush1.bf16.msra.mxu0 0
      %1259 = vmatprep.subr.bf16.mxu0 0
      %1260 = vmatpush1.bf16.msra.mxu0 0
      %1261 = vmatprep.subr.bf16.mxu0 0
      %1262 = vmatpush1.bf16.msra.mxu0 0
      %1263 = vmatprep.subr.bf16.mxu0 0
      %1264 = vmatpush1.bf16.msra.mxu0 0
      %1265 = vmatprep.subr.bf16.mxu0 0
      %1266 = vmatpush1.bf16.msra.mxu0 0
      %1267 = vmatprep.subr.bf16.mxu0 0
      %1268 = vmatpush1.bf16.msra.mxu0 0
      %1269 = vmatprep.subr.bf16.mxu0 0
      %1270 = vmatpush1.bf16.msra.mxu0 0
      %1271 = vmatprep.subr.bf16.mxu0 0
      %1272 = vmatpush1.bf16.msra.mxu0 0
      %1273 = vmatprep.subr.bf16.mxu0 0
      %1274 = vmatpush1.bf16.msra.mxu0 0
      %1275 = vmatprep.subr.bf16.mxu0 0
      %1276 = vmatpush1.bf16.msra.mxu0 0
      %1277 = vmatprep.subr.bf16.mxu0 0
      %1278 = vmatpush1.bf16.msra.mxu0 0
      %1279 = vmatprep.mubr.bf16.mxu0 0
      %1280 = vmatmul.mubr.bf16.gmra.mrb[0].mxu0 %v1245
      %v1281 = vpop.f32.mrb[0].mxu0
      %v1282 = vadd.f32 0.0, %v1281
      %v1283 = vpop.f32.mrb[0].mxu0
      %v1284 = vpop.f32.mrb[0].mxu0
      %v1285 = vpop.f32.mrb[0].mxu0
      %1286 = vdwg.mxu0
      %v1287 = vadd.f32 %v1215, %v1282
      %v1288 = vld [vmem:[%s1071 + $0x3] sm:$0x1]
      %v1289 = vld [vmem:[%s1071 + $0x7] sm:$0x1]
      %v1290 = vpack.c.bf16 %v1288, %v1288
      %v1291 = vpack.c.bf16 %v1289, %v1289
      %s1292 = scalar_lea.vmem %s1, 240
      %v1293 = vld [vmem:[%s1292] sm:$0xf]
      %v1294 = vld [vmem:[%s1292 + $0x4] sm:$0xf]
      %v1295 = vld [vmem:[%s1292 + $0x8] sm:$0xf]
      %v1296 = vld [vmem:[%s1292 + $0xc] sm:$0xf]
      %v1299 = vunpack.c.l.b16 %v1290
      %v1300 = vunpack.c.l.b16 %v1291
      %v1301 = vrot.slane %v1300, 7
      %v1302 = vsel %vm228, %v1301, %v1299
      %v1303 = vpack.c.b16 %v1302, %v1302
      %v1308 = vunpack.c.l.b16 %v1293
      %v1309 = vunpack.c.l.b16 %v1294
      %v1310 = vunpack.c.l.b16 %v1295
      %v1311 = vunpack.c.l.b16 %v1296
      %v1312 = vpack.c.b16 %v1309, %v1308
      %v1313 = vpack.c.b16 %v1311, %v1310
      %v1317 = vsel %vm243, %v1303, 0
      %1319 = vmatprep.subr.bf16.mxu0 0
      %1320 = vmatpush1.bf16.msra.mxu0 %v1312
      %1321 = vmatprep.subr.bf16.mxu0 0
      %1322 = vmatpush1.bf16.msra.mxu0 %v1313
      %1323 = vmatprep.subr.bf16.mxu0 0
      %1324 = vmatpush1.bf16.msra.mxu0 0
      %1325 = vmatprep.subr.bf16.mxu0 0
      %1326 = vmatpush1.bf16.msra.mxu0 0
      %1327 = vmatprep.subr.bf16.mxu0 0
      %1328 = vmatpush1.bf16.msra.mxu0 0
      %1329 = vmatprep.subr.bf16.mxu0 0
      %1330 = vmatpush1.bf16.msra.mxu0 0
      %1331 = vmatprep.subr.bf16.mxu0 0
      %1332 = vmatpush1.bf16.msra.mxu0 0
      %1333 = vmatprep.subr.bf16.mxu0 0
      %1334 = vmatpush1.bf16.msra.mxu0 0
      %1335 = vmatprep.subr.bf16.mxu0 0
      %1336 = vmatpush1.bf16.msra.mxu0 0
      %1337 = vmatprep.subr.bf16.mxu0 0
      %1338 = vmatpush1.bf16.msra.mxu0 0
      %1339 = vmatprep.subr.bf16.mxu0 0
      %1340 = vmatpush1.bf16.msra.mxu0 0
      %1341 = vmatprep.subr.bf16.mxu0 0
      %1342 = vmatpush1.bf16.msra.mxu0 0
      %1343 = vmatprep.subr.bf16.mxu0 0
      %1344 = vmatpush1.bf16.msra.mxu0 0
      %1345 = vmatprep.subr.bf16.mxu0 0
      %1346 = vmatpush1.bf16.msra.mxu0 0
      %1347 = vmatprep.subr.bf16.mxu0 0
      %1348 = vmatpush1.bf16.msra.mxu0 0
      %1349 = vmatprep.subr.bf16.mxu0 0
      %1350 = vmatpush1.bf16.msra.mxu0 0
      %1351 = vmatprep.mubr.bf16.mxu0 0
      %1352 = vmatmul.mubr.bf16.gmra.mrb[0].mxu0 %v1317
      %v1353 = vpop.f32.mrb[0].mxu0
      %v1354 = vadd.f32 0.0, %v1353
      %v1355 = vpop.f32.mrb[0].mxu0
      %v1356 = vpop.f32.mrb[0].mxu0
      %v1357 = vpop.f32.mrb[0].mxu0
      %1358 = vdwg.mxu0
      %v1359 = vadd.f32 %v1287, %v1354
      %v1360 = vld [vmem:[%s2] sm:$0x1]
      %v1362 = vlaneseq
      %v1363 = vshrl.u32 %v1362, 7
      %v1364 = vsub.s32 0, %v1363
      %v1365 = vrot.slane %v1360, %v1364
      %v1367 = vadd.f32 %v1359, %v1365
      %vm1368 = vcmask 254976
      %1369 = vst.msk [vmem:[%s204] sm:$0x3] %vm1368, %v1367
      %p1370 = scmp.lt.s32.totalorder %s18, 1
      %s1371 = scalar_select %p1370, %s18, 1
      %p1372 = scmp.lt.s32.totalorder %s19, 1
      %s1373 = scalar_select %p1372, %s19, 1
      %s1374 = smul.addr %s1371, 2
      %s1375 = sadd.s32 %s1373, %s1374
      %s1376 = smul.addr %s1375, 2
      %s1377 = scalar_lea.vmem %s3, %s1376
      // Predicated region
      $region33: #{partitioner_forward.6} parent=31 // pred_check
        %p1378 = pneg %p116
      $region34: #{partitioner_forward.6} parent=31 // pred_check_branch
        %1380 = sbr.rel (%p1378) target = $region36
      $region35: #{partitioner_forward.6} parent=31 // pred_region
        _
      $region36: #{partitioner_forward.6} parent=31 // pred_fallthru
        _
    $region32: #{partitioner_forward.6} parent=5 // pred_fallthru
      _
    %p1381 = scmp.le.s32.totalorder 2, %s9
    // Predicated region
    $region37: #{partitioner_forward.6} parent=5 // pred_check
      %p1382 = pneg %p1381
    $region38: #{partitioner_forward.6} parent=5 // pred_check_branch
      %1384 = sbr.rel (%p1382) target = $region40
    $region39: #{partitioner_forward.6} parent=5 // pred_region
      %s1385 = ssub.s32 %s9, 2
      // Predicated region
      $region41: #{partitioner_forward.6} parent=39 // pred_check
        %p1386 = pneg %p122
      $region42: #{partitioner_forward.6} parent=39 // pred_check_branch
        %1388 = sbr.rel (%p1386) target = $region44
      $region43: #{partitioner_forward.6} parent=39 // pred_region
        %p1389 = scmp.lt.s32.totalorder %s20, 1
        %s1390 = scalar_select %p1389, %s20, 1
        %p1391 = scmp.lt.s32.totalorder %s21, 1
        %s1392 = scalar_select %p1391, %s21, 1
        %s1393 = smul.addr %s1390, 2
        %s1394 = sadd.s32 %s1392, %s1393
        %s1395 = smul.addr %s1394, 2
        %s1396 = scalar_lea.vmem %s3, %s1395
      $region44: #{partitioner_forward.6} parent=39 // pred_fallthru
        _
    $region40: #{partitioner_forward.6} parent=5 // pred_fallthru
      _
  $region6: #{partitioner_forward.6} parent=0 // loop_footer
    %s13 = sadd.s32 1, %s9
  $region7: #{partitioner_forward.6} parent=0 // loop_footer_branch
    %8 = sbr.rel target = $region3
  $region8: #{partitioner_forward.6} parent=0 // loop_exit
    _

// kernel: partitioner_forward.9
$region0: #{partitioner_forward.9}
  #allocation0 [shape = 'u32[]', space=smem, size = 0x4, offset = 0x4, fixed_abs, tag = 'smem constant byte address 0x4 - core index']
  #allocation1 [shape = 'u32[144,128]{1,0:T(1,128)}', space=vmem, size = 0x12000, scoped, tag = 'internal scratch']
  %s0 = inlined_call_operand.vmem [shape: f32[2,4,32], index: 0, kind: input, shape index: {}]
  %s1 = inlined_call_operand.vmem [shape: f32[1,4,32], index: 1, kind: input, shape index: {}]
  %s2 = inlined_call_operand.vmem [shape: bf16[32,64], index: 2, kind: input, shape index: {}]
  %s3 = inlined_call_operand.vmem [shape: f32[1,64], index: 3, kind: input, shape index: {}]
  %s4 = inlined_call_operand.vmem [shape: f32[2,4,64], index: 4, kind: output, shape index: {}]
  %s5 = sld [smem:[#allocation0]]
  $region49: #{partitioner_forward.9} parent=0
    _
  %s7 = ssub.s32 1, %s5
  %s8 = scalar_select 0, %s7, %s5
  loop: start=0, step=1, limit=4
  $region2: #{partitioner_forward.9} parent=0 // loop_pre_header
    _
  $region3: #{partitioner_forward.9} parent=0 // loop_header
    %s10 = sphi 0, %s14
    %p11 = scmp.ge.s32.totalorder %s10, 4
    %s17 = sphi 0, %s29
    %s18 = sphi 0, %s25
    %s19 = sphi 0, %s17
    %s20 = sphi 0, %s18
    %s21 = sphi 0, %s19
    %s22 = sphi 0, %s20
    %s34 = sphi 0, %s36
    %s37 = sphi 0, %s34
    %s38 = sphi 0, %s37
    %s54 = sphi 0, %s38
    %s60 = sphi 0, %s62
    %s63 = sphi 0, %s60
    %s64 = sphi 0, %s63
    %s80 = sphi 0, %s64
    %s84 = sphi 0, %s84
    %s86 = sphi 0, %s84
    %s87 = sphi 0, %s86
    %s101 = sphi 0, %s87
    %s105 = sphi 0, %s105
    %s107 = sphi 0, %s105
    %s108 = sphi 0, %s107
    %s122 = sphi 0, %s108
    %s130 = sphi 0, %s132
    %s133 = sphi 0, %s130
    %s134 = sphi 0, %s133
    %s150 = sphi 0, %s134
  $region4: #{partitioner_forward.9} parent=0 // loop_header_branch
    %13 = sbr.rel (%p11) target = $region8
  $region5: #{partitioner_forward.9} parent=0 // loop_body
    %s15 = ssub.s32 %s10, 1
    %s16 = ssub.s32 %s10, 2
    %s23 = sadd.s32 1, %s18
    %p24 = scmp.ge.s32.totalorder %s23, 1
    %s25 = scalar_select %p24, 0, %s23
    %s26 = sadd.s32 1, %s17
    %s27 = scalar_select %p24, %s26, %s17
    %p28 = scmp.ge.s32.totalorder %s27, 2
    %s29 = scalar_select %p28, 0, %s27
    %s30 = ssub.s32 %s17, %s29
    %s31 = ssub.s32 %s18, %s25
    %s32 = sor.u32 %s30, %s31
    %p33 = scmp.eq.s32.totalorder %s32, 0
    %s35 = sadd.s32 %s34, 1
    %s36 = scalar_select %p33, %s34, %s35
    %p39 = pneg %p33
    %p40 = scmp.eq.s32.totalorder %s10, 1
    %p41 = por %p39, %p40
    %p42 = scmp.ne.s32.totalorder %s34, %s37
    %p43 = scmp.eq.s32.totalorder %s10, 0
    %p44 = por %p42, %p43
    %p45 = scmp.ne.s32.totalorder %s34, %s37
    %p46 = scmp.eq.s32.totalorder %s15, 1
    %p47 = por %p45, %p46
    %p48 = scmp.ne.s32.totalorder %s37, %s38
    %p49 = scmp.eq.s32.totalorder %s15, 0
    %p50 = por %p48, %p49
    %p51 = scmp.ne.s32.totalorder %s37, %s38
    %p52 = scmp.eq.s32.totalorder %s16, 1
    %p53 = por %p51, %p52
    %p55 = scmp.ne.s32.totalorder %s38, %s54
    %p56 = scmp.eq.s32.totalorder %s16, 0
    %p57 = por %p55, %p56
    %s58 = ssub.s32 %s18, %s25
    %p59 = scmp.eq.s32.totalorder %s58, 0
    %s61 = sadd.s32 %s60, 1
    %s62 = scalar_select %p59, %s60, %s61
    %p65 = pneg %p59
    %p66 = scmp.eq.s32.totalorder %s10, 1
    %p67 = por %p65, %p66
    %p68 = scmp.ne.s32.totalorder %s60, %s63
    %p69 = scmp.eq.s32.totalorder %s10, 0
    %p70 = por %p68, %p69
    %p71 = scmp.ne.s32.totalorder %s60, %s63
    %p72 = scmp.eq.s32.totalorder %s15, 1
    %p73 = por %p71, %p72
    %p74 = scmp.ne.s32.totalorder %s63, %s64
    %p75 = scmp.eq.s32.totalorder %s15, 0
    %p76 = por %p74, %p75
    %p77 = scmp.ne.s32.totalorder %s63, %s64
    %p78 = scmp.eq.s32.totalorder %s16, 1
    %p79 = por %p77, %p78
    %p81 = scmp.ne.s32.totalorder %s64, %s80
    %p82 = scmp.eq.s32.totalorder %s16, 0
    %p83 = por %p81, %p82
    %s85 = sadd.s32 %s84, 1
    %p88 = scmp.eq.s32.totalorder %s10, 1
    %p89 = scmp.ne.s32.totalorder %s84, %s86
    %p90 = scmp.eq.s32.totalorder %s10, 0
    %p91 = por %p89, %p90
    %p92 = scmp.ne.s32.totalorder %s84, %s86
    %p93 = scmp.eq.s32.totalorder %s15, 1
    %p94 = por %p92, %p93
    %p95 = scmp.ne.s32.totalorder %s86, %s87
    %p96 = scmp.eq.s32.totalorder %s15, 0
    %p97 = por %p95, %p96
    %p98 = scmp.ne.s32.totalorder %s86, %s87
    %p99 = scmp.eq.s32.totalorder %s16, 1
    %p100 = por %p98, %p99
    %p102 = scmp.ne.s32.totalorder %s87, %s101
    %p103 = scmp.eq.s32.totalorder %s16, 0
    %p104 = por %p102, %p103
    %s106 = sadd.s32 %s105, 1
    %p109 = scmp.eq.s32.totalorder %s10, 1
    %p110 = scmp.ne.s32.totalorder %s105, %s107
    %p111 = scmp.eq.s32.totalorder %s10, 0
    %p112 = por %p110, %p111
    %p113 = scmp.ne.s32.totalorder %s105, %s107
    %p114 = scmp.eq.s32.totalorder %s15, 1
    %p115 = por %p113, %p114
    %p116 = scmp.ne.s32.totalorder %s107, %s108
    %p117 = scmp.eq.s32.totalorder %s15, 0
    %p118 = por %p116, %p117
    %p119 = scmp.ne.s32.totalorder %s107, %s108
    %p120 = scmp.eq.s32.totalorder %s16, 1
    %p121 = por %p119, %p120
    %p123 = scmp.ne.s32.totalorder %s108, %s122
    %p124 = scmp.eq.s32.totalorder %s16, 0
    %p125 = por %p123, %p124
    %s126 = ssub.s32 %s17, %s29
    %s127 = ssub.s32 %s18, %s25
    %s128 = sor.u32 %s126, %s127
    %p129 = scmp.eq.s32.totalorder %s128, 0
    %s131 = sadd.s32 %s130, 1
    %s132 = scalar_select %p129, %s130, %s131
    %p135 = pneg %p129
    %p136 = scmp.eq.s32.totalorder %s10, 1
    %p137 = por %p135, %p136
    %p138 = scmp.ne.s32.totalorder %s130, %s133
    %p139 = scmp.eq.s32.totalorder %s10, 0
    %p140 = por %p138, %p139
    %p141 = scmp.ne.s32.totalorder %s130, %s133
    %p142 = scmp.eq.s32.totalorder %s15, 1
    %p143 = por %p141, %p142
    %p144 = scmp.ne.s32.totalorder %s133, %s134
    %p145 = scmp.eq.s32.totalorder %s15, 0
    %p146 = por %p144, %p145
    %p147 = scmp.ne.s32.totalorder %s133, %s134
    %p148 = scmp.eq.s32.totalorder %s16, 1
    %p149 = por %p147, %p148
    %p151 = scmp.ne.s32.totalorder %s134, %s150
    %p152 = scmp.eq.s32.totalorder %s16, 0
    %p153 = por %p151, %p152
    %p154 = scmp.le.s32.totalorder 1, %s10
    %p155 = scmp.lt.s32.totalorder %s10, 3
    %p156 = pnand %p154, %p155
    %p157 = pneg %p156
    // Predicated region
    $region9: #{partitioner_forward.9} parent=5 // pred_check
      _
    $region10: #{partitioner_forward.9} parent=5 // pred_check_branch
      %159 = sbr.rel (%p156) target = $region12
    $region11: #{partitioner_forward.9} parent=5 // pred_region
      %s160 = ssub.s32 %s10, 1
      // Predicated region
      $region13: #{partitioner_forward.9} parent=11 // pred_check
        %p161 = pneg %p76
      $region14: #{partitioner_forward.9} parent=11 // pred_check_branch
        %163 = sbr.rel (%p161) target = $region16
      $region15: #{partitioner_forward.9} parent=11 // pred_region
        %p164 = scmp.lt.s32.totalorder %s20, 0
        %s165 = scalar_select %p164, %s20, 0
        %s166 = smul.addr %s165, 4
        %s167 = scalar_lea.vmem %s1, %s166
      $region16: #{partitioner_forward.9} parent=11 // pred_fallthru
        _
      // Predicated region
      $region17: #{partitioner_forward.9} parent=11 // pred_check
        %p168 = pneg %p97
      $region18: #{partitioner_forward.9} parent=11 // pred_check_branch
        %170 = sbr.rel (%p168) target = $region20
      $region19: #{partitioner_forward.9} parent=11 // pred_region
        _
      $region20: #{partitioner_forward.9} parent=11 // pred_fallthru
        _
      // Predicated region
      $region21: #{partitioner_forward.9} parent=11 // pred_check
        %p171 = pneg %p118
      $region22: #{partitioner_forward.9} parent=11 // pred_check_branch
        %173 = sbr.rel (%p171) target = $region24
      $region23: #{partitioner_forward.9} parent=11 // pred_region
        _
      $region24: #{partitioner_forward.9} parent=11 // pred_fallthru
        _
    $region12: #{partitioner_forward.9} parent=5 // pred_fallthru
      _
    %p174 = scmp.lt.s32.totalorder %s10, 2
    // Predicated region
    $region25: #{partitioner_forward.9} parent=5 // pred_check
      %p175 = pneg %p174
    $region26: #{partitioner_forward.9} parent=5 // pred_check_branch
      %177 = sbr.rel (%p175) target = $region28
    $region27: #{partitioner_forward.9} parent=5 // pred_region
      // Predicated region
      $region29: #{partitioner_forward.9} parent=27 // pred_check
        %p178 = pneg %p44
      $region30: #{partitioner_forward.9} parent=27 // pred_check_branch
        %180 = sbr.rel (%p178) target = $region32
      $region31: #{partitioner_forward.9} parent=27 // pred_region
        %p181 = scmp.lt.s32.totalorder %s17, 1
        %s182 = scalar_select %p181, %s17, 1
        %p183 = scmp.lt.s32.totalorder %s18, 0
        %s184 = scalar_select %p183, %s18, 0
        %s185 = sadd.s32 %s184, %s182
        %s186 = smul.addr %s185, 4
        %s187 = scalar_lea.vmem %s0, %s186
      $region32: #{partitioner_forward.9} parent=27 // pred_fallthru
        _
    $region28: #{partitioner_forward.9} parent=5 // pred_fallthru
      _
    %p188 = scmp.le.s32.totalorder 1, %s10
    %p189 = scmp.lt.s32.totalorder %s10, 3
    %p190 = pnand %p188, %p189
    %p191 = pneg %p190
    // Predicated region
    $region33: #{partitioner_forward.9} parent=5 // pred_check
      _
    $region34: #{partitioner_forward.9} parent=5 // pred_check_branch
      %193 = sbr.rel (%p190) target = $region36
    $region35: #{partitioner_forward.9} parent=5 // pred_region
      %s194 = ssub.s32 %s10, 1
      %p195 = scmp.lt.s32.totalorder %s19, 1
      %s196 = scalar_select %p195, %s19, 1
      %p197 = scmp.lt.s32.totalorder %s20, 0
      %s198 = scalar_select %p197, %s20, 0
      %s199 = sadd.s32 %s198, %s196
      %s200 = smul.addr %s199, 4
      %s201 = scalar_lea.vmem %s0, %s200
      %p202 = pneg %p50
      %p203 = pneg %p47
      %p204 = scmp.lt.s32.totalorder %s20, 0
      %s205 = scalar_select %p204, %s20, 0
      %s206 = smul.addr %s205, 4
      %s207 = scalar_lea.vmem %s1, %s206
      %p208 = pneg %p76
      %p209 = pneg %p73
      %p210 = pneg %p97
      %p211 = pneg %p94
      %p212 = pneg %p118
      %p213 = pneg %p115
      %p214 = pneg %p146
      %p215 = pneg %p143
      %p216 = scmp.lt.s32.totalorder %s19, 1
      %s217 = scalar_select %p216, %s19, 1
      %p218 = scmp.lt.s32.totalorder %s20, 0
      %s219 = scalar_select %p218, %s20, 0
      %s220 = sadd.s32 %s219, %s217
      %s221 = smul.addr %s220, 4
      %s222 = scalar_lea.vmem %s4, %s221
      %p223 = scmp.lt.s32.totalorder %s19, 1
      %s224 = scalar_select %p223, %s19, 1
      %p225 = scmp.lt.s32.totalorder %s20, 0
      %s226 = scalar_select %p225, %s20, 0
      %s227 = sadd.s32 %s226, %s224
      %s228 = smul.addr %s227, 4
      %s229 = scalar_lea.vmem %s0, %s228
      %p230 = scmp.lt.s32.totalorder %s20, 0
      %s231 = scalar_select %p230, %s20, 0
      %s232 = smul.addr %s231, 4
      %s233 = scalar_lea.vmem %s1, %s232
      %p234 = scmp.lt.s32.totalorder %s19, 1
      %s235 = scalar_select %p234, %s19, 1
      %p236 = scmp.lt.s32.totalorder %s20, 0
      %s237 = scalar_select %p236, %s20, 0
      %s238 = sadd.s32 %s237, %s235
      %s239 = smul.addr %s238, 4
      %s240 = scalar_lea.vmem %s4, %s239
      %v242 = vld [vmem:[%s229] sm:$0xf]
      %v243 = vld [vmem:[%s233] sm:$0xf]
      %v244 = vadd.f32 %v242, %v243
      %v245 = vpack.c.bf16 %v244, %v244
      %v246 = vld [vmem:[%s2] sm:$0xf]
      %v247 = vld [vmem:[%s2 + $0x4] sm:$0xf]
      %v248 = vld [vmem:[%s2 + $0x8] sm:$0xf]
      %v249 = vld [vmem:[%s2 + $0xc] sm:$0xf]
      %v250 = vld [vmem:[%s3] sm:$0x1]
      %v252 = vlaneseq
      %v253 = vshrl.u32 %v252, 7
      %v254 = vsub.s32 0, %v253
      %v255 = vrot.slane %v250, %v254
      %v261 = vunpack.c.l.b16 %v246
      %v262 = vunpack.c.l.b16 %v247
      %v263 = vunpack.c.l.b16 %v248
      %v264 = vunpack.c.l.b16 %v249
      %v265 = vpack.c.b16 %v262, %v261
      %v266 = vpack.c.b16 %v264, %v263
      %vm269 = vcmask 261120
      %v271 = vsel %vm269, %v245, 0
      %273 = vmatprep.subr.bf16.mxu0 0
      %274 = vmatpush1.bf16.msra.mxu0 %v265
      %275 = vmatprep.subr.bf16.mxu0 0
      %276 = vmatpush1.bf16.msra.mxu0 %v266
      %277 = vmatprep.subr.bf16.mxu0 0
      %278 = vmatpush1.bf16.msra.mxu0 0
      %279 = vmatprep.subr.bf16.mxu0 0
      %280 = vmatpush1.bf16.msra.mxu0 0
      %281 = vmatprep.subr.bf16.mxu0 0
      %282 = vmatpush1.bf16.msra.mxu0 0
      %283 = vmatprep.subr.bf16.mxu0 0
      %284 = vmatpush1.bf16.msra.mxu0 0
      %285 = vmatprep.subr.bf16.mxu0 0
      %286 = vmatpush1.bf16.msra.mxu0 0
      %287 = vmatprep.subr.bf16.mxu0 0
      %288 = vmatpush1.bf16.msra.mxu0 0
      %289 = vmatprep.subr.bf16.mxu0 0
      %290 = vmatpush1.bf16.msra.mxu0 0
      %291 = vmatprep.subr.bf16.mxu0 0
      %292 = vmatpush1.bf16.msra.mxu0 0
      %293 = vmatprep.subr.bf16.mxu0 0
      %294 = vmatpush1.bf16.msra.mxu0 0
      %295 = vmatprep.subr.bf16.mxu0 0
      %296 = vmatpush1.bf16.msra.mxu0 0
      %297 = vmatprep.subr.bf16.mxu0 0
      %298 = vmatpush1.bf16.msra.mxu0 0
      %299 = vmatprep.subr.bf16.mxu0 0
      %300 = vmatpush1.bf16.msra.mxu0 0
      %301 = vmatprep.subr.bf16.mxu0 0
      %302 = vmatpush1.bf16.msra.mxu0 0
      %303 = vmatprep.subr.bf16.mxu0 0
      %304 = vmatpush1.bf16.msra.mxu0 0
      %305 = vmatprep.mubr.bf16.mxu0 0
      %306 = vmatmul.mubr.bf16.gmra.mrb[0].mxu0 %v271
      %v307 = vpop.f32.mrb[0].mxu0
      %v308 = vadd.f32 %v255, %v307
      %v309 = vpop.f32.mrb[0].mxu0
      %v310 = vpop.f32.mrb[0].mxu0
      %v311 = vpop.f32.mrb[0].mxu0
      %312 = vdwg.mxu0
      %vm313 = vcmask 519168
      %314 = vst.msk [vmem:[%s240] sm:$0xf] %vm313, %v308
      %p315 = scmp.lt.s32.totalorder %s19, 1
      %s316 = scalar_select %p315, %s19, 1
      %p317 = scmp.lt.s32.totalorder %s20, 0
      %s318 = scalar_select %p317, %s20, 0
      %s319 = sadd.s32 %s318, %s316
      %s320 = smul.addr %s319, 4
      %s321 = scalar_lea.vmem %s4, %s320
      // Predicated region
      $region37: #{partitioner_forward.9} parent=35 // pred_check
        %p322 = pneg %p143
      $region38: #{partitioner_forward.9} parent=35 // pred_check_branch
        %324 = sbr.rel (%p322) target = $region40
      $region39: #{partitioner_forward.9} parent=35 // pred_region
        _
      $region40: #{partitioner_forward.9} parent=35 // pred_fallthru
        _
    $region36: #{partitioner_forward.9} parent=5 // pred_fallthru
      _
    %p325 = scmp.le.s32.totalorder 2, %s10
    // Predicated region
    $region41: #{partitioner_forward.9} parent=5 // pred_check
      %p326 = pneg %p325
    $region42: #{partitioner_forward.9} parent=5 // pred_check_branch
      %328 = sbr.rel (%p326) target = $region44
    $region43: #{partitioner_forward.9} parent=5 // pred_region
      %s329 = ssub.s32 %s10, 2
      // Predicated region
      $region45: #{partitioner_forward.9} parent=43 // pred_check
        %p330 = pneg %p149
      $region46: #{partitioner_forward.9} parent=43 // pred_check_branch
        %332 = sbr.rel (%p330) target = $region48
      $region47: #{partitioner_forward.9} parent=43 // pred_region
        %p333 = scmp.lt.s32.totalorder %s21, 1
        %s334 = scalar_select %p333, %s21, 1
        %p335 = scmp.lt.s32.totalorder %s22, 0
        %s336 = scalar_select %p335, %s22, 0
        %s337 = sadd.s32 %s336, %s334
        %s338 = smul.addr %s337, 4
        %s339 = scalar_lea.vmem %s4, %s338
      $region48: #{partitioner_forward.9} parent=43 // pred_fallthru
        _
    $region44: #{partitioner_forward.9} parent=5 // pred_fallthru
      _
  $region6: #{partitioner_forward.9} parent=0 // loop_footer
    %s14 = sadd.s32 1, %s10
  $region7: #{partitioner_forward.9} parent=0 // loop_footer_branch
    %9 = sbr.rel target = $region3
  $region8: #{partitioner_forward.9} parent=0 // loop_exit
    _

</llo_original>
